<compile_context>
chip_gen: v6e
topology: v6e:2x2x1
jax: 0.10.0
libtpu: 0.0.40
codegen_flags: <defaults>
</compile_context>

<pallas_src>
import functools

import jax
import jax.numpy as jnp
from jax.experimental import pallas as pl
from jax.experimental.pallas import tpu as pltpu


def autoencoder_kernel(x_ref, u_ref,
                       g1w, g1b, g2w, g2b, g3w, g3b,
                       h3wc, h3wu, h3b, h2w, h2b, h1w, h1b,
                       out_ref):
    bf16 = jnp.bfloat16

    def sigmoid1(v):
        # single-EUP sigmoid: one tanh push instead of exp + reciprocal
        return 0.5 * jnp.tanh(0.5 * v) + 0.5

    x = x_ref[...]                                                  # (tb, nq) bf16

    # ---- encoder: Linear -> ReLU -> Linear -> Tanh -> Linear -> Sigmoid ----
    h = jnp.dot(x, g1w[...], preferred_element_type=jnp.float32) + g1b[...]
    h = jnp.maximum(h, 0.0).astype(bf16)            # fuse activation + bf16 cast
    h = jnp.dot(h, g2w[...], preferred_element_type=jnp.float32) + g2b[...]
    h = jnp.tanh(h).astype(bf16)
    h = jnp.dot(h, g3w[...], preferred_element_type=jnp.float32) + g3b[...]
    h = sigmoid1(h).astype(bf16)                                    # (tb, 32) code

    # ---- decoder: h3(concat(code, user_info)) -> Tanh -> h2 -> ReLU -> h1 -> Sigmoid
    # concat(code, u) @ W_h3 + b == code @ Wc + (u[:,0:1]*Wu[0] + u[:,1:2]*Wu[1] + b)
    # The K=2 piece runs on the VPU (two broadcast mul-adds), no MXU / wrapper launch.
    u = u_ref[...]                                                  # (tb, 2) f32
    wu = h3wu[...]                                                  # (2, 128) f32
    ub = u[:, 0:1] * wu[0:1, :] + u[:, 1:2] * wu[1:2, :] + h3b[...]
    y = jnp.dot(h, h3wc[...], preferred_element_type=jnp.float32) + ub
    y = jnp.tanh(y).astype(bf16)
    y = jnp.dot(y, h2w[...], preferred_element_type=jnp.float32) + h2b[...]
    y = jnp.maximum(y, 0.0).astype(bf16)
    y = jnp.dot(y, h1w[...], preferred_element_type=jnp.float32) + h1b[...]
    out_ref[...] = sigmoid1(y).astype(out_ref.dtype)


def make_params(key, num_question):
    """PyTorch-Linear-style init: uniform(-1/sqrt(fan_in), 1/sqrt(fan_in)).
    Weights stored as (out, in) like PyTorch; transposed in the wrapper."""
    dims = [
        ("g1", num_question, 512),
        ("g2", 512, 128),
        ("g3", 128, 32),
        ("h3", 32 + 2, 128),
        ("h2", 128, 512),
        ("h1", 512, num_question),
    ]
    params = {}
    for name, fan_in, fan_out in dims:
        key, kw, kb = jax.random.split(key, 3)
        bound = 1.0 / jnp.sqrt(jnp.float32(fan_in))
        params[name + "_w"] = jax.random.uniform(
            kw, (fan_out, fan_in), jnp.float32, -bound, bound)
        params[name + "_b"] = jax.random.uniform(
            kb, (fan_out,), jnp.float32, -bound, bound)
    return params


def pick_batch_tile(batch):
    """Per-generation batch tile: single-TC chips (v5e/v6e) want the biggest
    tile (fewer grid steps -> less per-step overhead); dual-TC chips (v7x,
    and megacore v4/v5p) want >= 2 parallel grid steps so both cores work."""
    kind = ""
    try:
        kind = jax.devices()[0].device_kind.lower()
    except Exception:
        pass
    dual_tc = ("7" in kind) or ("v4" in kind) or ("v5p" in kind)
    if dual_tc:
        half = -(-batch // 2)
        tb = min(256, max(8, -(-half // 8) * 8))
    else:
        tb = min(256, max(8, -(-batch // 8) * 8))
    return tb


@functools.partial(jax.jit, static_argnames=("tb", "out_dtype"))
def autoencoder_forward(inputs, user_info, params, *, tb=128,
                        out_dtype=jnp.bfloat16):
    B, nq = inputs.shape

    # Pre-transpose weights to (in, out); MXU operands in bf16, biases f32.
    def w(name):
        return params[name + "_w"].T.astype(jnp.bfloat16)

    def b(name):
        return params[name + "_b"].reshape(1, -1)                 # f32 bias rows

    g1w, g2w, h2w, h1w = w("g1"), w("g2"), w("h2"), w("h1")
    g3w = params["g3_w"].T.astype(jnp.bfloat16)                   # (128, 32)
    h3w_t = params["h3_w"].T                                      # (34, 128) f32
    h3wc = h3w_t[:32, :].astype(jnp.bfloat16)                     # code side (MXU)
    h3wu = h3w_t[32:, :]                                          # user_info side (VPU, f32)
    g1b, g2b, g3b, h3b, h2b, h1b = (b("g1"), b("g2"), b("g3"),
                                    b("h3"), b("h2"), b("h1"))

    x = inputs.astype(jnp.bfloat16)
    u = user_info.astype(jnp.float32)

    # Pad batch to a multiple of the tile; padded rows are sliced off afterward.
    Bp = ((B + tb - 1) // tb) * tb
    if Bp != B:
        x = jnp.pad(x, ((0, Bp - B), (0, 0)))
        u = jnp.pad(u, ((0, Bp - B), (0, 0)))

    def resident_spec(arr):
        # Constant index_map -> same full block every grid step (VMEM resident,
        # fetched once).  Single-buffered: a second pipeline buffer for a
        # never-changing block is pure VMEM waste.
        return pl.BlockSpec(arr.shape, lambda i: (0,) * arr.ndim,
                            pipeline_mode=pl.Buffered(1))

    grid = (Bp // tb,)
    in_specs = [
        pl.BlockSpec((tb, nq), lambda i: (i, 0)),     # inputs, batch-tiled (bf16)
        pl.BlockSpec((tb, 2), lambda i: (i, 0)),      # user_info, batch-tiled (f32)
        resident_spec(g1w), resident_spec(g1b),
        resident_spec(g2w), resident_spec(g2b),
        resident_spec(g3w), resident_spec(g3b),
        resident_spec(h3wc), resident_spec(h3wu), resident_spec(h3b),
        resident_spec(h2w), resident_spec(h2b),
        resident_spec(h1w), resident_spec(h1b),
    ]
    out_spec = pl.BlockSpec((tb, nq), lambda i: (i, 0))

    flops = 2 * Bp * (nq * 512 + 512 * 128 + 128 * 32
                      + 32 * 128 + 2 * 128 + 128 * 512 + 512 * nq)
    transcendentals = Bp * (128 + 32 + 128 + nq)       # one tanh per (sigmoid|tanh)
    out_bytes = jnp.dtype(out_dtype).itemsize
    bytes_accessed = (
        x.size * 2 + u.size * 4 + Bp * nq * out_bytes +
        2 * (g1w.size + g2w.size + g3w.size + h3wc.size + h2w.size + h1w.size) +
        4 * (h3wu.size + g1b.size + g2b.size + g3b.size
             + h3b.size + h2b.size + h1b.size))

    out = pl.pallas_call(
        autoencoder_kernel,
        out_shape=jax.ShapeDtypeStruct((Bp, nq), out_dtype),
        grid_spec=pltpu.PrefetchScalarGridSpec(
            num_scalar_prefetch=0,
            grid=grid,
            in_specs=in_specs,
            out_specs=out_spec,
        ),
        compiler_params=pltpu.CompilerParams(
            dimension_semantics=("parallel",),
            vmem_limit_bytes=48 * 1024 * 1024,
        ),
        cost_estimate=pl.CostEstimate(
            flops=flops,
            transcendentals=transcendentals,
            bytes_accessed=bytes_accessed),
    )(x, u,
      g1w, g1b, g2w, g2b, g3w, g3b,
      h3wc, h3wu, h3b, h2w, h2b, h1w, h1b)

    return out[:B]


def reference_forward(inputs, user_info, params):
    """Pure-JAX f32 reference matching the PyTorch module exactly."""
    x = jnp.maximum(inputs @ params["g1_w"].T + params["g1_b"], 0.0)
    x = jnp.tanh(x @ params["g2_w"].T + params["g2_b"])
    x = jax.nn.sigmoid(x @ params["g3_w"].T + params["g3_b"])
    z = jnp.concatenate([x, user_info], axis=1)
    y = jnp.tanh(z @ params["h3_w"].T + params["h3_b"])
    y = jnp.maximum(y @ params["h2_w"].T + params["h2_b"], 0.0)
    y = y @ params["h1_w"].T + params["h1_b"]
    return jax.nn.sigmoid(y)


if __name__ == "__main__":
    num_question = 256
    batch = 256

    key = jax.random.PRNGKey(0)
    key, k_in, k_ui, k_p = jax.random.split(key, 4)

    inputs = jax.random.uniform(k_in, (batch, num_question), jnp.float32)
    user_info = jax.random.uniform(k_ui, (batch, 2), jnp.float32)
    params = make_params(k_p, num_question)

    tb = pick_batch_tile(batch)
    out = autoencoder_forward(inputs, user_info, params, tb=tb)
    out = jax.block_until_ready(out)

    ref = reference_forward(inputs, user_info, params)
    assert out.shape == (batch, num_question)
    # bf16 matmul chain + bf16 output vs f32 reference: relaxed tolerance.
    err = jnp.max(jnp.abs(out.astype(jnp.float32) - ref))
    assert err < 2.5e-2, f"mismatch vs JAX reference (max abs err {err})"

    print("KERNEL_OK")
</pallas_src>

<mosaic_0001>
module attributes {stable_mosaic.version = 11 : i64} {
  func.func @autoencoder_kernel(%arg0: i32, %arg1: memref<256x256xbf16, #tpu.memory_space<vmem>>, %arg2: memref<256x2xf32, #tpu.memory_space<vmem>>, %arg3: memref<256x512xbf16, #tpu.memory_space<vmem>>, %arg4: memref<1x512xf32, #tpu.memory_space<vmem>>, %arg5: memref<512x128xbf16, #tpu.memory_space<vmem>>, %arg6: memref<1x128xf32, #tpu.memory_space<vmem>>, %arg7: memref<128x32xbf16, #tpu.memory_space<vmem>>, %arg8: memref<1x32xf32, #tpu.memory_space<vmem>>, %arg9: memref<32x128xbf16, #tpu.memory_space<vmem>>, %arg10: memref<2x128xf32, #tpu.memory_space<vmem>>, %arg11: memref<1x128xf32, #tpu.memory_space<vmem>>, %arg12: memref<128x512xbf16, #tpu.memory_space<vmem>>, %arg13: memref<1x512xf32, #tpu.memory_space<vmem>>, %arg14: memref<512x256xbf16, #tpu.memory_space<vmem>>, %arg15: memref<1x256xf32, #tpu.memory_space<vmem>>, %arg16: memref<256x256xbf16, #tpu.memory_space<vmem>>) attributes {dimension_semantics = [#tpu.dimension_semantics<parallel>], iteration_bounds = array<i64: 1>, scalar_prefetch = 0 : i64, scratch_operands = 0 : i64, tpu.core_type = #tpu.core_type<tc>, window_params = [{transform_indices = @transform_0, window_bounds = array<i64: 256, 256>}, {transform_indices = @transform_1, window_bounds = array<i64: 256, 2>}, {pipeline_mode = #tpu.pipeline_mode<synchronous>, transform_indices = @transform_2, window_bounds = array<i64: 256, 512>}, {pipeline_mode = #tpu.pipeline_mode<synchronous>, transform_indices = @transform_3, window_bounds = array<i64: 1, 512>}, {pipeline_mode = #tpu.pipeline_mode<synchronous>, transform_indices = @transform_4, window_bounds = array<i64: 512, 128>}, {pipeline_mode = #tpu.pipeline_mode<synchronous>, transform_indices = @transform_5, window_bounds = array<i64: 1, 128>}, {pipeline_mode = #tpu.pipeline_mode<synchronous>, transform_indices = @transform_6, window_bounds = array<i64: 128, 32>}, {pipeline_mode = #tpu.pipeline_mode<synchronous>, transform_indices = @transform_7, window_bounds = array<i64: 1, 32>}, {pipeline_mode = #tpu.pipeline_mode<synchronous>, transform_indices = @transform_8, window_bounds = array<i64: 32, 128>}, {pipeline_mode = #tpu.pipeline_mode<synchronous>, transform_indices = @transform_9, window_bounds = array<i64: 2, 128>}, {pipeline_mode = #tpu.pipeline_mode<synchronous>, transform_indices = @transform_10, window_bounds = array<i64: 1, 128>}, {pipeline_mode = #tpu.pipeline_mode<synchronous>, transform_indices = @transform_11, window_bounds = array<i64: 128, 512>}, {pipeline_mode = #tpu.pipeline_mode<synchronous>, transform_indices = @transform_12, window_bounds = array<i64: 1, 512>}, {pipeline_mode = #tpu.pipeline_mode<synchronous>, transform_indices = @transform_13, window_bounds = array<i64: 512, 256>}, {pipeline_mode = #tpu.pipeline_mode<synchronous>, transform_indices = @transform_14, window_bounds = array<i64: 1, 256>}, {transform_indices = @transform_15, window_bounds = array<i64: 256, 256>}]} {
    %c0 = arith.constant 0 : index
    %c0_0 = arith.constant 0 : index
    %0 = vector.load %arg1[%c0, %c0_0] : memref<256x256xbf16, #tpu.memory_space<vmem>>, vector<256x256xbf16>
    %c0_1 = arith.constant 0 : index
    %c0_2 = arith.constant 0 : index
    %1 = vector.load %arg3[%c0_1, %c0_2] : memref<256x512xbf16, #tpu.memory_space<vmem>>, vector<256x512xbf16>
    %cst = arith.constant dense<0.000000e+00> : vector<256x512xf32>
    %2 = tpu.matmul %0, %1, %cst {dimension_numbers = #tpu.dot_dimension_numbers<[1], [0], [0], [1], [0, 0, 1, 1], [], []>} : vector<256x256xbf16>, vector<256x512xbf16>, vector<256x512xf32> -> vector<256x512xf32>
    %c0_3 = arith.constant 0 : index
    %c0_4 = arith.constant 0 : index
    %3 = vector.load %arg4[%c0_3, %c0_4] : memref<1x512xf32, #tpu.memory_space<vmem>>, vector<1x512xf32>
    %4 = vector.broadcast %3 : vector<1x512xf32> to vector<256x512xf32>
    %5 = arith.addf %2, %4 : vector<256x512xf32>
    %cst_5 = arith.constant 0.000000e+00 : f32
    %6 = vector.broadcast %cst_5 : f32 to vector<256x512xf32>
    %7 = arith.maximumf %5, %6 : vector<256x512xf32>
    %8 = arith.truncf %7 : vector<256x512xf32> to vector<256x512xbf16>
    %c0_6 = arith.constant 0 : index
    %c0_7 = arith.constant 0 : index
    %9 = vector.load %arg5[%c0_6, %c0_7] : memref<512x128xbf16, #tpu.memory_space<vmem>>, vector<512x128xbf16>
    %cst_8 = arith.constant dense<0.000000e+00> : vector<256x128xf32>
    %10 = tpu.matmul %8, %9, %cst_8 {dimension_numbers = #tpu.dot_dimension_numbers<[1], [0], [0], [1], [0, 0, 1, 1], [], []>} : vector<256x512xbf16>, vector<512x128xbf16>, vector<256x128xf32> -> vector<256x128xf32>
    %c0_9 = arith.constant 0 : index
    %c0_10 = arith.constant 0 : index
    %11 = vector.load %arg6[%c0_9, %c0_10] : memref<1x128xf32, #tpu.memory_space<vmem>>, vector<1x128xf32>
    %12 = vector.broadcast %11 : vector<1x128xf32> to vector<256x128xf32>
    %13 = arith.addf %10, %12 : vector<256x128xf32>
    %14 = math.tanh %13 : vector<256x128xf32>
    %15 = arith.truncf %14 : vector<256x128xf32> to vector<256x128xbf16>
    %c0_11 = arith.constant 0 : index
    %c0_12 = arith.constant 0 : index
    %16 = vector.load %arg7[%c0_11, %c0_12] : memref<128x32xbf16, #tpu.memory_space<vmem>>, vector<128x32xbf16>
    %cst_13 = arith.constant dense<0.000000e+00> : vector<256x32xf32>
    %17 = tpu.matmul %15, %16, %cst_13 {dimension_numbers = #tpu.dot_dimension_numbers<[1], [0], [0], [1], [0, 0, 1, 1], [], []>} : vector<256x128xbf16>, vector<128x32xbf16>, vector<256x32xf32> -> vector<256x32xf32>
    %c0_14 = arith.constant 0 : index
    %c0_15 = arith.constant 0 : index
    %18 = vector.load %arg8[%c0_14, %c0_15] : memref<1x32xf32, #tpu.memory_space<vmem>>, vector<1x32xf32>
    %19 = vector.broadcast %18 : vector<1x32xf32> to vector<256x32xf32>
    %20 = arith.addf %17, %19 : vector<256x32xf32>
    %cst_16 = arith.constant 5.000000e-01 : f32
    %21 = vector.broadcast %cst_16 : f32 to vector<256x32xf32>
    %22 = arith.mulf %21, %20 : vector<256x32xf32>
    %23 = math.tanh %22 : vector<256x32xf32>
    %cst_17 = arith.constant 5.000000e-01 : f32
    %24 = vector.broadcast %cst_17 : f32 to vector<256x32xf32>
    %25 = arith.mulf %24, %23 : vector<256x32xf32>
    %cst_18 = arith.constant 5.000000e-01 : f32
    %26 = vector.broadcast %cst_18 : f32 to vector<256x32xf32>
    %27 = arith.addf %25, %26 : vector<256x32xf32>
    %28 = arith.truncf %27 : vector<256x32xf32> to vector<256x32xbf16>
    %c0_19 = arith.constant 0 : index
    %c0_20 = arith.constant 0 : index
    %29 = vector.load %arg2[%c0_19, %c0_20] : memref<256x2xf32, #tpu.memory_space<vmem>>, vector<256x2xf32>
    %c0_21 = arith.constant 0 : index
    %c0_22 = arith.constant 0 : index
    %30 = vector.load %arg10[%c0_21, %c0_22] : memref<2x128xf32, #tpu.memory_space<vmem>>, vector<2x128xf32>
    %31 = vector.extract_strided_slice %29 {offsets = [0, 0], sizes = [256, 1], strides = [1, 1]} : vector<256x2xf32> to vector<256x1xf32>
    %32 = vector.extract_strided_slice %30 {offsets = [0, 0], sizes = [1, 128], strides = [1, 1]} : vector<2x128xf32> to vector<1x128xf32>
    %33 = vector.broadcast %31 : vector<256x1xf32> to vector<256x128xf32>
    %34 = vector.broadcast %32 : vector<1x128xf32> to vector<256x128xf32>
    %35 = arith.mulf %33, %34 : vector<256x128xf32>
    %36 = vector.extract_strided_slice %29 {offsets = [0, 1], sizes = [256, 1], strides = [1, 1]} : vector<256x2xf32> to vector<256x1xf32>
    %37 = vector.extract_strided_slice %30 {offsets = [1, 0], sizes = [1, 128], strides = [1, 1]} : vector<2x128xf32> to vector<1x128xf32>
    %38 = vector.broadcast %36 : vector<256x1xf32> to vector<256x128xf32>
    %39 = vector.broadcast %37 : vector<1x128xf32> to vector<256x128xf32>
    %40 = arith.mulf %38, %39 : vector<256x128xf32>
    %41 = arith.addf %35, %40 : vector<256x128xf32>
    %c0_23 = arith.constant 0 : index
    %c0_24 = arith.constant 0 : index
    %42 = vector.load %arg11[%c0_23, %c0_24] : memref<1x128xf32, #tpu.memory_space<vmem>>, vector<1x128xf32>
    %43 = vector.broadcast %42 : vector<1x128xf32> to vector<256x128xf32>
    %44 = arith.addf %41, %43 : vector<256x128xf32>
    %c0_25 = arith.constant 0 : index
    %c0_26 = arith.constant 0 : index
    %45 = vector.load %arg9[%c0_25, %c0_26] : memref<32x128xbf16, #tpu.memory_space<vmem>>, vector<32x128xbf16>
    %cst_27 = arith.constant dense<0.000000e+00> : vector<256x128xf32>
    %46 = tpu.matmul %28, %45, %cst_27 {dimension_numbers = #tpu.dot_dimension_numbers<[1], [0], [0], [1], [0, 0, 1, 1], [], []>} : vector<256x32xbf16>, vector<32x128xbf16>, vector<256x128xf32> -> vector<256x128xf32>
    %47 = arith.addf %46, %44 : vector<256x128xf32>
    %48 = math.tanh %47 : vector<256x128xf32>
    %49 = arith.truncf %48 : vector<256x128xf32> to vector<256x128xbf16>
    %c0_28 = arith.constant 0 : index
    %c0_29 = arith.constant 0 : index
    %50 = vector.load %arg12[%c0_28, %c0_29] : memref<128x512xbf16, #tpu.memory_space<vmem>>, vector<128x512xbf16>
    %cst_30 = arith.constant dense<0.000000e+00> : vector<256x512xf32>
    %51 = tpu.matmul %49, %50, %cst_30 {dimension_numbers = #tpu.dot_dimension_numbers<[1], [0], [0], [1], [0, 0, 1, 1], [], []>} : vector<256x128xbf16>, vector<128x512xbf16>, vector<256x512xf32> -> vector<256x512xf32>
    %c0_31 = arith.constant 0 : index
    %c0_32 = arith.constant 0 : index
    %52 = vector.load %arg13[%c0_31, %c0_32] : memref<1x512xf32, #tpu.memory_space<vmem>>, vector<1x512xf32>
    %53 = vector.broadcast %52 : vector<1x512xf32> to vector<256x512xf32>
    %54 = arith.addf %51, %53 : vector<256x512xf32>
    %cst_33 = arith.constant 0.000000e+00 : f32
    %55 = vector.broadcast %cst_33 : f32 to vector<256x512xf32>
    %56 = arith.maximumf %54, %55 : vector<256x512xf32>
    %57 = arith.truncf %56 : vector<256x512xf32> to vector<256x512xbf16>
    %c0_34 = arith.constant 0 : index
    %c0_35 = arith.constant 0 : index
    %58 = vector.load %arg14[%c0_34, %c0_35] : memref<512x256xbf16, #tpu.memory_space<vmem>>, vector<512x256xbf16>
    %cst_36 = arith.constant dense<0.000000e+00> : vector<256x256xf32>
    %59 = tpu.matmul %57, %58, %cst_36 {dimension_numbers = #tpu.dot_dimension_numbers<[1], [0], [0], [1], [0, 0, 1, 1], [], []>} : vector<256x512xbf16>, vector<512x256xbf16>, vector<256x256xf32> -> vector<256x256xf32>
    %c0_37 = arith.constant 0 : index
    %c0_38 = arith.constant 0 : index
    %60 = vector.load %arg15[%c0_37, %c0_38] : memref<1x256xf32, #tpu.memory_space<vmem>>, vector<1x256xf32>
    %61 = vector.broadcast %60 : vector<1x256xf32> to vector<256x256xf32>
    %62 = arith.addf %59, %61 : vector<256x256xf32>
    %cst_39 = arith.constant 5.000000e-01 : f32
    %63 = vector.broadcast %cst_39 : f32 to vector<256x256xf32>
    %64 = arith.mulf %63, %62 : vector<256x256xf32>
    %65 = math.tanh %64 : vector<256x256xf32>
    %cst_40 = arith.constant 5.000000e-01 : f32
    %66 = vector.broadcast %cst_40 : f32 to vector<256x256xf32>
    %67 = arith.mulf %66, %65 : vector<256x256xf32>
    %cst_41 = arith.constant 5.000000e-01 : f32
    %68 = vector.broadcast %cst_41 : f32 to vector<256x256xf32>
    %69 = arith.addf %67, %68 : vector<256x256xf32>
    %70 = arith.truncf %69 : vector<256x256xf32> to vector<256x256xbf16>
    %c0_42 = arith.constant 0 : index
    %c0_43 = arith.constant 0 : index
    %71 = vector.load %arg16[%c0_42, %c0_43] : memref<256x256xbf16, #tpu.memory_space<vmem>>, vector<256x256xbf16>
    tpu.vector_store %arg16[%c0_42, %c0_43], %70 {strides = array<i32>} : memref<256x256xbf16, #tpu.memory_space<vmem>>, vector<256x256xbf16>,
    return
  }
  func.func @transform_0(%arg0: i32) -> (i32, i32) {
    %c0_i32 = arith.constant 0 : i32
    %c0_i32_0 = arith.constant 0 : i32
    return %arg0, %c0_i32 : i32, i32
  }
  func.func @transform_1(%arg0: i32) -> (i32, i32) {
    %c0_i32 = arith.constant 0 : i32
    %c0_i32_0 = arith.constant 0 : i32
    return %arg0, %c0_i32 : i32, i32
  }
  func.func @transform_2(%arg0: i32) -> (i32, i32) {
    %c0_i32 = arith.constant 0 : i32
    %c0_i32_0 = arith.constant 0 : i32
    %c0_i32_1 = arith.constant 0 : i32
    return %c0_i32, %c0_i32_0 : i32, i32
  }
  func.func @transform_3(%arg0: i32) -> (i32, i32) {
    %c0_i32 = arith.constant 0 : i32
    %c0_i32_0 = arith.constant 0 : i32
    %c0_i32_1 = arith.constant 0 : i32
    return %c0_i32, %c0_i32_0 : i32, i32
  }
  func.func @transform_4(%arg0: i32) -> (i32, i32) {
    %c0_i32 = arith.constant 0 : i32
    %c0_i32_0 = arith.constant 0 : i32
    %c0_i32_1 = arith.constant 0 : i32
    return %c0_i32, %c0_i32_0 : i32, i32
  }
  func.func @transform_5(%arg0: i32) -> (i32, i32) {
    %c0_i32 = arith.constant 0 : i32
    %c0_i32_0 = arith.constant 0 : i32
    %c0_i32_1 = arith.constant 0 : i32
    return %c0_i32, %c0_i32_0 : i32, i32
  }
  func.func @transform_6(%arg0: i32) -> (i32, i32) {
    %c0_i32 = arith.constant 0 : i32
    %c0_i32_0 = arith.constant 0 : i32
    %c0_i32_1 = arith.constant 0 : i32
    return %c0_i32, %c0_i32_0 : i32, i32
  }
  func.func @transform_7(%arg0: i32) -> (i32, i32) {
    %c0_i32 = arith.constant 0 : i32
    %c0_i32_0 = arith.constant 0 : i32
    %c0_i32_1 = arith.constant 0 : i32
    return %c0_i32, %c0_i32_0 : i32, i32
  }
  func.func @transform_8(%arg0: i32) -> (i32, i32) {
    %c0_i32 = arith.constant 0 : i32
    %c0_i32_0 = arith.constant 0 : i32
    %c0_i32_1 = arith.constant 0 : i32
    return %c0_i32, %c0_i32_0 : i32, i32
  }
  func.func @transform_9(%arg0: i32) -> (i32, i32) {
    %c0_i32 = arith.constant 0 : i32
    %c0_i32_0 = arith.constant 0 : i32
    %c0_i32_1 = arith.constant 0 : i32
    return %c0_i32, %c0_i32_0 : i32, i32
  }
  func.func @transform_10(%arg0: i32) -> (i32, i32) {
    %c0_i32 = arith.constant 0 : i32
    %c0_i32_0 = arith.constant 0 : i32
    %c0_i32_1 = arith.constant 0 : i32
    return %c0_i32, %c0_i32_0 : i32, i32
  }
  func.func @transform_11(%arg0: i32) -> (i32, i32) {
    %c0_i32 = arith.constant 0 : i32
    %c0_i32_0 = arith.constant 0 : i32
    %c0_i32_1 = arith.constant 0 : i32
    return %c0_i32, %c0_i32_0 : i32, i32
  }
  func.func @transform_12(%arg0: i32) -> (i32, i32) {
    %c0_i32 = arith.constant 0 : i32
    %c0_i32_0 = arith.constant 0 : i32
    %c0_i32_1 = arith.constant 0 : i32
    return %c0_i32, %c0_i32_0 : i32, i32
  }
  func.func @transform_13(%arg0: i32) -> (i32, i32) {
    %c0_i32 = arith.constant 0 : i32
    %c0_i32_0 = arith.constant 0 : i32
    %c0_i32_1 = arith.constant 0 : i32
    return %c0_i32, %c0_i32_0 : i32, i32
  }
  func.func @transform_14(%arg0: i32) -> (i32, i32) {
    %c0_i32 = arith.constant 0 : i32
    %c0_i32_0 = arith.constant 0 : i32
    %c0_i32_1 = arith.constant 0 : i32
    return %c0_i32, %c0_i32_0 : i32, i32
  }
  func.func @transform_15(%arg0: i32) -> (i32, i32) {
    %c0_i32 = arith.constant 0 : i32
    %c0_i32_0 = arith.constant 0 : i32
    return %arg0, %c0_i32 : i32, i32
  }
}

</mosaic_0001>

<llo_original>
// kernel: autoencoder_forward.1
$region0: #{autoencoder_forward.1}
  #allocation0 [shape = 'u32[]', space=smem, size = 0x4, offset = 0x4, fixed_abs, tag = 'smem constant byte address 0x4 - core index']
  #allocation1 [shape = 'u32[144,128]{1,0:T(1,128)}', space=vmem, size = 0x12000, scoped, tag = 'internal scratch']
  %s0 = inlined_call_operand.vmem [shape: bf16[256,256], index: 0, kind: input, shape index: {}]
  %s1 = inlined_call_operand.vmem [shape: f32[256,2], index: 1, kind: input, shape index: {}]
  %s2 = inlined_call_operand.vmem [shape: bf16[256,512], index: 2, kind: input, shape index: {}]
  %s3 = inlined_call_operand.vmem [shape: f32[1,512], index: 3, kind: input, shape index: {}]
  %s4 = inlined_call_operand.vmem [shape: bf16[512,128], index: 4, kind: input, shape index: {}]
  %s5 = inlined_call_operand.vmem [shape: f32[1,128], index: 5, kind: input, shape index: {}]
  %s6 = inlined_call_operand.vmem [shape: bf16[128,32], index: 6, kind: input, shape index: {}]
  %s7 = inlined_call_operand.vmem [shape: f32[1,32], index: 7, kind: input, shape index: {}]
  %s8 = inlined_call_operand.vmem [shape: bf16[32,128], index: 8, kind: input, shape index: {}]
  %s9 = inlined_call_operand.vmem [shape: f32[2,128], index: 9, kind: input, shape index: {}]
  %s10 = inlined_call_operand.vmem [shape: f32[1,128], index: 10, kind: input, shape index: {}]
  %s11 = inlined_call_operand.vmem [shape: bf16[128,512], index: 11, kind: input, shape index: {}]
  %s12 = inlined_call_operand.vmem [shape: f32[1,512], index: 12, kind: input, shape index: {}]
  %s13 = inlined_call_operand.vmem [shape: bf16[512,256], index: 13, kind: input, shape index: {}]
  %s14 = inlined_call_operand.vmem [shape: f32[1,256], index: 14, kind: input, shape index: {}]
  %s15 = inlined_call_operand.hbm [shape: bf16[256,256], index: 15, kind: output, shape index: {}]
  %s16 = sld [smem:[#allocation0]]
  $region70: #{autoencoder_forward.1} parent=0
    _
  %s18 = ssub.s32 1, %s16
  %s19 = scalar_select 0, %s18, %s16
  $region1: #{autoencoder_forward.1} parent=0
    #allocation2 [shape = 'u8[131072]{0}', space=vmem, size = 0x20000, scoped, tag = 'output window, operand 0, single buffered']
    #allocation3 [shape = 's32[1]{0}', space=sflag, size = 0x4, scoped, tag = 'scoped memory for autoencoder_forward.1']
    %20 = vsyncpa [#allocation3], 0
    // Predicated region
    $region2: #{autoencoder_forward.1} parent=1 // pred_check
      _
    $region3: #{autoencoder_forward.1} parent=1 // pred_check_branch
      %22 = sbr.rel (0) target = $region5
    $region4: #{autoencoder_forward.1} parent=1 // pred_region
      _
    $region5: #{autoencoder_forward.1} parent=1 // pred_fallthru
      _
    // Predicated region
    $region6: #{autoencoder_forward.1} parent=1 // pred_check
      _
    $region7: #{autoencoder_forward.1} parent=1 // pred_check_branch
      %24 = sbr.rel (0) target = $region9
    $region8: #{autoencoder_forward.1} parent=1 // pred_region
      _
    $region9: #{autoencoder_forward.1} parent=1 // pred_fallthru
      _
    // Predicated region
    $region10: #{autoencoder_forward.1} parent=1 // pred_check
      _
    $region11: #{autoencoder_forward.1} parent=1 // pred_check_branch
      %26 = sbr.rel (0) target = $region13
    $region12: #{autoencoder_forward.1} parent=1 // pred_region
      _
    $region13: #{autoencoder_forward.1} parent=1 // pred_fallthru
      _
    // Predicated region
    $region14: #{autoencoder_forward.1} parent=1 // pred_check
      _
    $region15: #{autoencoder_forward.1} parent=1 // pred_check_branch
      %28 = sbr.rel (0) target = $region17
    $region16: #{autoencoder_forward.1} parent=1 // pred_region
      _
    $region17: #{autoencoder_forward.1} parent=1 // pred_fallthru
      _
    // Predicated region
    $region18: #{autoencoder_forward.1} parent=1 // pred_check
      _
    $region19: #{autoencoder_forward.1} parent=1 // pred_check_branch
      %30 = sbr.rel (0) target = $region21
    $region20: #{autoencoder_forward.1} parent=1 // pred_region
      _
    $region21: #{autoencoder_forward.1} parent=1 // pred_fallthru
      _
    // Predicated region
    $region22: #{autoencoder_forward.1} parent=1 // pred_check
      _
    $region23: #{autoencoder_forward.1} parent=1 // pred_check_branch
      %32 = sbr.rel (0) target = $region25
    $region24: #{autoencoder_forward.1} parent=1 // pred_region
      _
    $region25: #{autoencoder_forward.1} parent=1 // pred_fallthru
      _
    // Predicated region
    $region26: #{autoencoder_forward.1} parent=1 // pred_check
      _
    $region27: #{autoencoder_forward.1} parent=1 // pred_check_branch
      %34 = sbr.rel (0) target = $region29
    $region28: #{autoencoder_forward.1} parent=1 // pred_region
      _
    $region29: #{autoencoder_forward.1} parent=1 // pred_fallthru
      _
    // Predicated region
    $region30: #{autoencoder_forward.1} parent=1 // pred_check
      _
    $region31: #{autoencoder_forward.1} parent=1 // pred_check_branch
      %36 = sbr.rel (0) target = $region33
    $region32: #{autoencoder_forward.1} parent=1 // pred_region
      _
    $region33: #{autoencoder_forward.1} parent=1 // pred_fallthru
      _
    // Predicated region
    $region34: #{autoencoder_forward.1} parent=1 // pred_check
      _
    $region35: #{autoencoder_forward.1} parent=1 // pred_check_branch
      %38 = sbr.rel (0) target = $region37
    $region36: #{autoencoder_forward.1} parent=1 // pred_region
      _
    $region37: #{autoencoder_forward.1} parent=1 // pred_fallthru
      _
    // Predicated region
    $region38: #{autoencoder_forward.1} parent=1 // pred_check
      _
    $region39: #{autoencoder_forward.1} parent=1 // pred_check_branch
      %40 = sbr.rel (0) target = $region41
    $region40: #{autoencoder_forward.1} parent=1 // pred_region
      _
    $region41: #{autoencoder_forward.1} parent=1 // pred_fallthru
      _
    // Predicated region
    $region42: #{autoencoder_forward.1} parent=1 // pred_check
      _
    $region43: #{autoencoder_forward.1} parent=1 // pred_check_branch
      %42 = sbr.rel (0) target = $region45
    $region44: #{autoencoder_forward.1} parent=1 // pred_region
      _
    $region45: #{autoencoder_forward.1} parent=1 // pred_fallthru
      _
    // Predicated region
    $region46: #{autoencoder_forward.1} parent=1 // pred_check
      _
    $region47: #{autoencoder_forward.1} parent=1 // pred_check_branch
      %44 = sbr.rel (0) target = $region49
    $region48: #{autoencoder_forward.1} parent=1 // pred_region
      _
    $region49: #{autoencoder_forward.1} parent=1 // pred_fallthru
      _
    // Predicated region
    $region50: #{autoencoder_forward.1} parent=1 // pred_check
      _
    $region51: #{autoencoder_forward.1} parent=1 // pred_check_branch
      %46 = sbr.rel (0) target = $region53
    $region52: #{autoencoder_forward.1} parent=1 // pred_region
      _
    $region53: #{autoencoder_forward.1} parent=1 // pred_fallthru
      _
    // Predicated region
    $region54: #{autoencoder_forward.1} parent=1 // pred_check
      _
    $region55: #{autoencoder_forward.1} parent=1 // pred_check_branch
      %48 = sbr.rel (0) target = $region57
    $region56: #{autoencoder_forward.1} parent=1 // pred_region
      _
    $region57: #{autoencoder_forward.1} parent=1 // pred_fallthru
      _
    // Predicated region
    $region58: #{autoencoder_forward.1} parent=1 // pred_check
      _
    $region59: #{autoencoder_forward.1} parent=1 // pred_check_branch
      %50 = sbr.rel (0) target = $region61
    $region60: #{autoencoder_forward.1} parent=1 // pred_region
      _
    $region61: #{autoencoder_forward.1} parent=1 // pred_fallthru
      _
    %v52 = vld [vmem:[%s0] sm:$0xff]
    %v53 = vld [vmem:[%s0 + $0x8] sm:$0xff]
    %v54 = vld [vmem:[%s0 + $0x10] sm:$0xff]
    %v55 = vld [vmem:[%s0 + $0x18] sm:$0xff]
    %v56 = vld [vmem:[%s0 + $0x20] sm:$0xff]
    %v57 = vld [vmem:[%s0 + $0x28] sm:$0xff]
    %v58 = vld [vmem:[%s0 + $0x30] sm:$0xff]
    %v59 = vld [vmem:[%s0 + $0x38] sm:$0xff]
    %v60 = vld [vmem:[%s0 + $0x40] sm:$0xff]
    %v61 = vld [vmem:[%s0 + $0x48] sm:$0xff]
    %v62 = vld [vmem:[%s0 + $0x50] sm:$0xff]
    %v63 = vld [vmem:[%s0 + $0x58] sm:$0xff]
    %v64 = vld [vmem:[%s0 + $0x60] sm:$0xff]
    %v65 = vld [vmem:[%s0 + $0x68] sm:$0xff]
    %v66 = vld [vmem:[%s0 + $0x70] sm:$0xff]
    %v67 = vld [vmem:[%s0 + $0x78] sm:$0xff]
    %v68 = vld [vmem:[%s0 + $0x80] sm:$0xff]
    %v69 = vld [vmem:[%s0 + $0x88] sm:$0xff]
    %v70 = vld [vmem:[%s0 + $0x90] sm:$0xff]
    %v71 = vld [vmem:[%s0 + $0x98] sm:$0xff]
    %v72 = vld [vmem:[%s0 + $0xa0] sm:$0xff]
    %v73 = vld [vmem:[%s0 + $0xa8] sm:$0xff]
    %v74 = vld [vmem:[%s0 + $0xb0] sm:$0xff]
    %v75 = vld [vmem:[%s0 + $0xb8] sm:$0xff]
    %v76 = vld [vmem:[%s0 + $0xc0] sm:$0xff]
    %v77 = vld [vmem:[%s0 + $0xc8] sm:$0xff]
    %v78 = vld [vmem:[%s0 + $0xd0] sm:$0xff]
    %v79 = vld [vmem:[%s0 + $0xd8] sm:$0xff]
    %v80 = vld [vmem:[%s0 + $0xe0] sm:$0xff]
    %v81 = vld [vmem:[%s0 + $0xe8] sm:$0xff]
    %v82 = vld [vmem:[%s0 + $0xf0] sm:$0xff]
    %v83 = vld [vmem:[%s0 + $0xf8] sm:$0xff]
    %v84 = vld [vmem:[%s2] sm:$0xff]
    %v85 = vld [vmem:[%s2 + $0x8] sm:$0xff]
    %v86 = vld [vmem:[%s2 + $0x10] sm:$0xff]
    %v87 = vld [vmem:[%s2 + $0x18] sm:$0xff]
    %v88 = vld [vmem:[%s2 + $0x20] sm:$0xff]
    %v89 = vld [vmem:[%s2 + $0x28] sm:$0xff]
    %v90 = vld [vmem:[%s2 + $0x30] sm:$0xff]
    %v91 = vld [vmem:[%s2 + $0x38] sm:$0xff]
    %v92 = vld [vmem:[%s2 + $0x40] sm:$0xff]
    %v93 = vld [vmem:[%s2 + $0x48] sm:$0xff]
    %v94 = vld [vmem:[%s2 + $0x50] sm:$0xff]
    %v95 = vld [vmem:[%s2 + $0x58] sm:$0xff]
    %v96 = vld [vmem:[%s2 + $0x60] sm:$0xff]
    %v97 = vld [vmem:[%s2 + $0x68] sm:$0xff]
    %v98 = vld [vmem:[%s2 + $0x70] sm:$0xff]
    %v99 = vld [vmem:[%s2 + $0x78] sm:$0xff]
    %v100 = vld [vmem:[%s2 + $0x80] sm:$0xff]
    %v101 = vld [vmem:[%s2 + $0x88] sm:$0xff]
    %v102 = vld [vmem:[%s2 + $0x90] sm:$0xff]
    %v103 = vld [vmem:[%s2 + $0x98] sm:$0xff]
    %v104 = vld [vmem:[%s2 + $0xa0] sm:$0xff]
    %v105 = vld [vmem:[%s2 + $0xa8] sm:$0xff]
    %v106 = vld [vmem:[%s2 + $0xb0] sm:$0xff]
    %v107 = vld [vmem:[%s2 + $0xb8] sm:$0xff]
    %v108 = vld [vmem:[%s2 + $0xc0] sm:$0xff]
    %v109 = vld [vmem:[%s2 + $0xc8] sm:$0xff]
    %v110 = vld [vmem:[%s2 + $0xd0] sm:$0xff]
    %v111 = vld [vmem:[%s2 + $0xd8] sm:$0xff]
    %v112 = vld [vmem:[%s2 + $0xe0] sm:$0xff]
    %v113 = vld [vmem:[%s2 + $0xe8] sm:$0xff]
    %v114 = vld [vmem:[%s2 + $0xf0] sm:$0xff]
    %v115 = vld [vmem:[%s2 + $0xf8] sm:$0xff]
    %v116 = vld [vmem:[%s2 + $0x100] sm:$0xff]
    %v117 = vld [vmem:[%s2 + $0x108] sm:$0xff]
    %v118 = vld [vmem:[%s2 + $0x110] sm:$0xff]
    %v119 = vld [vmem:[%s2 + $0x118] sm:$0xff]
    %v120 = vld [vmem:[%s2 + $0x120] sm:$0xff]
    %v121 = vld [vmem:[%s2 + $0x128] sm:$0xff]
    %v122 = vld [vmem:[%s2 + $0x130] sm:$0xff]
    %v123 = vld [vmem:[%s2 + $0x138] sm:$0xff]
    %v124 = vld [vmem:[%s2 + $0x140] sm:$0xff]
    %v125 = vld [vmem:[%s2 + $0x148] sm:$0xff]
    %v126 = vld [vmem:[%s2 + $0x150] sm:$0xff]
    %v127 = vld [vmem:[%s2 + $0x158] sm:$0xff]
    %v128 = vld [vmem:[%s2 + $0x160] sm:$0xff]
    %v129 = vld [vmem:[%s2 + $0x168] sm:$0xff]
    %v130 = vld [vmem:[%s2 + $0x170] sm:$0xff]
    %v131 = vld [vmem:[%s2 + $0x178] sm:$0xff]
    %v132 = vld [vmem:[%s2 + $0x180] sm:$0xff]
    %v133 = vld [vmem:[%s2 + $0x188] sm:$0xff]
    %v134 = vld [vmem:[%s2 + $0x190] sm:$0xff]
    %v135 = vld [vmem:[%s2 + $0x198] sm:$0xff]
    %v136 = vld [vmem:[%s2 + $0x1a0] sm:$0xff]
    %v137 = vld [vmem:[%s2 + $0x1a8] sm:$0xff]
    %v138 = vld [vmem:[%s2 + $0x1b0] sm:$0xff]
    %v139 = vld [vmem:[%s2 + $0x1b8] sm:$0xff]
    %v140 = vld [vmem:[%s2 + $0x1c0] sm:$0xff]
    %v141 = vld [vmem:[%s2 + $0x1c8] sm:$0xff]
    %v142 = vld [vmem:[%s2 + $0x1d0] sm:$0xff]
    %v143 = vld [vmem:[%s2 + $0x1d8] sm:$0xff]
    %v144 = vld [vmem:[%s2 + $0x1e0] sm:$0xff]
    %v145 = vld [vmem:[%s2 + $0x1e8] sm:$0xff]
    %v146 = vld [vmem:[%s2 + $0x1f0] sm:$0xff]
    %v147 = vld [vmem:[%s2 + $0x1f8] sm:$0xff]
    %v148 = vld [vmem:[%s3] sm:$0xf]
    %v150 = vlaneseq
    %v151 = vshrl.u32 %v150, 7
    %v152 = vsub.s32 0, %v151
    %v153 = vrot.slane %v148, %v152
    %v154 = vlaneseq
    %v155 = vshrl.u32 %v154, 7
    %v156 = vsub.s32 1, %v155
    %v157 = vrot.slane %v148, %v156
    %v158 = vlaneseq
    %v159 = vshrl.u32 %v158, 7
    %v160 = vsub.s32 2, %v159
    %v161 = vrot.slane %v148, %v160
    %v162 = vlaneseq
    %v163 = vshrl.u32 %v162, 7
    %v164 = vsub.s32 3, %v163
    %v165 = vrot.slane %v148, %v164
    %v202 = vunpack.c.l.b16 %v52
    %v203 = vunpack.c.h.b16 %v52
    %v204 = vunpack.c.l.b16 %v53
    %v205 = vunpack.c.h.b16 %v53
    %v206 = vunpack.c.l.b16 %v54
    %v207 = vunpack.c.h.b16 %v54
    %v208 = vunpack.c.l.b16 %v55
    %v209 = vunpack.c.h.b16 %v55
    %v210 = vunpack.c.l.b16 %v56
    %v211 = vunpack.c.h.b16 %v56
    %v212 = vunpack.c.l.b16 %v57
    %v213 = vunpack.c.h.b16 %v57
    %v214 = vunpack.c.l.b16 %v58
    %v215 = vunpack.c.h.b16 %v58
    %v216 = vunpack.c.l.b16 %v59
    %v217 = vunpack.c.h.b16 %v59
    %v218 = vunpack.c.l.b16 %v60
    %v219 = vunpack.c.h.b16 %v60
    %v220 = vunpack.c.l.b16 %v61
    %v221 = vunpack.c.h.b16 %v61
    %v222 = vunpack.c.l.b16 %v62
    %v223 = vunpack.c.h.b16 %v62
    %v224 = vunpack.c.l.b16 %v63
    %v225 = vunpack.c.h.b16 %v63
    %v226 = vunpack.c.l.b16 %v64
    %v227 = vunpack.c.h.b16 %v64
    %v228 = vunpack.c.l.b16 %v65
    %v229 = vunpack.c.h.b16 %v65
    %v230 = vunpack.c.l.b16 %v66
    %v231 = vunpack.c.h.b16 %v66
    %v232 = vunpack.c.l.b16 %v67
    %v233 = vunpack.c.h.b16 %v67
    %v234 = vunpack.c.l.b16 %v68
    %v235 = vunpack.c.h.b16 %v68
    %v236 = vunpack.c.l.b16 %v69
    %v237 = vunpack.c.h.b16 %v69
    %v238 = vunpack.c.l.b16 %v70
    %v239 = vunpack.c.h.b16 %v70
    %v240 = vunpack.c.l.b16 %v71
    %v241 = vunpack.c.h.b16 %v71
    %v242 = vunpack.c.l.b16 %v72
    %v243 = vunpack.c.h.b16 %v72
    %v244 = vunpack.c.l.b16 %v73
    %v245 = vunpack.c.h.b16 %v73
    %v246 = vunpack.c.l.b16 %v74
    %v247 = vunpack.c.h.b16 %v74
    %v248 = vunpack.c.l.b16 %v75
    %v249 = vunpack.c.h.b16 %v75
    %v250 = vunpack.c.l.b16 %v76
    %v251 = vunpack.c.h.b16 %v76
    %v252 = vunpack.c.l.b16 %v77
    %v253 = vunpack.c.h.b16 %v77
    %v254 = vunpack.c.l.b16 %v78
    %v255 = vunpack.c.h.b16 %v78
    %v256 = vunpack.c.l.b16 %v79
    %v257 = vunpack.c.h.b16 %v79
    %v258 = vunpack.c.l.b16 %v80
    %v259 = vunpack.c.h.b16 %v80
    %v260 = vunpack.c.l.b16 %v81
    %v261 = vunpack.c.h.b16 %v81
    %v262 = vunpack.c.l.b16 %v82
    %v263 = vunpack.c.h.b16 %v82
    %v264 = vunpack.c.l.b16 %v83
    %v265 = vunpack.c.h.b16 %v83
    %v266 = vpack.c.b16 %v204, %v202
    %v267 = vpack.c.b16 %v205, %v203
    %v268 = vpack.c.b16 %v208, %v206
    %v269 = vpack.c.b16 %v209, %v207
    %v270 = vpack.c.b16 %v212, %v210
    %v271 = vpack.c.b16 %v213, %v211
    %v272 = vpack.c.b16 %v216, %v214
    %v273 = vpack.c.b16 %v217, %v215
    %v274 = vpack.c.b16 %v220, %v218
    %v275 = vpack.c.b16 %v221, %v219
    %v276 = vpack.c.b16 %v224, %v222
    %v277 = vpack.c.b16 %v225, %v223
    %v278 = vpack.c.b16 %v228, %v226
    %v279 = vpack.c.b16 %v229, %v227
    %v280 = vpack.c.b16 %v232, %v230
    %v281 = vpack.c.b16 %v233, %v231
    %v282 = vpack.c.b16 %v236, %v234
    %v283 = vpack.c.b16 %v237, %v235
    %v284 = vpack.c.b16 %v240, %v238
    %v285 = vpack.c.b16 %v241, %v239
    %v286 = vpack.c.b16 %v244, %v242
    %v287 = vpack.c.b16 %v245, %v243
    %v288 = vpack.c.b16 %v248, %v246
    %v289 = vpack.c.b16 %v249, %v247
    %v290 = vpack.c.b16 %v252, %v250
    %v291 = vpack.c.b16 %v253, %v251
    %v292 = vpack.c.b16 %v256, %v254
    %v293 = vpack.c.b16 %v257, %v255
    %v294 = vpack.c.b16 %v260, %v258
    %v295 = vpack.c.b16 %v261, %v259
    %v296 = vpack.c.b16 %v264, %v262
    %v297 = vpack.c.b16 %v265, %v263
    %v394 = vunpack.c.l.b16 %v84
    %v395 = vunpack.c.h.b16 %v84
    %v396 = vunpack.c.l.b16 %v85
    %v397 = vunpack.c.h.b16 %v85
    %v398 = vunpack.c.l.b16 %v86
    %v399 = vunpack.c.h.b16 %v86
    %v400 = vunpack.c.l.b16 %v87
    %v401 = vunpack.c.h.b16 %v87
    %v402 = vunpack.c.l.b16 %v88
    %v403 = vunpack.c.h.b16 %v88
    %v404 = vunpack.c.l.b16 %v89
    %v405 = vunpack.c.h.b16 %v89
    %v406 = vunpack.c.l.b16 %v90
    %v407 = vunpack.c.h.b16 %v90
    %v408 = vunpack.c.l.b16 %v91
    %v409 = vunpack.c.h.b16 %v91
    %v410 = vunpack.c.l.b16 %v92
    %v411 = vunpack.c.h.b16 %v92
    %v412 = vunpack.c.l.b16 %v93
    %v413 = vunpack.c.h.b16 %v93
    %v414 = vunpack.c.l.b16 %v94
    %v415 = vunpack.c.h.b16 %v94
    %v416 = vunpack.c.l.b16 %v95
    %v417 = vunpack.c.h.b16 %v95
    %v418 = vunpack.c.l.b16 %v96
    %v419 = vunpack.c.h.b16 %v96
    %v420 = vunpack.c.l.b16 %v97
    %v421 = vunpack.c.h.b16 %v97
    %v422 = vunpack.c.l.b16 %v98
    %v423 = vunpack.c.h.b16 %v98
    %v424 = vunpack.c.l.b16 %v99
    %v425 = vunpack.c.h.b16 %v99
    %v426 = vunpack.c.l.b16 %v100
    %v427 = vunpack.c.h.b16 %v100
    %v428 = vunpack.c.l.b16 %v101
    %v429 = vunpack.c.h.b16 %v101
    %v430 = vunpack.c.l.b16 %v102
    %v431 = vunpack.c.h.b16 %v102
    %v432 = vunpack.c.l.b16 %v103
    %v433 = vunpack.c.h.b16 %v103
    %v434 = vunpack.c.l.b16 %v104
    %v435 = vunpack.c.h.b16 %v104
    %v436 = vunpack.c.l.b16 %v105
    %v437 = vunpack.c.h.b16 %v105
    %v438 = vunpack.c.l.b16 %v106
    %v439 = vunpack.c.h.b16 %v106
    %v440 = vunpack.c.l.b16 %v107
    %v441 = vunpack.c.h.b16 %v107
    %v442 = vunpack.c.l.b16 %v108
    %v443 = vunpack.c.h.b16 %v108
    %v444 = vunpack.c.l.b16 %v109
    %v445 = vunpack.c.h.b16 %v109
    %v446 = vunpack.c.l.b16 %v110
    %v447 = vunpack.c.h.b16 %v110
    %v448 = vunpack.c.l.b16 %v111
    %v449 = vunpack.c.h.b16 %v111
    %v450 = vunpack.c.l.b16 %v112
    %v451 = vunpack.c.h.b16 %v112
    %v452 = vunpack.c.l.b16 %v113
    %v453 = vunpack.c.h.b16 %v113
    %v454 = vunpack.c.l.b16 %v114
    %v455 = vunpack.c.h.b16 %v114
    %v456 = vunpack.c.l.b16 %v115
    %v457 = vunpack.c.h.b16 %v115
    %v458 = vunpack.c.l.b16 %v116
    %v459 = vunpack.c.h.b16 %v116
    %v460 = vunpack.c.l.b16 %v117
    %v461 = vunpack.c.h.b16 %v117
    %v462 = vunpack.c.l.b16 %v118
    %v463 = vunpack.c.h.b16 %v118
    %v464 = vunpack.c.l.b16 %v119
    %v465 = vunpack.c.h.b16 %v119
    %v466 = vunpack.c.l.b16 %v120
    %v467 = vunpack.c.h.b16 %v120
    %v468 = vunpack.c.l.b16 %v121
    %v469 = vunpack.c.h.b16 %v121
    %v470 = vunpack.c.l.b16 %v122
    %v471 = vunpack.c.h.b16 %v122
    %v472 = vunpack.c.l.b16 %v123
    %v473 = vunpack.c.h.b16 %v123
    %v474 = vunpack.c.l.b16 %v124
    %v475 = vunpack.c.h.b16 %v124
    %v476 = vunpack.c.l.b16 %v125
    %v477 = vunpack.c.h.b16 %v125
    %v478 = vunpack.c.l.b16 %v126
    %v479 = vunpack.c.h.b16 %v126
    %v480 = vunpack.c.l.b16 %v127
    %v481 = vunpack.c.h.b16 %v127
    %v482 = vunpack.c.l.b16 %v128
    %v483 = vunpack.c.h.b16 %v128
    %v484 = vunpack.c.l.b16 %v129
    %v485 = vunpack.c.h.b16 %v129
    %v486 = vunpack.c.l.b16 %v130
    %v487 = vunpack.c.h.b16 %v130
    %v488 = vunpack.c.l.b16 %v131
    %v489 = vunpack.c.h.b16 %v131
    %v490 = vunpack.c.l.b16 %v132
    %v491 = vunpack.c.h.b16 %v132
    %v492 = vunpack.c.l.b16 %v133
    %v493 = vunpack.c.h.b16 %v133
    %v494 = vunpack.c.l.b16 %v134
    %v495 = vunpack.c.h.b16 %v134
    %v496 = vunpack.c.l.b16 %v135
    %v497 = vunpack.c.h.b16 %v135
    %v498 = vunpack.c.l.b16 %v136
    %v499 = vunpack.c.h.b16 %v136
    %v500 = vunpack.c.l.b16 %v137
    %v501 = vunpack.c.h.b16 %v137
    %v502 = vunpack.c.l.b16 %v138
    %v503 = vunpack.c.h.b16 %v138
    %v504 = vunpack.c.l.b16 %v139
    %v505 = vunpack.c.h.b16 %v139
    %v506 = vunpack.c.l.b16 %v140
    %v507 = vunpack.c.h.b16 %v140
    %v508 = vunpack.c.l.b16 %v141
    %v509 = vunpack.c.h.b16 %v141
    %v510 = vunpack.c.l.b16 %v142
    %v511 = vunpack.c.h.b16 %v142
    %v512 = vunpack.c.l.b16 %v143
    %v513 = vunpack.c.h.b16 %v143
    %v514 = vunpack.c.l.b16 %v144
    %v515 = vunpack.c.h.b16 %v144
    %v516 = vunpack.c.l.b16 %v145
    %v517 = vunpack.c.h.b16 %v145
    %v518 = vunpack.c.l.b16 %v146
    %v519 = vunpack.c.h.b16 %v146
    %v520 = vunpack.c.l.b16 %v147
    %v521 = vunpack.c.h.b16 %v147
    %v522 = vpack.c.b16 %v398, %v394
    %v523 = vpack.c.b16 %v399, %v395
    %v524 = vpack.c.b16 %v400, %v396
    %v525 = vpack.c.b16 %v401, %v397
    %v526 = vpack.c.b16 %v406, %v402
    %v527 = vpack.c.b16 %v407, %v403
    %v528 = vpack.c.b16 %v408, %v404
    %v529 = vpack.c.b16 %v409, %v405
    %v530 = vpack.c.b16 %v414, %v410
    %v531 = vpack.c.b16 %v415, %v411
    %v532 = vpack.c.b16 %v416, %v412
    %v533 = vpack.c.b16 %v417, %v413
    %v534 = vpack.c.b16 %v422, %v418
    %v535 = vpack.c.b16 %v423, %v419
    %v536 = vpack.c.b16 %v424, %v420
    %v537 = vpack.c.b16 %v425, %v421
    %v538 = vpack.c.b16 %v430, %v426
    %v539 = vpack.c.b16 %v431, %v427
    %v540 = vpack.c.b16 %v432, %v428
    %v541 = vpack.c.b16 %v433, %v429
    %v542 = vpack.c.b16 %v438, %v434
    %v543 = vpack.c.b16 %v439, %v435
    %v544 = vpack.c.b16 %v440, %v436
    %v545 = vpack.c.b16 %v441, %v437
    %v546 = vpack.c.b16 %v446, %v442
    %v547 = vpack.c.b16 %v447, %v443
    %v548 = vpack.c.b16 %v448, %v444
    %v549 = vpack.c.b16 %v449, %v445
    %v550 = vpack.c.b16 %v454, %v450
    %v551 = vpack.c.b16 %v455, %v451
    %v552 = vpack.c.b16 %v456, %v452
    %v553 = vpack.c.b16 %v457, %v453
    %v554 = vpack.c.b16 %v462, %v458
    %v555 = vpack.c.b16 %v463, %v459
    %v556 = vpack.c.b16 %v464, %v460
    %v557 = vpack.c.b16 %v465, %v461
    %v558 = vpack.c.b16 %v470, %v466
    %v559 = vpack.c.b16 %v471, %v467
    %v560 = vpack.c.b16 %v472, %v468
    %v561 = vpack.c.b16 %v473, %v469
    %v562 = vpack.c.b16 %v478, %v474
    %v563 = vpack.c.b16 %v479, %v475
    %v564 = vpack.c.b16 %v480, %v476
    %v565 = vpack.c.b16 %v481, %v477
    %v566 = vpack.c.b16 %v486, %v482
    %v567 = vpack.c.b16 %v487, %v483
    %v568 = vpack.c.b16 %v488, %v484
    %v569 = vpack.c.b16 %v489, %v485
    %v570 = vpack.c.b16 %v494, %v490
    %v571 = vpack.c.b16 %v495, %v491
    %v572 = vpack.c.b16 %v496, %v492
    %v573 = vpack.c.b16 %v497, %v493
    %v574 = vpack.c.b16 %v502, %v498
    %v575 = vpack.c.b16 %v503, %v499
    %v576 = vpack.c.b16 %v504, %v500
    %v577 = vpack.c.b16 %v505, %v501
    %v578 = vpack.c.b16 %v510, %v506
    %v579 = vpack.c.b16 %v511, %v507
    %v580 = vpack.c.b16 %v512, %v508
    %v581 = vpack.c.b16 %v513, %v509
    %v582 = vpack.c.b16 %v518, %v514
    %v583 = vpack.c.b16 %v519, %v515
    %v584 = vpack.c.b16 %v520, %v516
    %v585 = vpack.c.b16 %v521, %v517
    %650 = vmatprep.subr.bf16.mxu0 %v551
    %651 = vmatpush1.bf16.msra.mxu0 %v550
    %652 = vmatprep.subr.bf16.mxu0 %v547
    %653 = vmatpush1.bf16.msra.mxu0 %v546
    %654 = vmatprep.subr.bf16.mxu0 %v543
    %655 = vmatpush1.bf16.msra.mxu0 %v542
    %656 = vmatprep.subr.bf16.mxu0 %v539
    %657 = vmatpush1.bf16.msra.mxu0 %v538
    %658 = vmatprep.subr.bf16.mxu0 %v535
    %659 = vmatpush1.bf16.msra.mxu0 %v534
    %660 = vmatprep.subr.bf16.mxu0 %v531
    %661 = vmatpush1.bf16.msra.mxu0 %v530
    %662 = vmatprep.subr.bf16.mxu0 %v527
    %663 = vmatpush1.bf16.msra.mxu0 %v526
    %664 = vmatprep.subr.bf16.mxu0 %v523
    %665 = vmatpush1.bf16.msra.mxu0 %v522
    %666 = vmatprep.subr.bf16.mxu0 %v583
    %667 = vmatpush2.bf16.msra.mxu0 %v582
    %668 = vmatprep.subr.bf16.mxu0 %v579
    %669 = vmatpush2.bf16.msra.mxu0 %v578
    %670 = vmatprep.subr.bf16.mxu0 %v575
    %671 = vmatpush2.bf16.msra.mxu0 %v574
    %672 = vmatprep.subr.bf16.mxu0 %v571
    %673 = vmatpush2.bf16.msra.mxu0 %v570
    %674 = vmatprep.subr.bf16.mxu0 %v567
    %675 = vmatpush2.bf16.msra.mxu0 %v566
    %676 = vmatprep.subr.bf16.mxu0 %v563
    %677 = vmatpush2.bf16.msra.mxu0 %v562
    %678 = vmatprep.subr.bf16.mxu0 %v559
    %679 = vmatpush2.bf16.msra.mxu0 %v558
    %680 = vmatprep.subr.bf16.mxu0 %v555
    %681 = vmatpush2.bf16.msra.mxu0 %v554
    %682 = vmatprep.mubr.bf16.mxu0 %v267
    %683 = vmatmul.mubr.bf16.gmra.mxu0 %v266
    %v684 = vpop.f32.mrf.mxu0
    %v685 = vadd.f32 %v153, %v684
    %v686 = vpop.f32.mrf.mxu0
    %v687 = vadd.f32 %v157, %v686
    %v688 = vpop.f32.mrf.mxu0
    %v689 = vadd.f32 %v153, %v688
    %v690 = vpop.f32.mrf.mxu0
    %v691 = vadd.f32 %v157, %v690
    %692 = vmatprep.mubr.bf16.mxu0 %v269
    %693 = vmatmul.mubr.bf16.gmra.mxu0 %v268
    %v694 = vpop.f32.mrf.mxu0
    %v695 = vadd.f32 %v153, %v694
    %v696 = vpop.f32.mrf.mxu0
    %v697 = vadd.f32 %v157, %v696
    %v698 = vpop.f32.mrf.mxu0
    %v699 = vadd.f32 %v153, %v698
    %v700 = vpop.f32.mrf.mxu0
    %v701 = vadd.f32 %v157, %v700
    %702 = vmatprep.mubr.bf16.mxu0 %v271
    %703 = vmatmul.mubr.bf16.gmra.mxu0 %v270
    %v704 = vpop.f32.mrf.mxu0
    %v705 = vadd.f32 %v153, %v704
    %v706 = vpop.f32.mrf.mxu0
    %v707 = vadd.f32 %v157, %v706
    %v708 = vpop.f32.mrf.mxu0
    %v709 = vadd.f32 %v153, %v708
    %v710 = vpop.f32.mrf.mxu0
    %v711 = vadd.f32 %v157, %v710
    %712 = vmatprep.mubr.bf16.mxu0 %v273
    %713 = vmatmul.mubr.bf16.gmra.mxu0 %v272
    %v714 = vpop.f32.mrf.mxu0
    %v715 = vadd.f32 %v153, %v714
    %v716 = vpop.f32.mrf.mxu0
    %v717 = vadd.f32 %v157, %v716
    %v718 = vpop.f32.mrf.mxu0
    %v719 = vadd.f32 %v153, %v718
    %v720 = vpop.f32.mrf.mxu0
    %v721 = vadd.f32 %v157, %v720
    %722 = vmatprep.mubr.bf16.mxu0 %v275
    %723 = vmatmul.mubr.bf16.gmra.mxu0 %v274
    %v724 = vpop.f32.mrf.mxu0
    %v725 = vadd.f32 %v153, %v724
    %v726 = vpop.f32.mrf.mxu0
    %v727 = vadd.f32 %v157, %v726
    %v728 = vpop.f32.mrf.mxu0
    %v729 = vadd.f32 %v153, %v728
    %v730 = vpop.f32.mrf.mxu0
    %v731 = vadd.f32 %v157, %v730
    %732 = vmatprep.mubr.bf16.mxu0 %v277
    %733 = vmatmul.mubr.bf16.gmra.mxu0 %v276
    %v734 = vpop.f32.mrf.mxu0
    %v735 = vadd.f32 %v153, %v734
    %v736 = vpop.f32.mrf.mxu0
    %v737 = vadd.f32 %v157, %v736
    %v738 = vpop.f32.mrf.mxu0
    %v739 = vadd.f32 %v153, %v738
    %v740 = vpop.f32.mrf.mxu0
    %v741 = vadd.f32 %v157, %v740
    %742 = vmatprep.mubr.bf16.mxu0 %v279
    %743 = vmatmul.mubr.bf16.gmra.mxu0 %v278
    %v744 = vpop.f32.mrf.mxu0
    %v745 = vadd.f32 %v153, %v744
    %v746 = vpop.f32.mrf.mxu0
    %v747 = vadd.f32 %v157, %v746
    %v748 = vpop.f32.mrf.mxu0
    %v749 = vadd.f32 %v153, %v748
    %v750 = vpop.f32.mrf.mxu0
    %v751 = vadd.f32 %v157, %v750
    %752 = vmatprep.mubr.bf16.mxu0 %v281
    %753 = vmatmul.mubr.bf16.gmra.mxu0 %v280
    %v754 = vpop.f32.mrf.mxu0
    %v755 = vadd.f32 %v153, %v754
    %v756 = vpop.f32.mrf.mxu0
    %v757 = vadd.f32 %v157, %v756
    %v758 = vpop.f32.mrf.mxu0
    %v759 = vadd.f32 %v153, %v758
    %v760 = vpop.f32.mrf.mxu0
    %v761 = vadd.f32 %v157, %v760
    %762 = vmatprep.mubr.bf16.mxu0 %v283
    %763 = vmatmul.mubr.bf16.gmra.mxu0 %v282
    %v764 = vpop.f32.mrf.mxu0
    %v765 = vadd.f32 %v153, %v764
    %v766 = vpop.f32.mrf.mxu0
    %v767 = vadd.f32 %v157, %v766
    %v768 = vpop.f32.mrf.mxu0
    %v769 = vadd.f32 %v153, %v768
    %v770 = vpop.f32.mrf.mxu0
    %v771 = vadd.f32 %v157, %v770
    %772 = vmatprep.mubr.bf16.mxu0 %v285
    %773 = vmatmul.mubr.bf16.gmra.mxu0 %v284
    %v774 = vpop.f32.mrf.mxu0
    %v775 = vadd.f32 %v153, %v774
    %v776 = vpop.f32.mrf.mxu0
    %v777 = vadd.f32 %v157, %v776
    %v778 = vpop.f32.mrf.mxu0
    %v779 = vadd.f32 %v153, %v778
    %v780 = vpop.f32.mrf.mxu0
    %v781 = vadd.f32 %v157, %v780
    %782 = vmatprep.mubr.bf16.mxu0 %v287
    %783 = vmatmul.mubr.bf16.gmra.mxu0 %v286
    %v784 = vpop.f32.mrf.mxu0
    %v785 = vadd.f32 %v153, %v784
    %v786 = vpop.f32.mrf.mxu0
    %v787 = vadd.f32 %v157, %v786
    %v788 = vpop.f32.mrf.mxu0
    %v789 = vadd.f32 %v153, %v788
    %v790 = vpop.f32.mrf.mxu0
    %v791 = vadd.f32 %v157, %v790
    %792 = vmatprep.mubr.bf16.mxu0 %v289
    %793 = vmatmul.mubr.bf16.gmra.mxu0 %v288
    %v794 = vpop.f32.mrf.mxu0
    %v795 = vadd.f32 %v153, %v794
    %v796 = vpop.f32.mrf.mxu0
    %v797 = vadd.f32 %v157, %v796
    %v798 = vpop.f32.mrf.mxu0
    %v799 = vadd.f32 %v153, %v798
    %v800 = vpop.f32.mrf.mxu0
    %v801 = vadd.f32 %v157, %v800
    %802 = vmatprep.mubr.bf16.mxu0 %v291
    %803 = vmatmul.mubr.bf16.gmra.mxu0 %v290
    %v804 = vpop.f32.mrf.mxu0
    %v805 = vadd.f32 %v153, %v804
    %v806 = vpop.f32.mrf.mxu0
    %v807 = vadd.f32 %v157, %v806
    %v808 = vpop.f32.mrf.mxu0
    %v809 = vadd.f32 %v153, %v808
    %v810 = vpop.f32.mrf.mxu0
    %v811 = vadd.f32 %v157, %v810
    %812 = vmatprep.mubr.bf16.mxu0 %v293
    %813 = vmatmul.mubr.bf16.gmra.mxu0 %v292
    %v814 = vpop.f32.mrf.mxu0
    %v815 = vadd.f32 %v153, %v814
    %v816 = vpop.f32.mrf.mxu0
    %v817 = vadd.f32 %v157, %v816
    %v818 = vpop.f32.mrf.mxu0
    %v819 = vadd.f32 %v153, %v818
    %v820 = vpop.f32.mrf.mxu0
    %v821 = vadd.f32 %v157, %v820
    %822 = vmatprep.mubr.bf16.mxu0 %v295
    %823 = vmatmul.mubr.bf16.gmra.mxu0 %v294
    %v824 = vpop.f32.mrf.mxu0
    %v825 = vadd.f32 %v153, %v824
    %v826 = vpop.f32.mrf.mxu0
    %v827 = vadd.f32 %v157, %v826
    %v828 = vpop.f32.mrf.mxu0
    %v829 = vadd.f32 %v153, %v828
    %v830 = vpop.f32.mrf.mxu0
    %v831 = vadd.f32 %v157, %v830
    %832 = vmatprep.mubr.bf16.mxu0 %v297
    %833 = vmatmul.mubr.bf16.gmra.mxu0 %v296
    %v834 = vpop.f32.mrf.mxu0
    %v835 = vadd.f32 %v153, %v834
    %v836 = vpop.f32.mrf.mxu0
    %v837 = vadd.f32 %v157, %v836
    %v838 = vpop.f32.mrf.mxu0
    %v839 = vadd.f32 %v153, %v838
    %v840 = vpop.f32.mrf.mxu0
    %v841 = vadd.f32 %v157, %v840
    %842 = vdwg.mxu0
    %843 = vmatprep.subr.bf16.mxu0 %v553
    %844 = vmatpush1.bf16.msra.mxu0 %v552
    %845 = vmatprep.subr.bf16.mxu0 %v549
    %846 = vmatpush1.bf16.msra.mxu0 %v548
    %847 = vmatprep.subr.bf16.mxu0 %v545
    %848 = vmatpush1.bf16.msra.mxu0 %v544
    %849 = vmatprep.subr.bf16.mxu0 %v541
    %850 = vmatpush1.bf16.msra.mxu0 %v540
    %851 = vmatprep.subr.bf16.mxu0 %v537
    %852 = vmatpush1.bf16.msra.mxu0 %v536
    %853 = vmatprep.subr.bf16.mxu0 %v533
    %854 = vmatpush1.bf16.msra.mxu0 %v532
    %855 = vmatprep.subr.bf16.mxu0 %v529
    %856 = vmatpush1.bf16.msra.mxu0 %v528
    %857 = vmatprep.subr.bf16.mxu0 %v525
    %858 = vmatpush1.bf16.msra.mxu0 %v524
    %859 = vmatprep.subr.bf16.mxu0 %v585
    %860 = vmatpush2.bf16.msra.mxu0 %v584
    %861 = vmatprep.subr.bf16.mxu0 %v581
    %862 = vmatpush2.bf16.msra.mxu0 %v580
    %863 = vmatprep.subr.bf16.mxu0 %v577
    %864 = vmatpush2.bf16.msra.mxu0 %v576
    %865 = vmatprep.subr.bf16.mxu0 %v573
    %866 = vmatpush2.bf16.msra.mxu0 %v572
    %867 = vmatprep.subr.bf16.mxu0 %v569
    %868 = vmatpush2.bf16.msra.mxu0 %v568
    %869 = vmatprep.subr.bf16.mxu0 %v565
    %870 = vmatpush2.bf16.msra.mxu0 %v564
    %871 = vmatprep.subr.bf16.mxu0 %v561
    %872 = vmatpush2.bf16.msra.mxu0 %v560
    %873 = vmatprep.subr.bf16.mxu0 %v557
    %874 = vmatpush2.bf16.msra.mxu0 %v556
    %875 = vmatprep.mubr.bf16.mxu0 %v267
    %876 = vmatmul.mubr.bf16.gmra.mxu0 %v266
    %v877 = vpop.f32.mrf.mxu0
    %v878 = vadd.f32 %v161, %v877
    %v879 = vpop.f32.mrf.mxu0
    %v880 = vadd.f32 %v165, %v879
    %v881 = vpop.f32.mrf.mxu0
    %v882 = vadd.f32 %v161, %v881
    %v883 = vpop.f32.mrf.mxu0
    %v884 = vadd.f32 %v165, %v883
    %885 = vmatprep.mubr.bf16.mxu0 %v269
    %886 = vmatmul.mubr.bf16.gmra.mxu0 %v268
    %v887 = vpop.f32.mrf.mxu0
    %v888 = vadd.f32 %v161, %v887
    %v889 = vpop.f32.mrf.mxu0
    %v890 = vadd.f32 %v165, %v889
    %v891 = vpop.f32.mrf.mxu0
    %v892 = vadd.f32 %v161, %v891
    %v893 = vpop.f32.mrf.mxu0
    %v894 = vadd.f32 %v165, %v893
    %895 = vmatprep.mubr.bf16.mxu0 %v271
    %896 = vmatmul.mubr.bf16.gmra.mxu0 %v270
    %v897 = vpop.f32.mrf.mxu0
    %v898 = vadd.f32 %v161, %v897
    %v899 = vpop.f32.mrf.mxu0
    %v900 = vadd.f32 %v165, %v899
    %v901 = vpop.f32.mrf.mxu0
    %v902 = vadd.f32 %v161, %v901
    %v903 = vpop.f32.mrf.mxu0
    %v904 = vadd.f32 %v165, %v903
    %905 = vmatprep.mubr.bf16.mxu0 %v273
    %906 = vmatmul.mubr.bf16.gmra.mxu0 %v272
    %v907 = vpop.f32.mrf.mxu0
    %v908 = vadd.f32 %v161, %v907
    %v909 = vpop.f32.mrf.mxu0
    %v910 = vadd.f32 %v165, %v909
    %v911 = vpop.f32.mrf.mxu0
    %v912 = vadd.f32 %v161, %v911
    %v913 = vpop.f32.mrf.mxu0
    %v914 = vadd.f32 %v165, %v913
    %915 = vmatprep.mubr.bf16.mxu0 %v275
    %916 = vmatmul.mubr.bf16.gmra.mxu0 %v274
    %v917 = vpop.f32.mrf.mxu0
    %v918 = vadd.f32 %v161, %v917
    %v919 = vpop.f32.mrf.mxu0
    %v920 = vadd.f32 %v165, %v919
    %v921 = vpop.f32.mrf.mxu0
    %v922 = vadd.f32 %v161, %v921
    %v923 = vpop.f32.mrf.mxu0
    %v924 = vadd.f32 %v165, %v923
    %925 = vmatprep.mubr.bf16.mxu0 %v277
    %926 = vmatmul.mubr.bf16.gmra.mxu0 %v276
    %v927 = vpop.f32.mrf.mxu0
    %v928 = vadd.f32 %v161, %v927
    %v929 = vpop.f32.mrf.mxu0
    %v930 = vadd.f32 %v165, %v929
    %v931 = vpop.f32.mrf.mxu0
    %v932 = vadd.f32 %v161, %v931
    %v933 = vpop.f32.mrf.mxu0
    %v934 = vadd.f32 %v165, %v933
    %935 = vmatprep.mubr.bf16.mxu0 %v279
    %936 = vmatmul.mubr.bf16.gmra.mxu0 %v278
    %v937 = vpop.f32.mrf.mxu0
    %v938 = vadd.f32 %v161, %v937
    %v939 = vpop.f32.mrf.mxu0
    %v940 = vadd.f32 %v165, %v939
    %v941 = vpop.f32.mrf.mxu0
    %v942 = vadd.f32 %v161, %v941
    %v943 = vpop.f32.mrf.mxu0
    %v944 = vadd.f32 %v165, %v943
    %945 = vmatprep.mubr.bf16.mxu0 %v281
    %946 = vmatmul.mubr.bf16.gmra.mxu0 %v280
    %v947 = vpop.f32.mrf.mxu0
    %v948 = vadd.f32 %v161, %v947
    %v949 = vpop.f32.mrf.mxu0
    %v950 = vadd.f32 %v165, %v949
    %v951 = vpop.f32.mrf.mxu0
    %v952 = vadd.f32 %v161, %v951
    %v953 = vpop.f32.mrf.mxu0
    %v954 = vadd.f32 %v165, %v953
    %955 = vmatprep.mubr.bf16.mxu0 %v283
    %956 = vmatmul.mubr.bf16.gmra.mxu0 %v282
    %v957 = vpop.f32.mrf.mxu0
    %v958 = vadd.f32 %v161, %v957
    %v959 = vpop.f32.mrf.mxu0
    %v960 = vadd.f32 %v165, %v959
    %v961 = vpop.f32.mrf.mxu0
    %v962 = vadd.f32 %v161, %v961
    %v963 = vpop.f32.mrf.mxu0
    %v964 = vadd.f32 %v165, %v963
    %965 = vmatprep.mubr.bf16.mxu0 %v285
    %966 = vmatmul.mubr.bf16.gmra.mxu0 %v284
    %v967 = vpop.f32.mrf.mxu0
    %v968 = vadd.f32 %v161, %v967
    %v969 = vpop.f32.mrf.mxu0
    %v970 = vadd.f32 %v165, %v969
    %v971 = vpop.f32.mrf.mxu0
    %v972 = vadd.f32 %v161, %v971
    %v973 = vpop.f32.mrf.mxu0
    %v974 = vadd.f32 %v165, %v973
    %975 = vmatprep.mubr.bf16.mxu0 %v287
    %976 = vmatmul.mubr.bf16.gmra.mxu0 %v286
    %v977 = vpop.f32.mrf.mxu0
    %v978 = vadd.f32 %v161, %v977
    %v979 = vpop.f32.mrf.mxu0
    %v980 = vadd.f32 %v165, %v979
    %v981 = vpop.f32.mrf.mxu0
    %v982 = vadd.f32 %v161, %v981
    %v983 = vpop.f32.mrf.mxu0
    %v984 = vadd.f32 %v165, %v983
    %985 = vmatprep.mubr.bf16.mxu0 %v289
    %986 = vmatmul.mubr.bf16.gmra.mxu0 %v288
    %v987 = vpop.f32.mrf.mxu0
    %v988 = vadd.f32 %v161, %v987
    %v989 = vpop.f32.mrf.mxu0
    %v990 = vadd.f32 %v165, %v989
    %v991 = vpop.f32.mrf.mxu0
    %v992 = vadd.f32 %v161, %v991
    %v993 = vpop.f32.mrf.mxu0
    %v994 = vadd.f32 %v165, %v993
    %995 = vmatprep.mubr.bf16.mxu0 %v291
    %996 = vmatmul.mubr.bf16.gmra.mxu0 %v290
    %v997 = vpop.f32.mrf.mxu0
    %v998 = vadd.f32 %v161, %v997
    %v999 = vpop.f32.mrf.mxu0
    %v1000 = vadd.f32 %v165, %v999
    %v1001 = vpop.f32.mrf.mxu0
    %v1002 = vadd.f32 %v161, %v1001
    %v1003 = vpop.f32.mrf.mxu0
    %v1004 = vadd.f32 %v165, %v1003
    %1005 = vmatprep.mubr.bf16.mxu0 %v293
    %1006 = vmatmul.mubr.bf16.gmra.mxu0 %v292
    %v1007 = vpop.f32.mrf.mxu0
    %v1008 = vadd.f32 %v161, %v1007
    %v1009 = vpop.f32.mrf.mxu0
    %v1010 = vadd.f32 %v165, %v1009
    %v1011 = vpop.f32.mrf.mxu0
    %v1012 = vadd.f32 %v161, %v1011
    %v1013 = vpop.f32.mrf.mxu0
    %v1014 = vadd.f32 %v165, %v1013
    %1015 = vmatprep.mubr.bf16.mxu0 %v295
    %1016 = vmatmul.mubr.bf16.gmra.mxu0 %v294
    %v1017 = vpop.f32.mrf.mxu0
    %v1018 = vadd.f32 %v161, %v1017
    %v1019 = vpop.f32.mrf.mxu0
    %v1020 = vadd.f32 %v165, %v1019
    %v1021 = vpop.f32.mrf.mxu0
    %v1022 = vadd.f32 %v161, %v1021
    %v1023 = vpop.f32.mrf.mxu0
    %v1024 = vadd.f32 %v165, %v1023
    %1025 = vmatprep.mubr.bf16.mxu0 %v297
    %1026 = vmatmul.mubr.bf16.gmra.mxu0 %v296
    %v1027 = vpop.f32.mrf.mxu0
    %v1028 = vadd.f32 %v161, %v1027
    %v1029 = vpop.f32.mrf.mxu0
    %v1030 = vadd.f32 %v165, %v1029
    %v1031 = vpop.f32.mrf.mxu0
    %v1032 = vadd.f32 %v161, %v1031
    %v1033 = vpop.f32.mrf.mxu0
    %v1034 = vadd.f32 %v165, %v1033
    %1035 = vdwg.mxu0
    %v1036 = vmax.f32 %v685, 0.0
    %v1037 = vmax.f32 %v687, 0.0
    %v1038 = vmax.f32 %v878, 0.0
    %v1039 = vmax.f32 %v880, 0.0
    %v1040 = vmax.f32 %v689, 0.0
    %v1041 = vmax.f32 %v691, 0.0
    %v1042 = vmax.f32 %v882, 0.0
    %v1043 = vmax.f32 %v884, 0.0
    %v1044 = vmax.f32 %v695, 0.0
    %v1045 = vmax.f32 %v697, 0.0
    %v1046 = vmax.f32 %v888, 0.0
    %v1047 = vmax.f32 %v890, 0.0
    %v1048 = vmax.f32 %v699, 0.0
    %v1049 = vmax.f32 %v701, 0.0
    %v1050 = vmax.f32 %v892, 0.0
    %v1051 = vmax.f32 %v894, 0.0
    %v1052 = vmax.f32 %v705, 0.0
    %v1053 = vmax.f32 %v707, 0.0
    %v1054 = vmax.f32 %v898, 0.0
    %v1055 = vmax.f32 %v900, 0.0
    %v1056 = vmax.f32 %v709, 0.0
    %v1057 = vmax.f32 %v711, 0.0
    %v1058 = vmax.f32 %v902, 0.0
    %v1059 = vmax.f32 %v904, 0.0
    %v1060 = vmax.f32 %v715, 0.0
    %v1061 = vmax.f32 %v717, 0.0
    %v1062 = vmax.f32 %v908, 0.0
    %v1063 = vmax.f32 %v910, 0.0
    %v1064 = vmax.f32 %v719, 0.0
    %v1065 = vmax.f32 %v721, 0.0
    %v1066 = vmax.f32 %v912, 0.0
    %v1067 = vmax.f32 %v914, 0.0
    %v1068 = vmax.f32 %v725, 0.0
    %v1069 = vmax.f32 %v727, 0.0
    %v1070 = vmax.f32 %v918, 0.0
    %v1071 = vmax.f32 %v920, 0.0
    %v1072 = vmax.f32 %v729, 0.0
    %v1073 = vmax.f32 %v731, 0.0
    %v1074 = vmax.f32 %v922, 0.0
    %v1075 = vmax.f32 %v924, 0.0
    %v1076 = vmax.f32 %v735, 0.0
    %v1077 = vmax.f32 %v737, 0.0
    %v1078 = vmax.f32 %v928, 0.0
    %v1079 = vmax.f32 %v930, 0.0
    %v1080 = vmax.f32 %v739, 0.0
    %v1081 = vmax.f32 %v741, 0.0
    %v1082 = vmax.f32 %v932, 0.0
    %v1083 = vmax.f32 %v934, 0.0
    %v1084 = vmax.f32 %v745, 0.0
    %v1085 = vmax.f32 %v747, 0.0
    %v1086 = vmax.f32 %v938, 0.0
    %v1087 = vmax.f32 %v940, 0.0
    %v1088 = vmax.f32 %v749, 0.0
    %v1089 = vmax.f32 %v751, 0.0
    %v1090 = vmax.f32 %v942, 0.0
    %v1091 = vmax.f32 %v944, 0.0
    %v1092 = vmax.f32 %v755, 0.0
    %v1093 = vmax.f32 %v757, 0.0
    %v1094 = vmax.f32 %v948, 0.0
    %v1095 = vmax.f32 %v950, 0.0
    %v1096 = vmax.f32 %v759, 0.0
    %v1097 = vmax.f32 %v761, 0.0
    %v1098 = vmax.f32 %v952, 0.0
    %v1099 = vmax.f32 %v954, 0.0
    %v1100 = vmax.f32 %v765, 0.0
    %v1101 = vmax.f32 %v767, 0.0
    %v1102 = vmax.f32 %v958, 0.0
    %v1103 = vmax.f32 %v960, 0.0
    %v1104 = vmax.f32 %v769, 0.0
    %v1105 = vmax.f32 %v771, 0.0
    %v1106 = vmax.f32 %v962, 0.0
    %v1107 = vmax.f32 %v964, 0.0
    %v1108 = vmax.f32 %v775, 0.0
    %v1109 = vmax.f32 %v777, 0.0
    %v1110 = vmax.f32 %v968, 0.0
    %v1111 = vmax.f32 %v970, 0.0
    %v1112 = vmax.f32 %v779, 0.0
    %v1113 = vmax.f32 %v781, 0.0
    %v1114 = vmax.f32 %v972, 0.0
    %v1115 = vmax.f32 %v974, 0.0
    %v1116 = vmax.f32 %v785, 0.0
    %v1117 = vmax.f32 %v787, 0.0
    %v1118 = vmax.f32 %v978, 0.0
    %v1119 = vmax.f32 %v980, 0.0
    %v1120 = vmax.f32 %v789, 0.0
    %v1121 = vmax.f32 %v791, 0.0
    %v1122 = vmax.f32 %v982, 0.0
    %v1123 = vmax.f32 %v984, 0.0
    %v1124 = vmax.f32 %v795, 0.0
    %v1125 = vmax.f32 %v797, 0.0
    %v1126 = vmax.f32 %v988, 0.0
    %v1127 = vmax.f32 %v990, 0.0
    %v1128 = vmax.f32 %v799, 0.0
    %v1129 = vmax.f32 %v801, 0.0
    %v1130 = vmax.f32 %v992, 0.0
    %v1131 = vmax.f32 %v994, 0.0
    %v1132 = vmax.f32 %v805, 0.0
    %v1133 = vmax.f32 %v807, 0.0
    %v1134 = vmax.f32 %v998, 0.0
    %v1135 = vmax.f32 %v1000, 0.0
    %v1136 = vmax.f32 %v809, 0.0
    %v1137 = vmax.f32 %v811, 0.0
    %v1138 = vmax.f32 %v1002, 0.0
    %v1139 = vmax.f32 %v1004, 0.0
    %v1140 = vmax.f32 %v815, 0.0
    %v1141 = vmax.f32 %v817, 0.0
    %v1142 = vmax.f32 %v1008, 0.0
    %v1143 = vmax.f32 %v1010, 0.0
    %v1144 = vmax.f32 %v819, 0.0
    %v1145 = vmax.f32 %v821, 0.0
    %v1146 = vmax.f32 %v1012, 0.0
    %v1147 = vmax.f32 %v1014, 0.0
    %v1148 = vmax.f32 %v825, 0.0
    %v1149 = vmax.f32 %v827, 0.0
    %v1150 = vmax.f32 %v1018, 0.0
    %v1151 = vmax.f32 %v1020, 0.0
    %v1152 = vmax.f32 %v829, 0.0
    %v1153 = vmax.f32 %v831, 0.0
    %v1154 = vmax.f32 %v1022, 0.0
    %v1155 = vmax.f32 %v1024, 0.0
    %v1156 = vmax.f32 %v835, 0.0
    %v1157 = vmax.f32 %v837, 0.0
    %v1158 = vmax.f32 %v1028, 0.0
    %v1159 = vmax.f32 %v1030, 0.0
    %v1160 = vmax.f32 %v839, 0.0
    %v1161 = vmax.f32 %v841, 0.0
    %v1162 = vmax.f32 %v1032, 0.0
    %v1163 = vmax.f32 %v1034, 0.0
    %v1164 = vpack.c.bf16 %v1040, %v1036
    %v1165 = vpack.c.bf16 %v1041, %v1037
    %v1166 = vpack.c.bf16 %v1042, %v1038
    %v1167 = vpack.c.bf16 %v1043, %v1039
    %v1168 = vpack.c.bf16 %v1048, %v1044
    %v1169 = vpack.c.bf16 %v1049, %v1045
    %v1170 = vpack.c.bf16 %v1050, %v1046
    %v1171 = vpack.c.bf16 %v1051, %v1047
    %v1172 = vpack.c.bf16 %v1056, %v1052
    %v1173 = vpack.c.bf16 %v1057, %v1053
    %v1174 = vpack.c.bf16 %v1058, %v1054
    %v1175 = vpack.c.bf16 %v1059, %v1055
    %v1176 = vpack.c.bf16 %v1064, %v1060
    %v1177 = vpack.c.bf16 %v1065, %v1061
    %v1178 = vpack.c.bf16 %v1066, %v1062
    %v1179 = vpack.c.bf16 %v1067, %v1063
    %v1180 = vpack.c.bf16 %v1072, %v1068
    %v1181 = vpack.c.bf16 %v1073, %v1069
    %v1182 = vpack.c.bf16 %v1074, %v1070
    %v1183 = vpack.c.bf16 %v1075, %v1071
    %v1184 = vpack.c.bf16 %v1080, %v1076
    %v1185 = vpack.c.bf16 %v1081, %v1077
    %v1186 = vpack.c.bf16 %v1082, %v1078
    %v1187 = vpack.c.bf16 %v1083, %v1079
    %v1188 = vpack.c.bf16 %v1088, %v1084
    %v1189 = vpack.c.bf16 %v1089, %v1085
    %v1190 = vpack.c.bf16 %v1090, %v1086
    %v1191 = vpack.c.bf16 %v1091, %v1087
    %v1192 = vpack.c.bf16 %v1096, %v1092
    %v1193 = vpack.c.bf16 %v1097, %v1093
    %v1194 = vpack.c.bf16 %v1098, %v1094
    %v1195 = vpack.c.bf16 %v1099, %v1095
    %v1196 = vpack.c.bf16 %v1104, %v1100
    %v1197 = vpack.c.bf16 %v1105, %v1101
    %v1198 = vpack.c.bf16 %v1106, %v1102
    %v1199 = vpack.c.bf16 %v1107, %v1103
    %v1200 = vpack.c.bf16 %v1112, %v1108
    %v1201 = vpack.c.bf16 %v1113, %v1109
    %v1202 = vpack.c.bf16 %v1114, %v1110
    %v1203 = vpack.c.bf16 %v1115, %v1111
    %v1204 = vpack.c.bf16 %v1120, %v1116
    %v1205 = vpack.c.bf16 %v1121, %v1117
    %v1206 = vpack.c.bf16 %v1122, %v1118
    %v1207 = vpack.c.bf16 %v1123, %v1119
    %v1208 = vpack.c.bf16 %v1128, %v1124
    %v1209 = vpack.c.bf16 %v1129, %v1125
    %v1210 = vpack.c.bf16 %v1130, %v1126
    %v1211 = vpack.c.bf16 %v1131, %v1127
    %v1212 = vpack.c.bf16 %v1136, %v1132
    %v1213 = vpack.c.bf16 %v1137, %v1133
    %v1214 = vpack.c.bf16 %v1138, %v1134
    %v1215 = vpack.c.bf16 %v1139, %v1135
    %v1216 = vpack.c.bf16 %v1144, %v1140
    %v1217 = vpack.c.bf16 %v1145, %v1141
    %v1218 = vpack.c.bf16 %v1146, %v1142
    %v1219 = vpack.c.bf16 %v1147, %v1143
    %v1220 = vpack.c.bf16 %v1152, %v1148
    %v1221 = vpack.c.bf16 %v1153, %v1149
    %v1222 = vpack.c.bf16 %v1154, %v1150
    %v1223 = vpack.c.bf16 %v1155, %v1151
    %v1224 = vpack.c.bf16 %v1160, %v1156
    %v1225 = vpack.c.bf16 %v1161, %v1157
    %v1226 = vpack.c.bf16 %v1162, %v1158
    %v1227 = vpack.c.bf16 %v1163, %v1159
    %v1228 = vld [vmem:[%s4] sm:$0xf]
    %v1229 = vld [vmem:[%s4 + $0x4] sm:$0xf]
    %v1230 = vld [vmem:[%s4 + $0x8] sm:$0xf]
    %v1231 = vld [vmem:[%s4 + $0xc] sm:$0xf]
    %v1232 = vld [vmem:[%s4 + $0x10] sm:$0xf]
    %v1233 = vld [vmem:[%s4 + $0x14] sm:$0xf]
    %v1234 = vld [vmem:[%s4 + $0x18] sm:$0xf]
    %v1235 = vld [vmem:[%s4 + $0x1c] sm:$0xf]
    %v1236 = vld [vmem:[%s4 + $0x20] sm:$0xf]
    %v1237 = vld [vmem:[%s4 + $0x24] sm:$0xf]
    %v1238 = vld [vmem:[%s4 + $0x28] sm:$0xf]
    %v1239 = vld [vmem:[%s4 + $0x2c] sm:$0xf]
    %v1240 = vld [vmem:[%s4 + $0x30] sm:$0xf]
    %v1241 = vld [vmem:[%s4 + $0x34] sm:$0xf]
    %v1242 = vld [vmem:[%s4 + $0x38] sm:$0xf]
    %v1243 = vld [vmem:[%s4 + $0x3c] sm:$0xf]
    %v1244 = vld [vmem:[%s4 + $0x40] sm:$0xf]
    %v1245 = vld [vmem:[%s4 + $0x44] sm:$0xf]
    %v1246 = vld [vmem:[%s4 + $0x48] sm:$0xf]
    %v1247 = vld [vmem:[%s4 + $0x4c] sm:$0xf]
    %v1248 = vld [vmem:[%s4 + $0x50] sm:$0xf]
    %v1249 = vld [vmem:[%s4 + $0x54] sm:$0xf]
    %v1250 = vld [vmem:[%s4 + $0x58] sm:$0xf]
    %v1251 = vld [vmem:[%s4 + $0x5c] sm:$0xf]
    %v1252 = vld [vmem:[%s4 + $0x60] sm:$0xf]
    %v1253 = vld [vmem:[%s4 + $0x64] sm:$0xf]
    %v1254 = vld [vmem:[%s4 + $0x68] sm:$0xf]
    %v1255 = vld [vmem:[%s4 + $0x6c] sm:$0xf]
    %v1256 = vld [vmem:[%s4 + $0x70] sm:$0xf]
    %v1257 = vld [vmem:[%s4 + $0x74] sm:$0xf]
    %v1258 = vld [vmem:[%s4 + $0x78] sm:$0xf]
    %v1259 = vld [vmem:[%s4 + $0x7c] sm:$0xf]
    %v1260 = vld [vmem:[%s4 + $0x80] sm:$0xf]
    %v1261 = vld [vmem:[%s4 + $0x84] sm:$0xf]
    %v1262 = vld [vmem:[%s4 + $0x88] sm:$0xf]
    %v1263 = vld [vmem:[%s4 + $0x8c] sm:$0xf]
    %v1264 = vld [vmem:[%s4 + $0x90] sm:$0xf]
    %v1265 = vld [vmem:[%s4 + $0x94] sm:$0xf]
    %v1266 = vld [vmem:[%s4 + $0x98] sm:$0xf]
    %v1267 = vld [vmem:[%s4 + $0x9c] sm:$0xf]
    %v1268 = vld [vmem:[%s4 + $0xa0] sm:$0xf]
    %v1269 = vld [vmem:[%s4 + $0xa4] sm:$0xf]
    %v1270 = vld [vmem:[%s4 + $0xa8] sm:$0xf]
    %v1271 = vld [vmem:[%s4 + $0xac] sm:$0xf]
    %v1272 = vld [vmem:[%s4 + $0xb0] sm:$0xf]
    %v1273 = vld [vmem:[%s4 + $0xb4] sm:$0xf]
    %v1274 = vld [vmem:[%s4 + $0xb8] sm:$0xf]
    %v1275 = vld [vmem:[%s4 + $0xbc] sm:$0xf]
    %v1276 = vld [vmem:[%s4 + $0xc0] sm:$0xf]
    %v1277 = vld [vmem:[%s4 + $0xc4] sm:$0xf]
    %v1278 = vld [vmem:[%s4 + $0xc8] sm:$0xf]
    %v1279 = vld [vmem:[%s4 + $0xcc] sm:$0xf]
    %v1280 = vld [vmem:[%s4 + $0xd0] sm:$0xf]
    %v1281 = vld [vmem:[%s4 + $0xd4] sm:$0xf]
    %v1282 = vld [vmem:[%s4 + $0xd8] sm:$0xf]
    %v1283 = vld [vmem:[%s4 + $0xdc] sm:$0xf]
    %v1284 = vld [vmem:[%s4 + $0xe0] sm:$0xf]
    %v1285 = vld [vmem:[%s4 + $0xe4] sm:$0xf]
    %v1286 = vld [vmem:[%s4 + $0xe8] sm:$0xf]
    %v1287 = vld [vmem:[%s4 + $0xec] sm:$0xf]
    %v1288 = vld [vmem:[%s4 + $0xf0] sm:$0xf]
    %v1289 = vld [vmem:[%s4 + $0xf4] sm:$0xf]
    %v1290 = vld [vmem:[%s4 + $0xf8] sm:$0xf]
    %v1291 = vld [vmem:[%s4 + $0xfc] sm:$0xf]
    %v1292 = vld [vmem:[%s5] sm:$0x1]
    %v1294 = vlaneseq
    %v1295 = vshrl.u32 %v1294, 7
    %v1296 = vsub.s32 0, %v1295
    %v1297 = vrot.slane %v1292, %v1296
    %v1363 = vunpack.c.l.b16 %v1228
    %v1364 = vunpack.c.l.b16 %v1229
    %v1365 = vunpack.c.l.b16 %v1230
    %v1366 = vunpack.c.l.b16 %v1231
    %v1367 = vunpack.c.l.b16 %v1232
    %v1368 = vunpack.c.l.b16 %v1233
    %v1369 = vunpack.c.l.b16 %v1234
    %v1370 = vunpack.c.l.b16 %v1235
    %v1371 = vunpack.c.l.b16 %v1236
    %v1372 = vunpack.c.l.b16 %v1237
    %v1373 = vunpack.c.l.b16 %v1238
    %v1374 = vunpack.c.l.b16 %v1239
    %v1375 = vunpack.c.l.b16 %v1240
    %v1376 = vunpack.c.l.b16 %v1241
    %v1377 = vunpack.c.l.b16 %v1242
    %v1378 = vunpack.c.l.b16 %v1243
    %v1379 = vunpack.c.l.b16 %v1244
    %v1380 = vunpack.c.l.b16 %v1245
    %v1381 = vunpack.c.l.b16 %v1246
    %v1382 = vunpack.c.l.b16 %v1247
    %v1383 = vunpack.c.l.b16 %v1248
    %v1384 = vunpack.c.l.b16 %v1249
    %v1385 = vunpack.c.l.b16 %v1250
    %v1386 = vunpack.c.l.b16 %v1251
    %v1387 = vunpack.c.l.b16 %v1252
    %v1388 = vunpack.c.l.b16 %v1253
    %v1389 = vunpack.c.l.b16 %v1254
    %v1390 = vunpack.c.l.b16 %v1255
    %v1391 = vunpack.c.l.b16 %v1256
    %v1392 = vunpack.c.l.b16 %v1257
    %v1393 = vunpack.c.l.b16 %v1258
    %v1394 = vunpack.c.l.b16 %v1259
    %v1395 = vunpack.c.l.b16 %v1260
    %v1396 = vunpack.c.l.b16 %v1261
    %v1397 = vunpack.c.l.b16 %v1262
    %v1398 = vunpack.c.l.b16 %v1263
    %v1399 = vunpack.c.l.b16 %v1264
    %v1400 = vunpack.c.l.b16 %v1265
    %v1401 = vunpack.c.l.b16 %v1266
    %v1402 = vunpack.c.l.b16 %v1267
    %v1403 = vunpack.c.l.b16 %v1268
    %v1404 = vunpack.c.l.b16 %v1269
    %v1405 = vunpack.c.l.b16 %v1270
    %v1406 = vunpack.c.l.b16 %v1271
    %v1407 = vunpack.c.l.b16 %v1272
    %v1408 = vunpack.c.l.b16 %v1273
    %v1409 = vunpack.c.l.b16 %v1274
    %v1410 = vunpack.c.l.b16 %v1275
    %v1411 = vunpack.c.l.b16 %v1276
    %v1412 = vunpack.c.l.b16 %v1277
    %v1413 = vunpack.c.l.b16 %v1278
    %v1414 = vunpack.c.l.b16 %v1279
    %v1415 = vunpack.c.l.b16 %v1280
    %v1416 = vunpack.c.l.b16 %v1281
    %v1417 = vunpack.c.l.b16 %v1282
    %v1418 = vunpack.c.l.b16 %v1283
    %v1419 = vunpack.c.l.b16 %v1284
    %v1420 = vunpack.c.l.b16 %v1285
    %v1421 = vunpack.c.l.b16 %v1286
    %v1422 = vunpack.c.l.b16 %v1287
    %v1423 = vunpack.c.l.b16 %v1288
    %v1424 = vunpack.c.l.b16 %v1289
    %v1425 = vunpack.c.l.b16 %v1290
    %v1426 = vunpack.c.l.b16 %v1291
    %v1427 = vpack.c.b16 %v1364, %v1363
    %v1428 = vpack.c.b16 %v1366, %v1365
    %v1429 = vpack.c.b16 %v1368, %v1367
    %v1430 = vpack.c.b16 %v1370, %v1369
    %v1431 = vpack.c.b16 %v1372, %v1371
    %v1432 = vpack.c.b16 %v1374, %v1373
    %v1433 = vpack.c.b16 %v1376, %v1375
    %v1434 = vpack.c.b16 %v1378, %v1377
    %v1435 = vpack.c.b16 %v1380, %v1379
    %v1436 = vpack.c.b16 %v1382, %v1381
    %v1437 = vpack.c.b16 %v1384, %v1383
    %v1438 = vpack.c.b16 %v1386, %v1385
    %v1439 = vpack.c.b16 %v1388, %v1387
    %v1440 = vpack.c.b16 %v1390, %v1389
    %v1441 = vpack.c.b16 %v1392, %v1391
    %v1442 = vpack.c.b16 %v1394, %v1393
    %v1443 = vpack.c.b16 %v1396, %v1395
    %v1444 = vpack.c.b16 %v1398, %v1397
    %v1445 = vpack.c.b16 %v1400, %v1399
    %v1446 = vpack.c.b16 %v1402, %v1401
    %v1447 = vpack.c.b16 %v1404, %v1403
    %v1448 = vpack.c.b16 %v1406, %v1405
    %v1449 = vpack.c.b16 %v1408, %v1407
    %v1450 = vpack.c.b16 %v1410, %v1409
    %v1451 = vpack.c.b16 %v1412, %v1411
    %v1452 = vpack.c.b16 %v1414, %v1413
    %v1453 = vpack.c.b16 %v1416, %v1415
    %v1454 = vpack.c.b16 %v1418, %v1417
    %v1455 = vpack.c.b16 %v1420, %v1419
    %v1456 = vpack.c.b16 %v1422, %v1421
    %v1457 = vpack.c.b16 %v1424, %v1423
    %v1458 = vpack.c.b16 %v1426, %v1425
    %1491 = vmatprep.subr.bf16.mxu0 0
    %1492 = vmatpush1.bf16.msra.mxu0 %v1434
    %1493 = vmatprep.subr.bf16.mxu0 0
    %1494 = vmatpush1.bf16.msra.mxu0 %v1433
    %1495 = vmatprep.subr.bf16.mxu0 0
    %1496 = vmatpush1.bf16.msra.mxu0 %v1432
    %1497 = vmatprep.subr.bf16.mxu0 0
    %1498 = vmatpush1.bf16.msra.mxu0 %v1431
    %1499 = vmatprep.subr.bf16.mxu0 0
    %1500 = vmatpush1.bf16.msra.mxu0 %v1430
    %1501 = vmatprep.subr.bf16.mxu0 0
    %1502 = vmatpush1.bf16.msra.mxu0 %v1429
    %1503 = vmatprep.subr.bf16.mxu0 0
    %1504 = vmatpush1.bf16.msra.mxu0 %v1428
    %1505 = vmatprep.subr.bf16.mxu0 0
    %1506 = vmatpush1.bf16.msra.mxu0 %v1427
    %1507 = vmatprep.subr.bf16.mxu0 0
    %1508 = vmatpush2.bf16.msra.mxu0 %v1442
    %1509 = vmatprep.subr.bf16.mxu0 0
    %1510 = vmatpush2.bf16.msra.mxu0 %v1441
    %1511 = vmatprep.subr.bf16.mxu0 0
    %1512 = vmatpush2.bf16.msra.mxu0 %v1440
    %1513 = vmatprep.subr.bf16.mxu0 0
    %1514 = vmatpush2.bf16.msra.mxu0 %v1439
    %1515 = vmatprep.subr.bf16.mxu0 0
    %1516 = vmatpush2.bf16.msra.mxu0 %v1438
    %1517 = vmatprep.subr.bf16.mxu0 0
    %1518 = vmatpush2.bf16.msra.mxu0 %v1437
    %1519 = vmatprep.subr.bf16.mxu0 0
    %1520 = vmatpush2.bf16.msra.mxu0 %v1436
    %1521 = vmatprep.subr.bf16.mxu0 0
    %1522 = vmatpush2.bf16.msra.mxu0 %v1435
    %1523 = vmatprep.mubr.bf16.mxu0 %v1165
    %1524 = vmatmul.mubr.bf16.gmra.mxu0 %v1164
    %v1525 = vpop.f32.mrf.mxu0
    %v1526 = vadd.f32 %v1297, %v1525
    %v1527 = vpop.f32.mrf.mxu0
    %v1528 = vpop.f32.mrf.mxu0
    %v1529 = vadd.f32 %v1297, %v1528
    %v1530 = vpop.f32.mrf.mxu0
    %1531 = vmatprep.mubr.bf16.mxu0 %v1169
    %1532 = vmatmul.mubr.bf16.gmra.mxu0 %v1168
    %v1533 = vpop.f32.mrf.mxu0
    %v1534 = vadd.f32 %v1297, %v1533
    %v1535 = vpop.f32.mrf.mxu0
    %v1536 = vpop.f32.mrf.mxu0
    %v1537 = vadd.f32 %v1297, %v1536
    %v1538 = vpop.f32.mrf.mxu0
    %1539 = vmatprep.mubr.bf16.mxu0 %v1173
    %1540 = vmatmul.mubr.bf16.gmra.mxu0 %v1172
    %v1541 = vpop.f32.mrf.mxu0
    %v1542 = vadd.f32 %v1297, %v1541
    %v1543 = vpop.f32.mrf.mxu0
    %v1544 = vpop.f32.mrf.mxu0
    %v1545 = vadd.f32 %v1297, %v1544
    %v1546 = vpop.f32.mrf.mxu0
    %1547 = vmatprep.mubr.bf16.mxu0 %v1177
    %1548 = vmatmul.mubr.bf16.gmra.mxu0 %v1176
    %v1549 = vpop.f32.mrf.mxu0
    %v1550 = vadd.f32 %v1297, %v1549
    %v1551 = vpop.f32.mrf.mxu0
    %v1552 = vpop.f32.mrf.mxu0
    %v1553 = vadd.f32 %v1297, %v1552
    %v1554 = vpop.f32.mrf.mxu0
    %1555 = vmatprep.mubr.bf16.mxu0 %v1181
    %1556 = vmatmul.mubr.bf16.gmra.mxu0 %v1180
    %v1557 = vpop.f32.mrf.mxu0
    %v1558 = vadd.f32 %v1297, %v1557
    %v1559 = vpop.f32.mrf.mxu0
    %v1560 = vpop.f32.mrf.mxu0
    %v1561 = vadd.f32 %v1297, %v1560
    %v1562 = vpop.f32.mrf.mxu0
    %1563 = vmatprep.mubr.bf16.mxu0 %v1185
    %1564 = vmatmul.mubr.bf16.gmra.mxu0 %v1184
    %v1565 = vpop.f32.mrf.mxu0
    %v1566 = vadd.f32 %v1297, %v1565
    %v1567 = vpop.f32.mrf.mxu0
    %v1568 = vpop.f32.mrf.mxu0
    %v1569 = vadd.f32 %v1297, %v1568
    %v1570 = vpop.f32.mrf.mxu0
    %1571 = vmatprep.mubr.bf16.mxu0 %v1189
    %1572 = vmatmul.mubr.bf16.gmra.mxu0 %v1188
    %v1573 = vpop.f32.mrf.mxu0
    %v1574 = vadd.f32 %v1297, %v1573
    %v1575 = vpop.f32.mrf.mxu0
    %v1576 = vpop.f32.mrf.mxu0
    %v1577 = vadd.f32 %v1297, %v1576
    %v1578 = vpop.f32.mrf.mxu0
    %1579 = vmatprep.mubr.bf16.mxu0 %v1193
    %1580 = vmatmul.mubr.bf16.gmra.mxu0 %v1192
    %v1581 = vpop.f32.mrf.mxu0
    %v1582 = vadd.f32 %v1297, %v1581
    %v1583 = vpop.f32.mrf.mxu0
    %v1584 = vpop.f32.mrf.mxu0
    %v1585 = vadd.f32 %v1297, %v1584
    %v1586 = vpop.f32.mrf.mxu0
    %1587 = vmatprep.mubr.bf16.mxu0 %v1197
    %1588 = vmatmul.mubr.bf16.gmra.mxu0 %v1196
    %v1589 = vpop.f32.mrf.mxu0
    %v1590 = vadd.f32 %v1297, %v1589
    %v1591 = vpop.f32.mrf.mxu0
    %v1592 = vpop.f32.mrf.mxu0
    %v1593 = vadd.f32 %v1297, %v1592
    %v1594 = vpop.f32.mrf.mxu0
    %1595 = vmatprep.mubr.bf16.mxu0 %v1201
    %1596 = vmatmul.mubr.bf16.gmra.mxu0 %v1200
    %v1597 = vpop.f32.mrf.mxu0
    %v1598 = vadd.f32 %v1297, %v1597
    %v1599 = vpop.f32.mrf.mxu0
    %v1600 = vpop.f32.mrf.mxu0
    %v1601 = vadd.f32 %v1297, %v1600
    %v1602 = vpop.f32.mrf.mxu0
    %1603 = vmatprep.mubr.bf16.mxu0 %v1205
    %1604 = vmatmul.mubr.bf16.gmra.mxu0 %v1204
    %v1605 = vpop.f32.mrf.mxu0
    %v1606 = vadd.f32 %v1297, %v1605
    %v1607 = vpop.f32.mrf.mxu0
    %v1608 = vpop.f32.mrf.mxu0
    %v1609 = vadd.f32 %v1297, %v1608
    %v1610 = vpop.f32.mrf.mxu0
    %1611 = vmatprep.mubr.bf16.mxu0 %v1209
    %1612 = vmatmul.mubr.bf16.gmra.mxu0 %v1208
    %v1613 = vpop.f32.mrf.mxu0
    %v1614 = vadd.f32 %v1297, %v1613
    %v1615 = vpop.f32.mrf.mxu0
    %v1616 = vpop.f32.mrf.mxu0
    %v1617 = vadd.f32 %v1297, %v1616
    %v1618 = vpop.f32.mrf.mxu0
    %1619 = vmatprep.mubr.bf16.mxu0 %v1213
    %1620 = vmatmul.mubr.bf16.gmra.mxu0 %v1212
    %v1621 = vpop.f32.mrf.mxu0
    %v1622 = vadd.f32 %v1297, %v1621
    %v1623 = vpop.f32.mrf.mxu0
    %v1624 = vpop.f32.mrf.mxu0
    %v1625 = vadd.f32 %v1297, %v1624
    %v1626 = vpop.f32.mrf.mxu0
    %1627 = vmatprep.mubr.bf16.mxu0 %v1217
    %1628 = vmatmul.mubr.bf16.gmra.mxu0 %v1216
    %v1629 = vpop.f32.mrf.mxu0
    %v1630 = vadd.f32 %v1297, %v1629
    %v1631 = vpop.f32.mrf.mxu0
    %v1632 = vpop.f32.mrf.mxu0
    %v1633 = vadd.f32 %v1297, %v1632
    %v1634 = vpop.f32.mrf.mxu0
    %1635 = vmatprep.mubr.bf16.mxu0 %v1221
    %1636 = vmatmul.mubr.bf16.gmra.mxu0 %v1220
    %v1637 = vpop.f32.mrf.mxu0
    %v1638 = vadd.f32 %v1297, %v1637
    %v1639 = vpop.f32.mrf.mxu0
    %v1640 = vpop.f32.mrf.mxu0
    %v1641 = vadd.f32 %v1297, %v1640
    %v1642 = vpop.f32.mrf.mxu0
    %1643 = vmatprep.mubr.bf16.mxu0 %v1225
    %1644 = vmatmul.mubr.bf16.gmra.mxu0 %v1224
    %v1645 = vpop.f32.mrf.mxu0
    %v1646 = vadd.f32 %v1297, %v1645
    %v1647 = vpop.f32.mrf.mxu0
    %v1648 = vpop.f32.mrf.mxu0
    %v1649 = vadd.f32 %v1297, %v1648
    %v1650 = vpop.f32.mrf.mxu0
    %1651 = vdwg.mxu0
    %1652 = vmatprep.subr.bf16.mxu0 0
    %1653 = vmatpush1.bf16.msra.mxu0 %v1450
    %1654 = vmatprep.subr.bf16.mxu0 0
    %1655 = vmatpush1.bf16.msra.mxu0 %v1449
    %1656 = vmatprep.subr.bf16.mxu0 0
    %1657 = vmatpush1.bf16.msra.mxu0 %v1448
    %1658 = vmatprep.subr.bf16.mxu0 0
    %1659 = vmatpush1.bf16.msra.mxu0 %v1447
    %1660 = vmatprep.subr.bf16.mxu0 0
    %1661 = vmatpush1.bf16.msra.mxu0 %v1446
    %1662 = vmatprep.subr.bf16.mxu0 0
    %1663 = vmatpush1.bf16.msra.mxu0 %v1445
    %1664 = vmatprep.subr.bf16.mxu0 0
    %1665 = vmatpush1.bf16.msra.mxu0 %v1444
    %1666 = vmatprep.subr.bf16.mxu0 0
    %1667 = vmatpush1.bf16.msra.mxu0 %v1443
    %1668 = vmatprep.subr.bf16.mxu0 0
    %1669 = vmatpush2.bf16.msra.mxu0 %v1458
    %1670 = vmatprep.subr.bf16.mxu0 0
    %1671 = vmatpush2.bf16.msra.mxu0 %v1457
    %1672 = vmatprep.subr.bf16.mxu0 0
    %1673 = vmatpush2.bf16.msra.mxu0 %v1456
    %1674 = vmatprep.subr.bf16.mxu0 0
    %1675 = vmatpush2.bf16.msra.mxu0 %v1455
    %1676 = vmatprep.subr.bf16.mxu0 0
    %1677 = vmatpush2.bf16.msra.mxu0 %v1454
    %1678 = vmatprep.subr.bf16.mxu0 0
    %1679 = vmatpush2.bf16.msra.mxu0 %v1453
    %1680 = vmatprep.subr.bf16.mxu0 0
    %1681 = vmatpush2.bf16.msra.mxu0 %v1452
    %1682 = vmatprep.subr.bf16.mxu0 0
    %1683 = vmatpush2.bf16.msra.mxu0 %v1451
    %1684 = vmatprep.mubr.bf16.mxu0 %v1167
    %1685 = vmatmul.mubr.bf16.gmra.mxu0 %v1166
    %v1686 = vpop.f32.mrf.mxu0
    %v1687 = vadd.f32 %v1526, %v1686
    %v1688 = vpop.f32.mrf.mxu0
    %v1689 = vpop.f32.mrf.mxu0
    %v1690 = vadd.f32 %v1529, %v1689
    %v1691 = vpop.f32.mrf.mxu0
    %1692 = vmatprep.mubr.bf16.mxu0 %v1171
    %1693 = vmatmul.mubr.bf16.gmra.mxu0 %v1170
    %v1694 = vpop.f32.mrf.mxu0
    %v1695 = vadd.f32 %v1534, %v1694
    %v1696 = vpop.f32.mrf.mxu0
    %v1697 = vpop.f32.mrf.mxu0
    %v1698 = vadd.f32 %v1537, %v1697
    %v1699 = vpop.f32.mrf.mxu0
    %1700 = vmatprep.mubr.bf16.mxu0 %v1175
    %1701 = vmatmul.mubr.bf16.gmra.mxu0 %v1174
    %v1702 = vpop.f32.mrf.mxu0
    %v1703 = vadd.f32 %v1542, %v1702
    %v1704 = vpop.f32.mrf.mxu0
    %v1705 = vpop.f32.mrf.mxu0
    %v1706 = vadd.f32 %v1545, %v1705
    %v1707 = vpop.f32.mrf.mxu0
    %1708 = vmatprep.mubr.bf16.mxu0 %v1179
    %1709 = vmatmul.mubr.bf16.gmra.mxu0 %v1178
    %v1710 = vpop.f32.mrf.mxu0
    %v1711 = vadd.f32 %v1550, %v1710
    %v1712 = vpop.f32.mrf.mxu0
    %v1713 = vpop.f32.mrf.mxu0
    %v1714 = vadd.f32 %v1553, %v1713
    %v1715 = vpop.f32.mrf.mxu0
    %1716 = vmatprep.mubr.bf16.mxu0 %v1183
    %1717 = vmatmul.mubr.bf16.gmra.mxu0 %v1182
    %v1718 = vpop.f32.mrf.mxu0
    %v1719 = vadd.f32 %v1558, %v1718
    %v1720 = vpop.f32.mrf.mxu0
    %v1721 = vpop.f32.mrf.mxu0
    %v1722 = vadd.f32 %v1561, %v1721
    %v1723 = vpop.f32.mrf.mxu0
    %1724 = vmatprep.mubr.bf16.mxu0 %v1187
    %1725 = vmatmul.mubr.bf16.gmra.mxu0 %v1186
    %v1726 = vpop.f32.mrf.mxu0
    %v1727 = vadd.f32 %v1566, %v1726
    %v1728 = vpop.f32.mrf.mxu0
    %v1729 = vpop.f32.mrf.mxu0
    %v1730 = vadd.f32 %v1569, %v1729
    %v1731 = vpop.f32.mrf.mxu0
    %1732 = vmatprep.mubr.bf16.mxu0 %v1191
    %1733 = vmatmul.mubr.bf16.gmra.mxu0 %v1190
    %v1734 = vpop.f32.mrf.mxu0
    %v1735 = vadd.f32 %v1574, %v1734
    %v1736 = vpop.f32.mrf.mxu0
    %v1737 = vpop.f32.mrf.mxu0
    %v1738 = vadd.f32 %v1577, %v1737
    %v1739 = vpop.f32.mrf.mxu0
    %1740 = vmatprep.mubr.bf16.mxu0 %v1195
    %1741 = vmatmul.mubr.bf16.gmra.mxu0 %v1194
    %v1742 = vpop.f32.mrf.mxu0
    %v1743 = vadd.f32 %v1582, %v1742
    %v1744 = vpop.f32.mrf.mxu0
    %v1745 = vpop.f32.mrf.mxu0
    %v1746 = vadd.f32 %v1585, %v1745
    %v1747 = vpop.f32.mrf.mxu0
    %1748 = vmatprep.mubr.bf16.mxu0 %v1199
    %1749 = vmatmul.mubr.bf16.gmra.mxu0 %v1198
    %v1750 = vpop.f32.mrf.mxu0
    %v1751 = vadd.f32 %v1590, %v1750
    %v1752 = vpop.f32.mrf.mxu0
    %v1753 = vpop.f32.mrf.mxu0
    %v1754 = vadd.f32 %v1593, %v1753
    %v1755 = vpop.f32.mrf.mxu0
    %1756 = vmatprep.mubr.bf16.mxu0 %v1203
    %1757 = vmatmul.mubr.bf16.gmra.mxu0 %v1202
    %v1758 = vpop.f32.mrf.mxu0
    %v1759 = vadd.f32 %v1598, %v1758
    %v1760 = vpop.f32.mrf.mxu0
    %v1761 = vpop.f32.mrf.mxu0
    %v1762 = vadd.f32 %v1601, %v1761
    %v1763 = vpop.f32.mrf.mxu0
    %1764 = vmatprep.mubr.bf16.mxu0 %v1207
    %1765 = vmatmul.mubr.bf16.gmra.mxu0 %v1206
    %v1766 = vpop.f32.mrf.mxu0
    %v1767 = vadd.f32 %v1606, %v1766
    %v1768 = vpop.f32.mrf.mxu0
    %v1769 = vpop.f32.mrf.mxu0
    %v1770 = vadd.f32 %v1609, %v1769
    %v1771 = vpop.f32.mrf.mxu0
    %1772 = vmatprep.mubr.bf16.mxu0 %v1211
    %1773 = vmatmul.mubr.bf16.gmra.mxu0 %v1210
    %v1774 = vpop.f32.mrf.mxu0
    %v1775 = vadd.f32 %v1614, %v1774
    %v1776 = vpop.f32.mrf.mxu0
    %v1777 = vpop.f32.mrf.mxu0
    %v1778 = vadd.f32 %v1617, %v1777
    %v1779 = vpop.f32.mrf.mxu0
    %1780 = vmatprep.mubr.bf16.mxu0 %v1215
    %1781 = vmatmul.mubr.bf16.gmra.mxu0 %v1214
    %v1782 = vpop.f32.mrf.mxu0
    %v1783 = vadd.f32 %v1622, %v1782
    %v1784 = vpop.f32.mrf.mxu0
    %v1785 = vpop.f32.mrf.mxu0
    %v1786 = vadd.f32 %v1625, %v1785
    %v1787 = vpop.f32.mrf.mxu0
    %1788 = vmatprep.mubr.bf16.mxu0 %v1219
    %1789 = vmatmul.mubr.bf16.gmra.mxu0 %v1218
    %v1790 = vpop.f32.mrf.mxu0
    %v1791 = vadd.f32 %v1630, %v1790
    %v1792 = vpop.f32.mrf.mxu0
    %v1793 = vpop.f32.mrf.mxu0
    %v1794 = vadd.f32 %v1633, %v1793
    %v1795 = vpop.f32.mrf.mxu0
    %1796 = vmatprep.mubr.bf16.mxu0 %v1223
    %1797 = vmatmul.mubr.bf16.gmra.mxu0 %v1222
    %v1798 = vpop.f32.mrf.mxu0
    %v1799 = vadd.f32 %v1638, %v1798
    %v1800 = vpop.f32.mrf.mxu0
    %v1801 = vpop.f32.mrf.mxu0
    %v1802 = vadd.f32 %v1641, %v1801
    %v1803 = vpop.f32.mrf.mxu0
    %1804 = vmatprep.mubr.bf16.mxu0 %v1227
    %1805 = vmatmul.mubr.bf16.gmra.mxu0 %v1226
    %v1806 = vpop.f32.mrf.mxu0
    %v1807 = vadd.f32 %v1646, %v1806
    %v1808 = vpop.f32.mrf.mxu0
    %v1809 = vpop.f32.mrf.mxu0
    %v1810 = vadd.f32 %v1649, %v1809
    %v1811 = vpop.f32.mrf.mxu0
    %1812 = vdwg.mxu0
    %v1813 = vtanh.pop %v1687
    %v1814 = vtanh.pop %v1690
    %v1815 = vtanh.pop %v1695
    %v1816 = vtanh.pop %v1698
    %v1817 = vtanh.pop %v1703
    %v1818 = vtanh.pop %v1706
    %v1819 = vtanh.pop %v1711
    %v1820 = vtanh.pop %v1714
    %v1821 = vtanh.pop %v1719
    %v1822 = vtanh.pop %v1722
    %v1823 = vtanh.pop %v1727
    %v1824 = vtanh.pop %v1730
    %v1825 = vtanh.pop %v1735
    %v1826 = vtanh.pop %v1738
    %v1827 = vtanh.pop %v1743
    %v1828 = vtanh.pop %v1746
    %v1829 = vtanh.pop %v1751
    %v1830 = vtanh.pop %v1754
    %v1831 = vtanh.pop %v1759
    %v1832 = vtanh.pop %v1762
    %v1833 = vtanh.pop %v1767
    %v1834 = vtanh.pop %v1770
    %v1835 = vtanh.pop %v1775
    %v1836 = vtanh.pop %v1778
    %v1837 = vtanh.pop %v1783
    %v1838 = vtanh.pop %v1786
    %v1839 = vtanh.pop %v1791
    %v1840 = vtanh.pop %v1794
    %v1841 = vtanh.pop %v1799
    %v1842 = vtanh.pop %v1802
    %v1843 = vtanh.pop %v1807
    %v1844 = vtanh.pop %v1810
    %v1845 = vpack.c.bf16 %v1814, %v1813
    %v1846 = vpack.c.bf16 %v1816, %v1815
    %v1847 = vpack.c.bf16 %v1818, %v1817
    %v1848 = vpack.c.bf16 %v1820, %v1819
    %v1849 = vpack.c.bf16 %v1822, %v1821
    %v1850 = vpack.c.bf16 %v1824, %v1823
    %v1851 = vpack.c.bf16 %v1826, %v1825
    %v1852 = vpack.c.bf16 %v1828, %v1827
    %v1853 = vpack.c.bf16 %v1830, %v1829
    %v1854 = vpack.c.bf16 %v1832, %v1831
    %v1855 = vpack.c.bf16 %v1834, %v1833
    %v1856 = vpack.c.bf16 %v1836, %v1835
    %v1857 = vpack.c.bf16 %v1838, %v1837
    %v1858 = vpack.c.bf16 %v1840, %v1839
    %v1859 = vpack.c.bf16 %v1842, %v1841
    %v1860 = vpack.c.bf16 %v1844, %v1843
    %v1861 = vld [vmem:[%s6] sm:$0xf]
    %v1862 = vld [vmem:[%s6 + $0x4] sm:$0xf]
    %v1863 = vld [vmem:[%s6 + $0x8] sm:$0xf]
    %v1864 = vld [vmem:[%s6 + $0xc] sm:$0xf]
    %v1865 = vld [vmem:[%s6 + $0x10] sm:$0xf]
    %v1866 = vld [vmem:[%s6 + $0x14] sm:$0xf]
    %v1867 = vld [vmem:[%s6 + $0x18] sm:$0xf]
    %v1868 = vld [vmem:[%s6 + $0x1c] sm:$0xf]
    %v1869 = vld [vmem:[%s6 + $0x20] sm:$0xf]
    %v1870 = vld [vmem:[%s6 + $0x24] sm:$0xf]
    %v1871 = vld [vmem:[%s6 + $0x28] sm:$0xf]
    %v1872 = vld [vmem:[%s6 + $0x2c] sm:$0xf]
    %v1873 = vld [vmem:[%s6 + $0x30] sm:$0xf]
    %v1874 = vld [vmem:[%s6 + $0x34] sm:$0xf]
    %v1875 = vld [vmem:[%s6 + $0x38] sm:$0xf]
    %v1876 = vld [vmem:[%s6 + $0x3c] sm:$0xf]
    %v1877 = vld [vmem:[%s7] sm:$0x1]
    %v1879 = vlaneseq
    %v1880 = vshrl.u32 %v1879, 7
    %v1881 = vsub.s32 0, %v1880
    %v1882 = vrot.slane %v1877, %v1881
    %v1900 = vunpack.c.l.b16 %v1861
    %v1901 = vunpack.c.l.b16 %v1862
    %v1902 = vunpack.c.l.b16 %v1863
    %v1903 = vunpack.c.l.b16 %v1864
    %v1904 = vunpack.c.l.b16 %v1865
    %v1905 = vunpack.c.l.b16 %v1866
    %v1906 = vunpack.c.l.b16 %v1867
    %v1907 = vunpack.c.l.b16 %v1868
    %v1908 = vunpack.c.l.b16 %v1869
    %v1909 = vunpack.c.l.b16 %v1870
    %v1910 = vunpack.c.l.b16 %v1871
    %v1911 = vunpack.c.l.b16 %v1872
    %v1912 = vunpack.c.l.b16 %v1873
    %v1913 = vunpack.c.l.b16 %v1874
    %v1914 = vunpack.c.l.b16 %v1875
    %v1915 = vunpack.c.l.b16 %v1876
    %v1916 = vpack.c.b16 %v1901, %v1900
    %v1917 = vpack.c.b16 %v1903, %v1902
    %v1918 = vpack.c.b16 %v1905, %v1904
    %v1919 = vpack.c.b16 %v1907, %v1906
    %v1920 = vpack.c.b16 %v1909, %v1908
    %v1921 = vpack.c.b16 %v1911, %v1910
    %v1922 = vpack.c.b16 %v1913, %v1912
    %v1923 = vpack.c.b16 %v1915, %v1914
    %1932 = vmatprep.subr.bf16.mxu0 0
    %1933 = vmatpush1.bf16.msra.mxu0 %v1923
    %1934 = vmatprep.subr.bf16.mxu0 0
    %1935 = vmatpush1.bf16.msra.mxu0 %v1922
    %1936 = vmatprep.subr.bf16.mxu0 0
    %1937 = vmatpush1.bf16.msra.mxu0 %v1921
    %1938 = vmatprep.subr.bf16.mxu0 0
    %1939 = vmatpush1.bf16.msra.mxu0 %v1920
    %1940 = vmatprep.subr.bf16.mxu0 0
    %1941 = vmatpush1.bf16.msra.mxu0 %v1919
    %1942 = vmatprep.subr.bf16.mxu0 0
    %1943 = vmatpush1.bf16.msra.mxu0 %v1918
    %1944 = vmatprep.subr.bf16.mxu0 0
    %1945 = vmatpush1.bf16.msra.mxu0 %v1917
    %1946 = vmatprep.subr.bf16.mxu0 0
    %1947 = vmatpush1.bf16.msra.mxu0 %v1916
    %1948 = vmatprep.subr.bf16.mxu0 0
    %1949 = vmatpush2.bf16.msra.mxu0 0
    %1950 = vmatprep.subr.bf16.mxu0 0
    %1951 = vmatpush2.bf16.msra.mxu0 0
    %1952 = vmatprep.subr.bf16.mxu0 0
    %1953 = vmatpush2.bf16.msra.mxu0 0
    %1954 = vmatprep.subr.bf16.mxu0 0
    %1955 = vmatpush2.bf16.msra.mxu0 0
    %1956 = vmatprep.subr.bf16.mxu0 0
    %1957 = vmatpush2.bf16.msra.mxu0 0
    %1958 = vmatprep.subr.bf16.mxu0 0
    %1959 = vmatpush2.bf16.msra.mxu0 0
    %1960 = vmatprep.subr.bf16.mxu0 0
    %1961 = vmatpush2.bf16.msra.mxu0 0
    %1962 = vmatprep.subr.bf16.mxu0 0
    %1963 = vmatpush2.bf16.msra.mxu0 0
    %1964 = vmatprep.mubr.bf16.mxu0 0
    %1965 = vmatmul.mubr.bf16.gmra.mxu0 %v1845
    %v1966 = vpop.f32.mrf.mxu0
    %v1967 = vadd.f32 %v1882, %v1966
    %v1968 = vpop.f32.mrf.mxu0
    %v1969 = vpop.f32.mrf.mxu0
    %v1970 = vadd.f32 %v1882, %v1969
    %v1971 = vpop.f32.mrf.mxu0
    %1972 = vmatprep.mubr.bf16.mxu0 0
    %1973 = vmatmul.mubr.bf16.gmra.mxu0 %v1846
    %v1974 = vpop.f32.mrf.mxu0
    %v1975 = vadd.f32 %v1882, %v1974
    %v1976 = vpop.f32.mrf.mxu0
    %v1977 = vpop.f32.mrf.mxu0
    %v1978 = vadd.f32 %v1882, %v1977
    %v1979 = vpop.f32.mrf.mxu0
    %1980 = vmatprep.mubr.bf16.mxu0 0
    %1981 = vmatmul.mubr.bf16.gmra.mxu0 %v1847
    %v1982 = vpop.f32.mrf.mxu0
    %v1983 = vadd.f32 %v1882, %v1982
    %v1984 = vpop.f32.mrf.mxu0
    %v1985 = vpop.f32.mrf.mxu0
    %v1986 = vadd.f32 %v1882, %v1985
    %v1987 = vpop.f32.mrf.mxu0
    %1988 = vmatprep.mubr.bf16.mxu0 0
    %1989 = vmatmul.mubr.bf16.gmra.mxu0 %v1848
    %v1990 = vpop.f32.mrf.mxu0
    %v1991 = vadd.f32 %v1882, %v1990
    %v1992 = vpop.f32.mrf.mxu0
    %v1993 = vpop.f32.mrf.mxu0
    %v1994 = vadd.f32 %v1882, %v1993
    %v1995 = vpop.f32.mrf.mxu0
    %1996 = vmatprep.mubr.bf16.mxu0 0
    %1997 = vmatmul.mubr.bf16.gmra.mxu0 %v1849
    %v1998 = vpop.f32.mrf.mxu0
    %v1999 = vadd.f32 %v1882, %v1998
    %v2000 = vpop.f32.mrf.mxu0
    %v2001 = vpop.f32.mrf.mxu0
    %v2002 = vadd.f32 %v1882, %v2001
    %v2003 = vpop.f32.mrf.mxu0
    %2004 = vmatprep.mubr.bf16.mxu0 0
    %2005 = vmatmul.mubr.bf16.gmra.mxu0 %v1850
    %v2006 = vpop.f32.mrf.mxu0
    %v2007 = vadd.f32 %v1882, %v2006
    %v2008 = vpop.f32.mrf.mxu0
    %v2009 = vpop.f32.mrf.mxu0
    %v2010 = vadd.f32 %v1882, %v2009
    %v2011 = vpop.f32.mrf.mxu0
    %2012 = vmatprep.mubr.bf16.mxu0 0
    %2013 = vmatmul.mubr.bf16.gmra.mxu0 %v1851
    %v2014 = vpop.f32.mrf.mxu0
    %v2015 = vadd.f32 %v1882, %v2014
    %v2016 = vpop.f32.mrf.mxu0
    %v2017 = vpop.f32.mrf.mxu0
    %v2018 = vadd.f32 %v1882, %v2017
    %v2019 = vpop.f32.mrf.mxu0
    %2020 = vmatprep.mubr.bf16.mxu0 0
    %2021 = vmatmul.mubr.bf16.gmra.mxu0 %v1852
    %v2022 = vpop.f32.mrf.mxu0
    %v2023 = vadd.f32 %v1882, %v2022
    %v2024 = vpop.f32.mrf.mxu0
    %v2025 = vpop.f32.mrf.mxu0
    %v2026 = vadd.f32 %v1882, %v2025
    %v2027 = vpop.f32.mrf.mxu0
    %2028 = vmatprep.mubr.bf16.mxu0 0
    %2029 = vmatmul.mubr.bf16.gmra.mxu0 %v1853
    %v2030 = vpop.f32.mrf.mxu0
    %v2031 = vadd.f32 %v1882, %v2030
    %v2032 = vpop.f32.mrf.mxu0
    %v2033 = vpop.f32.mrf.mxu0
    %v2034 = vadd.f32 %v1882, %v2033
    %v2035 = vpop.f32.mrf.mxu0
    %2036 = vmatprep.mubr.bf16.mxu0 0
    %2037 = vmatmul.mubr.bf16.gmra.mxu0 %v1854
    %v2038 = vpop.f32.mrf.mxu0
    %v2039 = vadd.f32 %v1882, %v2038
    %v2040 = vpop.f32.mrf.mxu0
    %v2041 = vpop.f32.mrf.mxu0
    %v2042 = vadd.f32 %v1882, %v2041
    %v2043 = vpop.f32.mrf.mxu0
    %2044 = vmatprep.mubr.bf16.mxu0 0
    %2045 = vmatmul.mubr.bf16.gmra.mxu0 %v1855
    %v2046 = vpop.f32.mrf.mxu0
    %v2047 = vadd.f32 %v1882, %v2046
    %v2048 = vpop.f32.mrf.mxu0
    %v2049 = vpop.f32.mrf.mxu0
    %v2050 = vadd.f32 %v1882, %v2049
    %v2051 = vpop.f32.mrf.mxu0
    %2052 = vmatprep.mubr.bf16.mxu0 0
    %2053 = vmatmul.mubr.bf16.gmra.mxu0 %v1856
    %v2054 = vpop.f32.mrf.mxu0
    %v2055 = vadd.f32 %v1882, %v2054
    %v2056 = vpop.f32.mrf.mxu0
    %v2057 = vpop.f32.mrf.mxu0
    %v2058 = vadd.f32 %v1882, %v2057
    %v2059 = vpop.f32.mrf.mxu0
    %2060 = vmatprep.mubr.bf16.mxu0 0
    %2061 = vmatmul.mubr.bf16.gmra.mxu0 %v1857
    %v2062 = vpop.f32.mrf.mxu0
    %v2063 = vadd.f32 %v1882, %v2062
    %v2064 = vpop.f32.mrf.mxu0
    %v2065 = vpop.f32.mrf.mxu0
    %v2066 = vadd.f32 %v1882, %v2065
    %v2067 = vpop.f32.mrf.mxu0
    %2068 = vmatprep.mubr.bf16.mxu0 0
    %2069 = vmatmul.mubr.bf16.gmra.mxu0 %v1858
    %v2070 = vpop.f32.mrf.mxu0
    %v2071 = vadd.f32 %v1882, %v2070
    %v2072 = vpop.f32.mrf.mxu0
    %v2073 = vpop.f32.mrf.mxu0
    %v2074 = vadd.f32 %v1882, %v2073
    %v2075 = vpop.f32.mrf.mxu0
    %2076 = vmatprep.mubr.bf16.mxu0 0
    %2077 = vmatmul.mubr.bf16.gmra.mxu0 %v1859
    %v2078 = vpop.f32.mrf.mxu0
    %v2079 = vadd.f32 %v1882, %v2078
    %v2080 = vpop.f32.mrf.mxu0
    %v2081 = vpop.f32.mrf.mxu0
    %v2082 = vadd.f32 %v1882, %v2081
    %v2083 = vpop.f32.mrf.mxu0
    %2084 = vmatprep.mubr.bf16.mxu0 0
    %2085 = vmatmul.mubr.bf16.gmra.mxu0 %v1860
    %v2086 = vpop.f32.mrf.mxu0
    %v2087 = vadd.f32 %v1882, %v2086
    %v2088 = vpop.f32.mrf.mxu0
    %v2089 = vpop.f32.mrf.mxu0
    %v2090 = vadd.f32 %v1882, %v2089
    %v2091 = vpop.f32.mrf.mxu0
    %2092 = vdwg.mxu0
    %v2093 = vmul.f32 %v1967, 0.5
    %v2094 = vmul.f32 %v1970, 0.5
    %v2095 = vmul.f32 %v1975, 0.5
    %v2096 = vmul.f32 %v1978, 0.5
    %v2097 = vmul.f32 %v1983, 0.5
    %v2098 = vmul.f32 %v1986, 0.5
    %v2099 = vmul.f32 %v1991, 0.5
    %v2100 = vmul.f32 %v1994, 0.5
    %v2101 = vmul.f32 %v1999, 0.5
    %v2102 = vmul.f32 %v2002, 0.5
    %v2103 = vmul.f32 %v2007, 0.5
    %v2104 = vmul.f32 %v2010, 0.5
    %v2105 = vmul.f32 %v2015, 0.5
    %v2106 = vmul.f32 %v2018, 0.5
    %v2107 = vmul.f32 %v2023, 0.5
    %v2108 = vmul.f32 %v2026, 0.5
    %v2109 = vmul.f32 %v2031, 0.5
    %v2110 = vmul.f32 %v2034, 0.5
    %v2111 = vmul.f32 %v2039, 0.5
    %v2112 = vmul.f32 %v2042, 0.5
    %v2113 = vmul.f32 %v2047, 0.5
    %v2114 = vmul.f32 %v2050, 0.5
    %v2115 = vmul.f32 %v2055, 0.5
    %v2116 = vmul.f32 %v2058, 0.5
    %v2117 = vmul.f32 %v2063, 0.5
    %v2118 = vmul.f32 %v2066, 0.5
    %v2119 = vmul.f32 %v2071, 0.5
    %v2120 = vmul.f32 %v2074, 0.5
    %v2121 = vmul.f32 %v2079, 0.5
    %v2122 = vmul.f32 %v2082, 0.5
    %v2123 = vmul.f32 %v2087, 0.5
    %v2124 = vmul.f32 %v2090, 0.5
    %v2125 = vtanh.pop %v2093
    %v2126 = vtanh.pop %v2094
    %v2127 = vtanh.pop %v2095
    %v2128 = vtanh.pop %v2096
    %v2129 = vtanh.pop %v2097
    %v2130 = vtanh.pop %v2098
    %v2131 = vtanh.pop %v2099
    %v2132 = vtanh.pop %v2100
    %v2133 = vtanh.pop %v2101
    %v2134 = vtanh.pop %v2102
    %v2135 = vtanh.pop %v2103
    %v2136 = vtanh.pop %v2104
    %v2137 = vtanh.pop %v2105
    %v2138 = vtanh.pop %v2106
    %v2139 = vtanh.pop %v2107
    %v2140 = vtanh.pop %v2108
    %v2141 = vtanh.pop %v2109
    %v2142 = vtanh.pop %v2110
    %v2143 = vtanh.pop %v2111
    %v2144 = vtanh.pop %v2112
    %v2145 = vtanh.pop %v2113
    %v2146 = vtanh.pop %v2114
    %v2147 = vtanh.pop %v2115
    %v2148 = vtanh.pop %v2116
    %v2149 = vtanh.pop %v2117
    %v2150 = vtanh.pop %v2118
    %v2151 = vtanh.pop %v2119
    %v2152 = vtanh.pop %v2120
    %v2153 = vtanh.pop %v2121
    %v2154 = vtanh.pop %v2122
    %v2155 = vtanh.pop %v2123
    %v2156 = vtanh.pop %v2124
    %v2157 = vmul.f32 %v2125, 0.5
    %v2158 = vmul.f32 %v2126, 0.5
    %v2159 = vmul.f32 %v2127, 0.5
    %v2160 = vmul.f32 %v2128, 0.5
    %v2161 = vmul.f32 %v2129, 0.5
    %v2162 = vmul.f32 %v2130, 0.5
    %v2163 = vmul.f32 %v2131, 0.5
    %v2164 = vmul.f32 %v2132, 0.5
    %v2165 = vmul.f32 %v2133, 0.5
    %v2166 = vmul.f32 %v2134, 0.5
    %v2167 = vmul.f32 %v2135, 0.5
    %v2168 = vmul.f32 %v2136, 0.5
    %v2169 = vmul.f32 %v2137, 0.5
    %v2170 = vmul.f32 %v2138, 0.5
    %v2171 = vmul.f32 %v2139, 0.5
    %v2172 = vmul.f32 %v2140, 0.5
    %v2173 = vmul.f32 %v2141, 0.5
    %v2174 = vmul.f32 %v2142, 0.5
    %v2175 = vmul.f32 %v2143, 0.5
    %v2176 = vmul.f32 %v2144, 0.5
    %v2177 = vmul.f32 %v2145, 0.5
    %v2178 = vmul.f32 %v2146, 0.5
    %v2179 = vmul.f32 %v2147, 0.5
    %v2180 = vmul.f32 %v2148, 0.5
    %v2181 = vmul.f32 %v2149, 0.5
    %v2182 = vmul.f32 %v2150, 0.5
    %v2183 = vmul.f32 %v2151, 0.5
    %v2184 = vmul.f32 %v2152, 0.5
    %v2185 = vmul.f32 %v2153, 0.5
    %v2186 = vmul.f32 %v2154, 0.5
    %v2187 = vmul.f32 %v2155, 0.5
    %v2188 = vmul.f32 %v2156, 0.5
    %v2189 = vadd.f32 %v2157, 0.5
    %v2190 = vadd.f32 %v2158, 0.5
    %v2191 = vadd.f32 %v2159, 0.5
    %v2192 = vadd.f32 %v2160, 0.5
    %v2193 = vadd.f32 %v2161, 0.5
    %v2194 = vadd.f32 %v2162, 0.5
    %v2195 = vadd.f32 %v2163, 0.5
    %v2196 = vadd.f32 %v2164, 0.5
    %v2197 = vadd.f32 %v2165, 0.5
    %v2198 = vadd.f32 %v2166, 0.5
    %v2199 = vadd.f32 %v2167, 0.5
    %v2200 = vadd.f32 %v2168, 0.5
    %v2201 = vadd.f32 %v2169, 0.5
    %v2202 = vadd.f32 %v2170, 0.5
    %v2203 = vadd.f32 %v2171, 0.5
    %v2204 = vadd.f32 %v2172, 0.5
    %v2205 = vadd.f32 %v2173, 0.5
    %v2206 = vadd.f32 %v2174, 0.5
    %v2207 = vadd.f32 %v2175, 0.5
    %v2208 = vadd.f32 %v2176, 0.5
    %v2209 = vadd.f32 %v2177, 0.5
    %v2210 = vadd.f32 %v2178, 0.5
    %v2211 = vadd.f32 %v2179, 0.5
    %v2212 = vadd.f32 %v2180, 0.5
    %v2213 = vadd.f32 %v2181, 0.5
    %v2214 = vadd.f32 %v2182, 0.5
    %v2215 = vadd.f32 %v2183, 0.5
    %v2216 = vadd.f32 %v2184, 0.5
    %v2217 = vadd.f32 %v2185, 0.5
    %v2218 = vadd.f32 %v2186, 0.5
    %v2219 = vadd.f32 %v2187, 0.5
    %v2220 = vadd.f32 %v2188, 0.5
    %v2221 = vpack.c.bf16 %v2190, %v2189
    %v2222 = vpack.c.bf16 %v2192, %v2191
    %v2223 = vpack.c.bf16 %v2194, %v2193
    %v2224 = vpack.c.bf16 %v2196, %v2195
    %v2225 = vpack.c.bf16 %v2198, %v2197
    %v2226 = vpack.c.bf16 %v2200, %v2199
    %v2227 = vpack.c.bf16 %v2202, %v2201
    %v2228 = vpack.c.bf16 %v2204, %v2203
    %v2229 = vpack.c.bf16 %v2206, %v2205
    %v2230 = vpack.c.bf16 %v2208, %v2207
    %v2231 = vpack.c.bf16 %v2210, %v2209
    %v2232 = vpack.c.bf16 %v2212, %v2211
    %v2233 = vpack.c.bf16 %v2214, %v2213
    %v2234 = vpack.c.bf16 %v2216, %v2215
    %v2235 = vpack.c.bf16 %v2218, %v2217
    %v2236 = vpack.c.bf16 %v2220, %v2219
    %v2237 = vld [vmem:[%s1] sm:$0xff]
    %v2238 = vld [vmem:[%s1 + $0x8] sm:$0xff]
    %v2239 = vld [vmem:[%s1 + $0x10] sm:$0xff]
    %v2240 = vld [vmem:[%s1 + $0x18] sm:$0xff]
    %v2241 = vld [vmem:[%s1 + $0x20] sm:$0xff]
    %v2242 = vld [vmem:[%s1 + $0x28] sm:$0xff]
    %v2243 = vld [vmem:[%s1 + $0x30] sm:$0xff]
    %v2244 = vld [vmem:[%s1 + $0x38] sm:$0xff]
    %v2245 = vld [vmem:[%s1 + $0x40] sm:$0xff]
    %v2246 = vld [vmem:[%s1 + $0x48] sm:$0xff]
    %v2247 = vld [vmem:[%s1 + $0x50] sm:$0xff]
    %v2248 = vld [vmem:[%s1 + $0x58] sm:$0xff]
    %v2249 = vld [vmem:[%s1 + $0x60] sm:$0xff]
    %v2250 = vld [vmem:[%s1 + $0x68] sm:$0xff]
    %v2251 = vld [vmem:[%s1 + $0x70] sm:$0xff]
    %v2252 = vld [vmem:[%s1 + $0x78] sm:$0xff]
    %v2253 = vld [vmem:[%s1 + $0x80] sm:$0xff]
    %v2254 = vld [vmem:[%s1 + $0x88] sm:$0xff]
    %v2255 = vld [vmem:[%s1 + $0x90] sm:$0xff]
    %v2256 = vld [vmem:[%s1 + $0x98] sm:$0xff]
    %v2257 = vld [vmem:[%s1 + $0xa0] sm:$0xff]
    %v2258 = vld [vmem:[%s1 + $0xa8] sm:$0xff]
    %v2259 = vld [vmem:[%s1 + $0xb0] sm:$0xff]
    %v2260 = vld [vmem:[%s1 + $0xb8] sm:$0xff]
    %v2261 = vld [vmem:[%s1 + $0xc0] sm:$0xff]
    %v2262 = vld [vmem:[%s1 + $0xc8] sm:$0xff]
    %v2263 = vld [vmem:[%s1 + $0xd0] sm:$0xff]
    %v2264 = vld [vmem:[%s1 + $0xd8] sm:$0xff]
    %v2265 = vld [vmem:[%s1 + $0xe0] sm:$0xff]
    %v2266 = vld [vmem:[%s1 + $0xe8] sm:$0xff]
    %v2267 = vld [vmem:[%s1 + $0xf0] sm:$0xff]
    %v2268 = vld [vmem:[%s1 + $0xf8] sm:$0xff]
    %v2269 = vld [vmem:[%s9] sm:$0x3]
    %2271 = vset.pattern.permute.xlu0 0
    %2272 = vperm.xlu0 %2271, %v2237
    %v2273 = vpop.permute.xlu0 %2272
    %2276 = vset.pattern.permute.xlu0 0
    %2277 = vperm.xlu0 %2276, %v2238
    %v2278 = vpop.permute.xlu0 %2277
    %2281 = vset.pattern.permute.xlu0 0
    %2282 = vperm.xlu0 %2281, %v2239
    %v2283 = vpop.permute.xlu0 %2282
    %2286 = vset.pattern.permute.xlu0 0
    %2287 = vperm.xlu0 %2286, %v2240
    %v2288 = vpop.permute.xlu0 %2287
    %2291 = vset.pattern.permute.xlu0 0
    %2292 = vperm.xlu0 %2291, %v2241
    %v2293 = vpop.permute.xlu0 %2292
    %2296 = vset.pattern.permute.xlu0 0
    %2297 = vperm.xlu0 %2296, %v2242
    %v2298 = vpop.permute.xlu0 %2297
    %2301 = vset.pattern.permute.xlu0 0
    %2302 = vperm.xlu0 %2301, %v2243
    %v2303 = vpop.permute.xlu0 %2302
    %2306 = vset.pattern.permute.xlu0 0
    %2307 = vperm.xlu0 %2306, %v2244
    %v2308 = vpop.permute.xlu0 %2307
    %2311 = vset.pattern.permute.xlu0 0
    %2312 = vperm.xlu0 %2311, %v2245
    %v2313 = vpop.permute.xlu0 %2312
    %2316 = vset.pattern.permute.xlu0 0
    %2317 = vperm.xlu0 %2316, %v2246
    %v2318 = vpop.permute.xlu0 %2317
    %2321 = vset.pattern.permute.xlu0 0
    %2322 = vperm.xlu0 %2321, %v2247
    %v2323 = vpop.permute.xlu0 %2322
    %2326 = vset.pattern.permute.xlu0 0
    %2327 = vperm.xlu0 %2326, %v2248
    %v2328 = vpop.permute.xlu0 %2327
    %2331 = vset.pattern.permute.xlu0 0
    %2332 = vperm.xlu0 %2331, %v2249
    %v2333 = vpop.permute.xlu0 %2332
    %2336 = vset.pattern.permute.xlu0 0
    %2337 = vperm.xlu0 %2336, %v2250
    %v2338 = vpop.permute.xlu0 %2337
    %2341 = vset.pattern.permute.xlu0 0
    %2342 = vperm.xlu0 %2341, %v2251
    %v2343 = vpop.permute.xlu0 %2342
    %2346 = vset.pattern.permute.xlu0 0
    %2347 = vperm.xlu0 %2346, %v2252
    %v2348 = vpop.permute.xlu0 %2347
    %2351 = vset.pattern.permute.xlu0 0
    %2352 = vperm.xlu0 %2351, %v2253
    %v2353 = vpop.permute.xlu0 %2352
    %2356 = vset.pattern.permute.xlu0 0
    %2357 = vperm.xlu0 %2356, %v2254
    %v2358 = vpop.permute.xlu0 %2357
    %2361 = vset.pattern.permute.xlu0 0
    %2362 = vperm.xlu0 %2361, %v2255
    %v2363 = vpop.permute.xlu0 %2362
    %2366 = vset.pattern.permute.xlu0 0
    %2367 = vperm.xlu0 %2366, %v2256
    %v2368 = vpop.permute.xlu0 %2367
    %2371 = vset.pattern.permute.xlu0 0
    %2372 = vperm.xlu0 %2371, %v2257
    %v2373 = vpop.permute.xlu0 %2372
    %2376 = vset.pattern.permute.xlu0 0
    %2377 = vperm.xlu0 %2376, %v2258
    %v2378 = vpop.permute.xlu0 %2377
    %2381 = vset.pattern.permute.xlu0 0
    %2382 = vperm.xlu0 %2381, %v2259
    %v2383 = vpop.permute.xlu0 %2382
    %2386 = vset.pattern.permute.xlu0 0
    %2387 = vperm.xlu0 %2386, %v2260
    %v2388 = vpop.permute.xlu0 %2387
    %2391 = vset.pattern.permute.xlu0 0
    %2392 = vperm.xlu0 %2391, %v2261
    %v2393 = vpop.permute.xlu0 %2392
    %2396 = vset.pattern.permute.xlu0 0
    %2397 = vperm.xlu0 %2396, %v2262
    %v2398 = vpop.permute.xlu0 %2397
    %2401 = vset.pattern.permute.xlu0 0
    %2402 = vperm.xlu0 %2401, %v2263
    %v2403 = vpop.permute.xlu0 %2402
    %2406 = vset.pattern.permute.xlu0 0
    %2407 = vperm.xlu0 %2406, %v2264
    %v2408 = vpop.permute.xlu0 %2407
    %2411 = vset.pattern.permute.xlu0 0
    %2412 = vperm.xlu0 %2411, %v2265
    %v2413 = vpop.permute.xlu0 %2412
    %2416 = vset.pattern.permute.xlu0 0
    %2417 = vperm.xlu0 %2416, %v2266
    %v2418 = vpop.permute.xlu0 %2417
    %2421 = vset.pattern.permute.xlu0 0
    %2422 = vperm.xlu0 %2421, %v2267
    %v2423 = vpop.permute.xlu0 %2422
    %2426 = vset.pattern.permute.xlu0 0
    %2427 = vperm.xlu0 %2426, %v2268
    %v2428 = vpop.permute.xlu0 %2427
    %v2430 = vlaneseq
    %v2431 = vshrl.u32 %v2430, 7
    %v2432 = vsub.s32 0, %v2431
    %v2433 = vrot.slane %v2269, %v2432
    %v2434 = vmul.f32 %v2273, %v2433
    %v2435 = vmul.f32 %v2278, %v2433
    %v2436 = vmul.f32 %v2283, %v2433
    %v2437 = vmul.f32 %v2288, %v2433
    %v2438 = vmul.f32 %v2293, %v2433
    %v2439 = vmul.f32 %v2298, %v2433
    %v2440 = vmul.f32 %v2303, %v2433
    %v2441 = vmul.f32 %v2308, %v2433
    %v2442 = vmul.f32 %v2313, %v2433
    %v2443 = vmul.f32 %v2318, %v2433
    %v2444 = vmul.f32 %v2323, %v2433
    %v2445 = vmul.f32 %v2328, %v2433
    %v2446 = vmul.f32 %v2333, %v2433
    %v2447 = vmul.f32 %v2338, %v2433
    %v2448 = vmul.f32 %v2343, %v2433
    %v2449 = vmul.f32 %v2348, %v2433
    %v2450 = vmul.f32 %v2353, %v2433
    %v2451 = vmul.f32 %v2358, %v2433
    %v2452 = vmul.f32 %v2363, %v2433
    %v2453 = vmul.f32 %v2368, %v2433
    %v2454 = vmul.f32 %v2373, %v2433
    %v2455 = vmul.f32 %v2378, %v2433
    %v2456 = vmul.f32 %v2383, %v2433
    %v2457 = vmul.f32 %v2388, %v2433
    %v2458 = vmul.f32 %v2393, %v2433
    %v2459 = vmul.f32 %v2398, %v2433
    %v2460 = vmul.f32 %v2403, %v2433
    %v2461 = vmul.f32 %v2408, %v2433
    %v2462 = vmul.f32 %v2413, %v2433
    %v2463 = vmul.f32 %v2418, %v2433
    %v2464 = vmul.f32 %v2423, %v2433
    %v2465 = vmul.f32 %v2428, %v2433
    %2466 = vset.pattern.permute.xlu0 1
    %2467 = vperm.xlu0 %2466, %v2237
    %v2468 = vpop.permute.xlu0 %2467
    %2470 = vset.pattern.permute.xlu0 1
    %2471 = vperm.xlu0 %2470, %v2238
    %v2472 = vpop.permute.xlu0 %2471
    %2474 = vset.pattern.permute.xlu0 1
    %2475 = vperm.xlu0 %2474, %v2239
    %v2476 = vpop.permute.xlu0 %2475
    %2478 = vset.pattern.permute.xlu0 1
    %2479 = vperm.xlu0 %2478, %v2240
    %v2480 = vpop.permute.xlu0 %2479
    %2482 = vset.pattern.permute.xlu0 1
    %2483 = vperm.xlu0 %2482, %v2241
    %v2484 = vpop.permute.xlu0 %2483
    %2486 = vset.pattern.permute.xlu0 1
    %2487 = vperm.xlu0 %2486, %v2242
    %v2488 = vpop.permute.xlu0 %2487
    %2490 = vset.pattern.permute.xlu0 1
    %2491 = vperm.xlu0 %2490, %v2243
    %v2492 = vpop.permute.xlu0 %2491
    %2494 = vset.pattern.permute.xlu0 1
    %2495 = vperm.xlu0 %2494, %v2244
    %v2496 = vpop.permute.xlu0 %2495
    %2498 = vset.pattern.permute.xlu0 1
    %2499 = vperm.xlu0 %2498, %v2245
    %v2500 = vpop.permute.xlu0 %2499
    %2502 = vset.pattern.permute.xlu0 1
    %2503 = vperm.xlu0 %2502, %v2246
    %v2504 = vpop.permute.xlu0 %2503
    %2506 = vset.pattern.permute.xlu0 1
    %2507 = vperm.xlu0 %2506, %v2247
    %v2508 = vpop.permute.xlu0 %2507
    %2510 = vset.pattern.permute.xlu0 1
    %2511 = vperm.xlu0 %2510, %v2248
    %v2512 = vpop.permute.xlu0 %2511
    %2514 = vset.pattern.permute.xlu0 1
    %2515 = vperm.xlu0 %2514, %v2249
    %v2516 = vpop.permute.xlu0 %2515
    %2518 = vset.pattern.permute.xlu0 1
    %2519 = vperm.xlu0 %2518, %v2250
    %v2520 = vpop.permute.xlu0 %2519
    %2522 = vset.pattern.permute.xlu0 1
    %2523 = vperm.xlu0 %2522, %v2251
    %v2524 = vpop.permute.xlu0 %2523
    %2526 = vset.pattern.permute.xlu0 1
    %2527 = vperm.xlu0 %2526, %v2252
    %v2528 = vpop.permute.xlu0 %2527
    %2530 = vset.pattern.permute.xlu0 1
    %2531 = vperm.xlu0 %2530, %v2253
    %v2532 = vpop.permute.xlu0 %2531
    %2534 = vset.pattern.permute.xlu0 1
    %2535 = vperm.xlu0 %2534, %v2254
    %v2536 = vpop.permute.xlu0 %2535
    %2538 = vset.pattern.permute.xlu0 1
    %2539 = vperm.xlu0 %2538, %v2255
    %v2540 = vpop.permute.xlu0 %2539
    %2542 = vset.pattern.permute.xlu0 1
    %2543 = vperm.xlu0 %2542, %v2256
    %v2544 = vpop.permute.xlu0 %2543
    %2546 = vset.pattern.permute.xlu0 1
    %2547 = vperm.xlu0 %2546, %v2257
    %v2548 = vpop.permute.xlu0 %2547
    %2550 = vset.pattern.permute.xlu0 1
    %2551 = vperm.xlu0 %2550, %v2258
    %v2552 = vpop.permute.xlu0 %2551
    %2554 = vset.pattern.permute.xlu0 1
    %2555 = vperm.xlu0 %2554, %v2259
    %v2556 = vpop.permute.xlu0 %2555
    %2558 = vset.pattern.permute.xlu0 1
    %2559 = vperm.xlu0 %2558, %v2260
    %v2560 = vpop.permute.xlu0 %2559
    %2562 = vset.pattern.permute.xlu0 1
    %2563 = vperm.xlu0 %2562, %v2261
    %v2564 = vpop.permute.xlu0 %2563
    %2566 = vset.pattern.permute.xlu0 1
    %2567 = vperm.xlu0 %2566, %v2262
    %v2568 = vpop.permute.xlu0 %2567
    %2570 = vset.pattern.permute.xlu0 1
    %2571 = vperm.xlu0 %2570, %v2263
    %v2572 = vpop.permute.xlu0 %2571
    %2574 = vset.pattern.permute.xlu0 1
    %2575 = vperm.xlu0 %2574, %v2264
    %v2576 = vpop.permute.xlu0 %2575
    %2578 = vset.pattern.permute.xlu0 1
    %2579 = vperm.xlu0 %2578, %v2265
    %v2580 = vpop.permute.xlu0 %2579
    %2582 = vset.pattern.permute.xlu0 1
    %2583 = vperm.xlu0 %2582, %v2266
    %v2584 = vpop.permute.xlu0 %2583
    %2586 = vset.pattern.permute.xlu0 1
    %2587 = vperm.xlu0 %2586, %v2267
    %v2588 = vpop.permute.xlu0 %2587
    %2590 = vset.pattern.permute.xlu0 1
    %2591 = vperm.xlu0 %2590, %v2268
    %v2592 = vpop.permute.xlu0 %2591
    %v2594 = vlaneseq
    %v2595 = vshrl.u32 %v2594, 7
    %v2596 = vsub.s32 1, %v2595
    %v2597 = vrot.slane %v2269, %v2596
    %v2598 = vmul.f32 %v2468, %v2597
    %v2599 = vmul.f32 %v2472, %v2597
    %v2600 = vmul.f32 %v2476, %v2597
    %v2601 = vmul.f32 %v2480, %v2597
    %v2602 = vmul.f32 %v2484, %v2597
    %v2603 = vmul.f32 %v2488, %v2597
    %v2604 = vmul.f32 %v2492, %v2597
    %v2605 = vmul.f32 %v2496, %v2597
    %v2606 = vmul.f32 %v2500, %v2597
    %v2607 = vmul.f32 %v2504, %v2597
    %v2608 = vmul.f32 %v2508, %v2597
    %v2609 = vmul.f32 %v2512, %v2597
    %v2610 = vmul.f32 %v2516, %v2597
    %v2611 = vmul.f32 %v2520, %v2597
    %v2612 = vmul.f32 %v2524, %v2597
    %v2613 = vmul.f32 %v2528, %v2597
    %v2614 = vmul.f32 %v2532, %v2597
    %v2615 = vmul.f32 %v2536, %v2597
    %v2616 = vmul.f32 %v2540, %v2597
    %v2617 = vmul.f32 %v2544, %v2597
    %v2618 = vmul.f32 %v2548, %v2597
    %v2619 = vmul.f32 %v2552, %v2597
    %v2620 = vmul.f32 %v2556, %v2597
    %v2621 = vmul.f32 %v2560, %v2597
    %v2622 = vmul.f32 %v2564, %v2597
    %v2623 = vmul.f32 %v2568, %v2597
    %v2624 = vmul.f32 %v2572, %v2597
    %v2625 = vmul.f32 %v2576, %v2597
    %v2626 = vmul.f32 %v2580, %v2597
    %v2627 = vmul.f32 %v2584, %v2597
    %v2628 = vmul.f32 %v2588, %v2597
    %v2629 = vmul.f32 %v2592, %v2597
    %v2630 = vadd.f32 %v2434, %v2598
    %v2631 = vadd.f32 %v2435, %v2599
    %v2632 = vadd.f32 %v2436, %v2600
    %v2633 = vadd.f32 %v2437, %v2601
    %v2634 = vadd.f32 %v2438, %v2602
    %v2635 = vadd.f32 %v2439, %v2603
    %v2636 = vadd.f32 %v2440, %v2604
    %v2637 = vadd.f32 %v2441, %v2605
    %v2638 = vadd.f32 %v2442, %v2606
    %v2639 = vadd.f32 %v2443, %v2607
    %v2640 = vadd.f32 %v2444, %v2608
    %v2641 = vadd.f32 %v2445, %v2609
    %v2642 = vadd.f32 %v2446, %v2610
    %v2643 = vadd.f32 %v2447, %v2611
    %v2644 = vadd.f32 %v2448, %v2612
    %v2645 = vadd.f32 %v2449, %v2613
    %v2646 = vadd.f32 %v2450, %v2614
    %v2647 = vadd.f32 %v2451, %v2615
    %v2648 = vadd.f32 %v2452, %v2616
    %v2649 = vadd.f32 %v2453, %v2617
    %v2650 = vadd.f32 %v2454, %v2618
    %v2651 = vadd.f32 %v2455, %v2619
    %v2652 = vadd.f32 %v2456, %v2620
    %v2653 = vadd.f32 %v2457, %v2621
    %v2654 = vadd.f32 %v2458, %v2622
    %v2655 = vadd.f32 %v2459, %v2623
    %v2656 = vadd.f32 %v2460, %v2624
    %v2657 = vadd.f32 %v2461, %v2625
    %v2658 = vadd.f32 %v2462, %v2626
    %v2659 = vadd.f32 %v2463, %v2627
    %v2660 = vadd.f32 %v2464, %v2628
    %v2661 = vadd.f32 %v2465, %v2629
    %v2662 = vld [vmem:[%s10] sm:$0x1]
    %v2664 = vlaneseq
    %v2665 = vshrl.u32 %v2664, 7
    %v2666 = vsub.s32 0, %v2665
    %v2667 = vrot.slane %v2662, %v2666
    %v2669 = vadd.f32 %v2630, %v2667
    %v2670 = vadd.f32 %v2631, %v2667
    %v2671 = vadd.f32 %v2632, %v2667
    %v2672 = vadd.f32 %v2633, %v2667
    %v2673 = vadd.f32 %v2634, %v2667
    %v2674 = vadd.f32 %v2635, %v2667
    %v2675 = vadd.f32 %v2636, %v2667
    %v2676 = vadd.f32 %v2637, %v2667
    %v2677 = vadd.f32 %v2638, %v2667
    %v2678 = vadd.f32 %v2639, %v2667
    %v2679 = vadd.f32 %v2640, %v2667
    %v2680 = vadd.f32 %v2641, %v2667
    %v2681 = vadd.f32 %v2642, %v2667
    %v2682 = vadd.f32 %v2643, %v2667
    %v2683 = vadd.f32 %v2644, %v2667
    %v2684 = vadd.f32 %v2645, %v2667
    %v2685 = vadd.f32 %v2646, %v2667
    %v2686 = vadd.f32 %v2647, %v2667
    %v2687 = vadd.f32 %v2648, %v2667
    %v2688 = vadd.f32 %v2649, %v2667
    %v2689 = vadd.f32 %v2650, %v2667
    %v2690 = vadd.f32 %v2651, %v2667
    %v2691 = vadd.f32 %v2652, %v2667
    %v2692 = vadd.f32 %v2653, %v2667
    %v2693 = vadd.f32 %v2654, %v2667
    %v2694 = vadd.f32 %v2655, %v2667
    %v2695 = vadd.f32 %v2656, %v2667
    %v2696 = vadd.f32 %v2657, %v2667
    %v2697 = vadd.f32 %v2658, %v2667
    %v2698 = vadd.f32 %v2659, %v2667
    %v2699 = vadd.f32 %v2660, %v2667
    %v2700 = vadd.f32 %v2661, %v2667
    %v2701 = vld [vmem:[%s8] sm:$0xf]
    %v2702 = vld [vmem:[%s8 + $0x4] sm:$0xf]
    %v2703 = vld [vmem:[%s8 + $0x8] sm:$0xf]
    %v2704 = vld [vmem:[%s8 + $0xc] sm:$0xf]
    %v2709 = vunpack.c.l.b16 %v2701
    %v2710 = vunpack.c.l.b16 %v2702
    %v2711 = vunpack.c.l.b16 %v2703
    %v2712 = vunpack.c.l.b16 %v2704
    %v2713 = vpack.c.b16 %v2710, %v2709
    %v2714 = vpack.c.b16 %v2712, %v2711
    %vm2717 = vcmask 261120
    %v2719 = vsel %vm2717, %v2221, 0
    %v2722 = vsel %vm2717, %v2222, 0
    %v2725 = vsel %vm2717, %v2223, 0
    %v2728 = vsel %vm2717, %v2224, 0
    %v2731 = vsel %vm2717, %v2225, 0
    %v2734 = vsel %vm2717, %v2226, 0
    %v2737 = vsel %vm2717, %v2227, 0
    %v2740 = vsel %vm2717, %v2228, 0
    %v2743 = vsel %vm2717, %v2229, 0
    %v2746 = vsel %vm2717, %v2230, 0
    %v2749 = vsel %vm2717, %v2231, 0
    %v2752 = vsel %vm2717, %v2232, 0
    %v2755 = vsel %vm2717, %v2233, 0
    %v2758 = vsel %vm2717, %v2234, 0
    %v2761 = vsel %vm2717, %v2235, 0
    %v2764 = vsel %vm2717, %v2236, 0
    %2766 = vmatprep.subr.bf16.mxu0 0
    %2767 = vmatpush1.bf16.msra.mxu0 0
    %2768 = vmatprep.subr.bf16.mxu0 0
    %2769 = vmatpush1.bf16.msra.mxu0 0
    %2770 = vmatprep.subr.bf16.mxu0 0
    %2771 = vmatpush1.bf16.msra.mxu0 0
    %2772 = vmatprep.subr.bf16.mxu0 0
    %2773 = vmatpush1.bf16.msra.mxu0 0
    %2774 = vmatprep.subr.bf16.mxu0 0
    %2775 = vmatpush1.bf16.msra.mxu0 0
    %2776 = vmatprep.subr.bf16.mxu0 0
    %2777 = vmatpush1.bf16.msra.mxu0 0
    %2778 = vmatprep.subr.bf16.mxu0 0
    %2779 = vmatpush1.bf16.msra.mxu0 %v2714
    %2780 = vmatprep.subr.bf16.mxu0 0
    %2781 = vmatpush1.bf16.msra.mxu0 %v2713
    %2782 = vmatprep.subr.bf16.mxu0 0
    %2783 = vmatpush2.bf16.msra.mxu0 0
    %2784 = vmatprep.subr.bf16.mxu0 0
    %2785 = vmatpush2.bf16.msra.mxu0 0
    %2786 = vmatprep.subr.bf16.mxu0 0
    %2787 = vmatpush2.bf16.msra.mxu0 0
    %2788 = vmatprep.subr.bf16.mxu0 0
    %2789 = vmatpush2.bf16.msra.mxu0 0
    %2790 = vmatprep.subr.bf16.mxu0 0
    %2791 = vmatpush2.bf16.msra.mxu0 0
    %2792 = vmatprep.subr.bf16.mxu0 0
    %2793 = vmatpush2.bf16.msra.mxu0 0
    %2794 = vmatprep.subr.bf16.mxu0 0
    %2795 = vmatpush2.bf16.msra.mxu0 0
    %2796 = vmatprep.subr.bf16.mxu0 0
    %2797 = vmatpush2.bf16.msra.mxu0 0
    %2798 = vmatprep.mubr.bf16.mxu0 0
    %2799 = vmatmul.mubr.bf16.gmra.mxu0 %v2719
    %v2800 = vpop.f32.mrf.mxu0
    %v2801 = vadd.f32 %v2669, %v2800
    %v2802 = vpop.f32.mrf.mxu0
    %v2803 = vpop.f32.mrf.mxu0
    %v2804 = vadd.f32 %v2670, %v2803
    %v2805 = vpop.f32.mrf.mxu0
    %2806 = vmatprep.mubr.bf16.mxu0 0
    %2807 = vmatmul.mubr.bf16.gmra.mxu0 %v2722
    %v2808 = vpop.f32.mrf.mxu0
    %v2809 = vadd.f32 %v2671, %v2808
    %v2810 = vpop.f32.mrf.mxu0
    %v2811 = vpop.f32.mrf.mxu0
    %v2812 = vadd.f32 %v2672, %v2811
    %v2813 = vpop.f32.mrf.mxu0
    %2814 = vmatprep.mubr.bf16.mxu0 0
    %2815 = vmatmul.mubr.bf16.gmra.mxu0 %v2725
    %v2816 = vpop.f32.mrf.mxu0
    %v2817 = vadd.f32 %v2673, %v2816
    %v2818 = vpop.f32.mrf.mxu0
    %v2819 = vpop.f32.mrf.mxu0
    %v2820 = vadd.f32 %v2674, %v2819
    %v2821 = vpop.f32.mrf.mxu0
    %2822 = vmatprep.mubr.bf16.mxu0 0
    %2823 = vmatmul.mubr.bf16.gmra.mxu0 %v2728
    %v2824 = vpop.f32.mrf.mxu0
    %v2825 = vadd.f32 %v2675, %v2824
    %v2826 = vpop.f32.mrf.mxu0
    %v2827 = vpop.f32.mrf.mxu0
    %v2828 = vadd.f32 %v2676, %v2827
    %v2829 = vpop.f32.mrf.mxu0
    %2830 = vmatprep.mubr.bf16.mxu0 0
    %2831 = vmatmul.mubr.bf16.gmra.mxu0 %v2731
    %v2832 = vpop.f32.mrf.mxu0
    %v2833 = vadd.f32 %v2677, %v2832
    %v2834 = vpop.f32.mrf.mxu0
    %v2835 = vpop.f32.mrf.mxu0
    %v2836 = vadd.f32 %v2678, %v2835
    %v2837 = vpop.f32.mrf.mxu0
    %2838 = vmatprep.mubr.bf16.mxu0 0
    %2839 = vmatmul.mubr.bf16.gmra.mxu0 %v2734
    %v2840 = vpop.f32.mrf.mxu0
    %v2841 = vadd.f32 %v2679, %v2840
    %v2842 = vpop.f32.mrf.mxu0
    %v2843 = vpop.f32.mrf.mxu0
    %v2844 = vadd.f32 %v2680, %v2843
    %v2845 = vpop.f32.mrf.mxu0
    %2846 = vmatprep.mubr.bf16.mxu0 0
    %2847 = vmatmul.mubr.bf16.gmra.mxu0 %v2737
    %v2848 = vpop.f32.mrf.mxu0
    %v2849 = vadd.f32 %v2681, %v2848
    %v2850 = vpop.f32.mrf.mxu0
    %v2851 = vpop.f32.mrf.mxu0
    %v2852 = vadd.f32 %v2682, %v2851
    %v2853 = vpop.f32.mrf.mxu0
    %2854 = vmatprep.mubr.bf16.mxu0 0
    %2855 = vmatmul.mubr.bf16.gmra.mxu0 %v2740
    %v2856 = vpop.f32.mrf.mxu0
    %v2857 = vadd.f32 %v2683, %v2856
    %v2858 = vpop.f32.mrf.mxu0
    %v2859 = vpop.f32.mrf.mxu0
    %v2860 = vadd.f32 %v2684, %v2859
    %v2861 = vpop.f32.mrf.mxu0
    %2862 = vmatprep.mubr.bf16.mxu0 0
    %2863 = vmatmul.mubr.bf16.gmra.mxu0 %v2743
    %v2864 = vpop.f32.mrf.mxu0
    %v2865 = vadd.f32 %v2685, %v2864
    %v2866 = vpop.f32.mrf.mxu0
    %v2867 = vpop.f32.mrf.mxu0
    %v2868 = vadd.f32 %v2686, %v2867
    %v2869 = vpop.f32.mrf.mxu0
    %2870 = vmatprep.mubr.bf16.mxu0 0
    %2871 = vmatmul.mubr.bf16.gmra.mxu0 %v2746
    %v2872 = vpop.f32.mrf.mxu0
    %v2873 = vadd.f32 %v2687, %v2872
    %v2874 = vpop.f32.mrf.mxu0
    %v2875 = vpop.f32.mrf.mxu0
    %v2876 = vadd.f32 %v2688, %v2875
    %v2877 = vpop.f32.mrf.mxu0
    %2878 = vmatprep.mubr.bf16.mxu0 0
    %2879 = vmatmul.mubr.bf16.gmra.mxu0 %v2749
    %v2880 = vpop.f32.mrf.mxu0
    %v2881 = vadd.f32 %v2689, %v2880
    %v2882 = vpop.f32.mrf.mxu0
    %v2883 = vpop.f32.mrf.mxu0
    %v2884 = vadd.f32 %v2690, %v2883
    %v2885 = vpop.f32.mrf.mxu0
    %2886 = vmatprep.mubr.bf16.mxu0 0
    %2887 = vmatmul.mubr.bf16.gmra.mxu0 %v2752
    %v2888 = vpop.f32.mrf.mxu0
    %v2889 = vadd.f32 %v2691, %v2888
    %v2890 = vpop.f32.mrf.mxu0
    %v2891 = vpop.f32.mrf.mxu0
    %v2892 = vadd.f32 %v2692, %v2891
    %v2893 = vpop.f32.mrf.mxu0
    %2894 = vmatprep.mubr.bf16.mxu0 0
    %2895 = vmatmul.mubr.bf16.gmra.mxu0 %v2755
    %v2896 = vpop.f32.mrf.mxu0
    %v2897 = vadd.f32 %v2693, %v2896
    %v2898 = vpop.f32.mrf.mxu0
    %v2899 = vpop.f32.mrf.mxu0
    %v2900 = vadd.f32 %v2694, %v2899
    %v2901 = vpop.f32.mrf.mxu0
    %2902 = vmatprep.mubr.bf16.mxu0 0
    %2903 = vmatmul.mubr.bf16.gmra.mxu0 %v2758
    %v2904 = vpop.f32.mrf.mxu0
    %v2905 = vadd.f32 %v2695, %v2904
    %v2906 = vpop.f32.mrf.mxu0
    %v2907 = vpop.f32.mrf.mxu0
    %v2908 = vadd.f32 %v2696, %v2907
    %v2909 = vpop.f32.mrf.mxu0
    %2910 = vmatprep.mubr.bf16.mxu0 0
    %2911 = vmatmul.mubr.bf16.gmra.mxu0 %v2761
    %v2912 = vpop.f32.mrf.mxu0
    %v2913 = vadd.f32 %v2697, %v2912
    %v2914 = vpop.f32.mrf.mxu0
    %v2915 = vpop.f32.mrf.mxu0
    %v2916 = vadd.f32 %v2698, %v2915
    %v2917 = vpop.f32.mrf.mxu0
    %2918 = vmatprep.mubr.bf16.mxu0 0
    %2919 = vmatmul.mubr.bf16.gmra.mxu0 %v2764
    %v2920 = vpop.f32.mrf.mxu0
    %v2921 = vadd.f32 %v2699, %v2920
    %v2922 = vpop.f32.mrf.mxu0
    %v2923 = vpop.f32.mrf.mxu0
    %v2924 = vadd.f32 %v2700, %v2923
    %v2925 = vpop.f32.mrf.mxu0
    %2926 = vdwg.mxu0
    %v2927 = vtanh.pop %v2801
    %v2928 = vtanh.pop %v2804
    %v2929 = vtanh.pop %v2809
    %v2930 = vtanh.pop %v2812
    %v2931 = vtanh.pop %v2817
    %v2932 = vtanh.pop %v2820
    %v2933 = vtanh.pop %v2825
    %v2934 = vtanh.pop %v2828
    %v2935 = vtanh.pop %v2833
    %v2936 = vtanh.pop %v2836
    %v2937 = vtanh.pop %v2841
    %v2938 = vtanh.pop %v2844
    %v2939 = vtanh.pop %v2849
    %v2940 = vtanh.pop %v2852
    %v2941 = vtanh.pop %v2857
    %v2942 = vtanh.pop %v2860
    %v2943 = vtanh.pop %v2865
    %v2944 = vtanh.pop %v2868
    %v2945 = vtanh.pop %v2873
    %v2946 = vtanh.pop %v2876
    %v2947 = vtanh.pop %v2881
    %v2948 = vtanh.pop %v2884
    %v2949 = vtanh.pop %v2889
    %v2950 = vtanh.pop %v2892
    %v2951 = vtanh.pop %v2897
    %v2952 = vtanh.pop %v2900
    %v2953 = vtanh.pop %v2905
    %v2954 = vtanh.pop %v2908
    %v2955 = vtanh.pop %v2913
    %v2956 = vtanh.pop %v2916
    %v2957 = vtanh.pop %v2921
    %v2958 = vtanh.pop %v2924
    %v2959 = vpack.c.bf16 %v2928, %v2927
    %v2960 = vpack.c.bf16 %v2930, %v2929
    %v2961 = vpack.c.bf16 %v2932, %v2931
    %v2962 = vpack.c.bf16 %v2934, %v2933
    %v2963 = vpack.c.bf16 %v2936, %v2935
    %v2964 = vpack.c.bf16 %v2938, %v2937
    %v2965 = vpack.c.bf16 %v2940, %v2939
    %v2966 = vpack.c.bf16 %v2942, %v2941
    %v2967 = vpack.c.bf16 %v2944, %v2943
    %v2968 = vpack.c.bf16 %v2946, %v2945
    %v2969 = vpack.c.bf16 %v2948, %v2947
    %v2970 = vpack.c.bf16 %v2950, %v2949
    %v2971 = vpack.c.bf16 %v2952, %v2951
    %v2972 = vpack.c.bf16 %v2954, %v2953
    %v2973 = vpack.c.bf16 %v2956, %v2955
    %v2974 = vpack.c.bf16 %v2958, %v2957
    %v2975 = vld [vmem:[%s11] sm:$0xff]
    %v2976 = vld [vmem:[%s11 + $0x8] sm:$0xff]
    %v2977 = vld [vmem:[%s11 + $0x10] sm:$0xff]
    %v2978 = vld [vmem:[%s11 + $0x18] sm:$0xff]
    %v2979 = vld [vmem:[%s11 + $0x20] sm:$0xff]
    %v2980 = vld [vmem:[%s11 + $0x28] sm:$0xff]
    %v2981 = vld [vmem:[%s11 + $0x30] sm:$0xff]
    %v2982 = vld [vmem:[%s11 + $0x38] sm:$0xff]
    %v2983 = vld [vmem:[%s11 + $0x40] sm:$0xff]
    %v2984 = vld [vmem:[%s11 + $0x48] sm:$0xff]
    %v2985 = vld [vmem:[%s11 + $0x50] sm:$0xff]
    %v2986 = vld [vmem:[%s11 + $0x58] sm:$0xff]
    %v2987 = vld [vmem:[%s11 + $0x60] sm:$0xff]
    %v2988 = vld [vmem:[%s11 + $0x68] sm:$0xff]
    %v2989 = vld [vmem:[%s11 + $0x70] sm:$0xff]
    %v2990 = vld [vmem:[%s11 + $0x78] sm:$0xff]
    %v2991 = vld [vmem:[%s11 + $0x80] sm:$0xff]
    %v2992 = vld [vmem:[%s11 + $0x88] sm:$0xff]
    %v2993 = vld [vmem:[%s11 + $0x90] sm:$0xff]
    %v2994 = vld [vmem:[%s11 + $0x98] sm:$0xff]
    %v2995 = vld [vmem:[%s11 + $0xa0] sm:$0xff]
    %v2996 = vld [vmem:[%s11 + $0xa8] sm:$0xff]
    %v2997 = vld [vmem:[%s11 + $0xb0] sm:$0xff]
    %v2998 = vld [vmem:[%s11 + $0xb8] sm:$0xff]
    %v2999 = vld [vmem:[%s11 + $0xc0] sm:$0xff]
    %v3000 = vld [vmem:[%s11 + $0xc8] sm:$0xff]
    %v3001 = vld [vmem:[%s11 + $0xd0] sm:$0xff]
    %v3002 = vld [vmem:[%s11 + $0xd8] sm:$0xff]
    %v3003 = vld [vmem:[%s11 + $0xe0] sm:$0xff]
    %v3004 = vld [vmem:[%s11 + $0xe8] sm:$0xff]
    %v3005 = vld [vmem:[%s11 + $0xf0] sm:$0xff]
    %v3006 = vld [vmem:[%s11 + $0xf8] sm:$0xff]
    %v3007 = vld [vmem:[%s12] sm:$0xf]
    %v3009 = vlaneseq
    %v3010 = vshrl.u32 %v3009, 7
    %v3011 = vsub.s32 0, %v3010
    %v3012 = vrot.slane %v3007, %v3011
    %v3013 = vlaneseq
    %v3014 = vshrl.u32 %v3013, 7
    %v3015 = vsub.s32 1, %v3014
    %v3016 = vrot.slane %v3007, %v3015
    %v3017 = vlaneseq
    %v3018 = vshrl.u32 %v3017, 7
    %v3019 = vsub.s32 2, %v3018
    %v3020 = vrot.slane %v3007, %v3019
    %v3021 = vlaneseq
    %v3022 = vshrl.u32 %v3021, 7
    %v3023 = vsub.s32 3, %v3022
    %v3024 = vrot.slane %v3007, %v3023
    %v3061 = vunpack.c.l.b16 %v2975
    %v3062 = vunpack.c.h.b16 %v2975
    %v3063 = vunpack.c.l.b16 %v2976
    %v3064 = vunpack.c.h.b16 %v2976
    %v3065 = vunpack.c.l.b16 %v2977
    %v3066 = vunpack.c.h.b16 %v2977
    %v3067 = vunpack.c.l.b16 %v2978
    %v3068 = vunpack.c.h.b16 %v2978
    %v3069 = vunpack.c.l.b16 %v2979
    %v3070 = vunpack.c.h.b16 %v2979
    %v3071 = vunpack.c.l.b16 %v2980
    %v3072 = vunpack.c.h.b16 %v2980
    %v3073 = vunpack.c.l.b16 %v2981
    %v3074 = vunpack.c.h.b16 %v2981
    %v3075 = vunpack.c.l.b16 %v2982
    %v3076 = vunpack.c.h.b16 %v2982
    %v3077 = vunpack.c.l.b16 %v2983
    %v3078 = vunpack.c.h.b16 %v2983
    %v3079 = vunpack.c.l.b16 %v2984
    %v3080 = vunpack.c.h.b16 %v2984
    %v3081 = vunpack.c.l.b16 %v2985
    %v3082 = vunpack.c.h.b16 %v2985
    %v3083 = vunpack.c.l.b16 %v2986
    %v3084 = vunpack.c.h.b16 %v2986
    %v3085 = vunpack.c.l.b16 %v2987
    %v3086 = vunpack.c.h.b16 %v2987
    %v3087 = vunpack.c.l.b16 %v2988
    %v3088 = vunpack.c.h.b16 %v2988
    %v3089 = vunpack.c.l.b16 %v2989
    %v3090 = vunpack.c.h.b16 %v2989
    %v3091 = vunpack.c.l.b16 %v2990
    %v3092 = vunpack.c.h.b16 %v2990
    %v3093 = vunpack.c.l.b16 %v2991
    %v3094 = vunpack.c.h.b16 %v2991
    %v3095 = vunpack.c.l.b16 %v2992
    %v3096 = vunpack.c.h.b16 %v2992
    %v3097 = vunpack.c.l.b16 %v2993
    %v3098 = vunpack.c.h.b16 %v2993
    %v3099 = vunpack.c.l.b16 %v2994
    %v3100 = vunpack.c.h.b16 %v2994
    %v3101 = vunpack.c.l.b16 %v2995
    %v3102 = vunpack.c.h.b16 %v2995
    %v3103 = vunpack.c.l.b16 %v2996
    %v3104 = vunpack.c.h.b16 %v2996
    %v3105 = vunpack.c.l.b16 %v2997
    %v3106 = vunpack.c.h.b16 %v2997
    %v3107 = vunpack.c.l.b16 %v2998
    %v3108 = vunpack.c.h.b16 %v2998
    %v3109 = vunpack.c.l.b16 %v2999
    %v3110 = vunpack.c.h.b16 %v2999
    %v3111 = vunpack.c.l.b16 %v3000
    %v3112 = vunpack.c.h.b16 %v3000
    %v3113 = vunpack.c.l.b16 %v3001
    %v3114 = vunpack.c.h.b16 %v3001
    %v3115 = vunpack.c.l.b16 %v3002
    %v3116 = vunpack.c.h.b16 %v3002
    %v3117 = vunpack.c.l.b16 %v3003
    %v3118 = vunpack.c.h.b16 %v3003
    %v3119 = vunpack.c.l.b16 %v3004
    %v3120 = vunpack.c.h.b16 %v3004
    %v3121 = vunpack.c.l.b16 %v3005
    %v3122 = vunpack.c.h.b16 %v3005
    %v3123 = vunpack.c.l.b16 %v3006
    %v3124 = vunpack.c.h.b16 %v3006
    %v3125 = vpack.c.b16 %v3065, %v3061
    %v3126 = vpack.c.b16 %v3066, %v3062
    %v3127 = vpack.c.b16 %v3067, %v3063
    %v3128 = vpack.c.b16 %v3068, %v3064
    %v3129 = vpack.c.b16 %v3073, %v3069
    %v3130 = vpack.c.b16 %v3074, %v3070
    %v3131 = vpack.c.b16 %v3075, %v3071
    %v3132 = vpack.c.b16 %v3076, %v3072
    %v3133 = vpack.c.b16 %v3081, %v3077
    %v3134 = vpack.c.b16 %v3082, %v3078
    %v3135 = vpack.c.b16 %v3083, %v3079
    %v3136 = vpack.c.b16 %v3084, %v3080
    %v3137 = vpack.c.b16 %v3089, %v3085
    %v3138 = vpack.c.b16 %v3090, %v3086
    %v3139 = vpack.c.b16 %v3091, %v3087
    %v3140 = vpack.c.b16 %v3092, %v3088
    %v3141 = vpack.c.b16 %v3097, %v3093
    %v3142 = vpack.c.b16 %v3098, %v3094
    %v3143 = vpack.c.b16 %v3099, %v3095
    %v3144 = vpack.c.b16 %v3100, %v3096
    %v3145 = vpack.c.b16 %v3105, %v3101
    %v3146 = vpack.c.b16 %v3106, %v3102
    %v3147 = vpack.c.b16 %v3107, %v3103
    %v3148 = vpack.c.b16 %v3108, %v3104
    %v3149 = vpack.c.b16 %v3113, %v3109
    %v3150 = vpack.c.b16 %v3114, %v3110
    %v3151 = vpack.c.b16 %v3115, %v3111
    %v3152 = vpack.c.b16 %v3116, %v3112
    %v3153 = vpack.c.b16 %v3121, %v3117
    %v3154 = vpack.c.b16 %v3122, %v3118
    %v3155 = vpack.c.b16 %v3123, %v3119
    %v3156 = vpack.c.b16 %v3124, %v3120
    %3189 = vmatprep.subr.bf16.mxu0 %v3154
    %3190 = vmatpush1.bf16.msra.mxu0 %v3153
    %3191 = vmatprep.subr.bf16.mxu0 %v3150
    %3192 = vmatpush1.bf16.msra.mxu0 %v3149
    %3193 = vmatprep.subr.bf16.mxu0 %v3146
    %3194 = vmatpush1.bf16.msra.mxu0 %v3145
    %3195 = vmatprep.subr.bf16.mxu0 %v3142
    %3196 = vmatpush1.bf16.msra.mxu0 %v3141
    %3197 = vmatprep.subr.bf16.mxu0 %v3138
    %3198 = vmatpush1.bf16.msra.mxu0 %v3137
    %3199 = vmatprep.subr.bf16.mxu0 %v3134
    %3200 = vmatpush1.bf16.msra.mxu0 %v3133
    %3201 = vmatprep.subr.bf16.mxu0 %v3130
    %3202 = vmatpush1.bf16.msra.mxu0 %v3129
    %3203 = vmatprep.subr.bf16.mxu0 %v3126
    %3204 = vmatpush1.bf16.msra.mxu0 %v3125
    %3205 = vmatprep.subr.bf16.mxu0 0
    %3206 = vmatpush2.bf16.msra.mxu0 0
    %3207 = vmatprep.subr.bf16.mxu0 0
    %3208 = vmatpush2.bf16.msra.mxu0 0
    %3209 = vmatprep.subr.bf16.mxu0 0
    %3210 = vmatpush2.bf16.msra.mxu0 0
    %3211 = vmatprep.subr.bf16.mxu0 0
    %3212 = vmatpush2.bf16.msra.mxu0 0
    %3213 = vmatprep.subr.bf16.mxu0 0
    %3214 = vmatpush2.bf16.msra.mxu0 0
    %3215 = vmatprep.subr.bf16.mxu0 0
    %3216 = vmatpush2.bf16.msra.mxu0 0
    %3217 = vmatprep.subr.bf16.mxu0 0
    %3218 = vmatpush2.bf16.msra.mxu0 0
    %3219 = vmatprep.subr.bf16.mxu0 0
    %3220 = vmatpush2.bf16.msra.mxu0 0
    %3221 = vmatprep.mubr.bf16.mxu0 0
    %3222 = vmatmul.mubr.bf16.gmra.mxu0 %v2959
    %v3223 = vpop.f32.mrf.mxu0
    %v3224 = vadd.f32 %v3012, %v3223
    %v3225 = vpop.f32.mrf.mxu0
    %v3226 = vadd.f32 %v3016, %v3225
    %v3227 = vpop.f32.mrf.mxu0
    %v3228 = vadd.f32 %v3012, %v3227
    %v3229 = vpop.f32.mrf.mxu0
    %v3230 = vadd.f32 %v3016, %v3229
    %3231 = vmatprep.mubr.bf16.mxu0 0
    %3232 = vmatmul.mubr.bf16.gmra.mxu0 %v2960
    %v3233 = vpop.f32.mrf.mxu0
    %v3234 = vadd.f32 %v3012, %v3233
    %v3235 = vpop.f32.mrf.mxu0
    %v3236 = vadd.f32 %v3016, %v3235
    %v3237 = vpop.f32.mrf.mxu0
    %v3238 = vadd.f32 %v3012, %v3237
    %v3239 = vpop.f32.mrf.mxu0
    %v3240 = vadd.f32 %v3016, %v3239
    %3241 = vmatprep.mubr.bf16.mxu0 0
    %3242 = vmatmul.mubr.bf16.gmra.mxu0 %v2961
    %v3243 = vpop.f32.mrf.mxu0
    %v3244 = vadd.f32 %v3012, %v3243
    %v3245 = vpop.f32.mrf.mxu0
    %v3246 = vadd.f32 %v3016, %v3245
    %v3247 = vpop.f32.mrf.mxu0
    %v3248 = vadd.f32 %v3012, %v3247
    %v3249 = vpop.f32.mrf.mxu0
    %v3250 = vadd.f32 %v3016, %v3249
    %3251 = vmatprep.mubr.bf16.mxu0 0
    %3252 = vmatmul.mubr.bf16.gmra.mxu0 %v2962
    %v3253 = vpop.f32.mrf.mxu0
    %v3254 = vadd.f32 %v3012, %v3253
    %v3255 = vpop.f32.mrf.mxu0
    %v3256 = vadd.f32 %v3016, %v3255
    %v3257 = vpop.f32.mrf.mxu0
    %v3258 = vadd.f32 %v3012, %v3257
    %v3259 = vpop.f32.mrf.mxu0
    %v3260 = vadd.f32 %v3016, %v3259
    %3261 = vmatprep.mubr.bf16.mxu0 0
    %3262 = vmatmul.mubr.bf16.gmra.mxu0 %v2963
    %v3263 = vpop.f32.mrf.mxu0
    %v3264 = vadd.f32 %v3012, %v3263
    %v3265 = vpop.f32.mrf.mxu0
    %v3266 = vadd.f32 %v3016, %v3265
    %v3267 = vpop.f32.mrf.mxu0
    %v3268 = vadd.f32 %v3012, %v3267
    %v3269 = vpop.f32.mrf.mxu0
    %v3270 = vadd.f32 %v3016, %v3269
    %3271 = vmatprep.mubr.bf16.mxu0 0
    %3272 = vmatmul.mubr.bf16.gmra.mxu0 %v2964
    %v3273 = vpop.f32.mrf.mxu0
    %v3274 = vadd.f32 %v3012, %v3273
    %v3275 = vpop.f32.mrf.mxu0
    %v3276 = vadd.f32 %v3016, %v3275
    %v3277 = vpop.f32.mrf.mxu0
    %v3278 = vadd.f32 %v3012, %v3277
    %v3279 = vpop.f32.mrf.mxu0
    %v3280 = vadd.f32 %v3016, %v3279
    %3281 = vmatprep.mubr.bf16.mxu0 0
    %3282 = vmatmul.mubr.bf16.gmra.mxu0 %v2965
    %v3283 = vpop.f32.mrf.mxu0
    %v3284 = vadd.f32 %v3012, %v3283
    %v3285 = vpop.f32.mrf.mxu0
    %v3286 = vadd.f32 %v3016, %v3285
    %v3287 = vpop.f32.mrf.mxu0
    %v3288 = vadd.f32 %v3012, %v3287
    %v3289 = vpop.f32.mrf.mxu0
    %v3290 = vadd.f32 %v3016, %v3289
    %3291 = vmatprep.mubr.bf16.mxu0 0
    %3292 = vmatmul.mubr.bf16.gmra.mxu0 %v2966
    %v3293 = vpop.f32.mrf.mxu0
    %v3294 = vadd.f32 %v3012, %v3293
    %v3295 = vpop.f32.mrf.mxu0
    %v3296 = vadd.f32 %v3016, %v3295
    %v3297 = vpop.f32.mrf.mxu0
    %v3298 = vadd.f32 %v3012, %v3297
    %v3299 = vpop.f32.mrf.mxu0
    %v3300 = vadd.f32 %v3016, %v3299
    %3301 = vmatprep.mubr.bf16.mxu0 0
    %3302 = vmatmul.mubr.bf16.gmra.mxu0 %v2967
    %v3303 = vpop.f32.mrf.mxu0
    %v3304 = vadd.f32 %v3012, %v3303
    %v3305 = vpop.f32.mrf.mxu0
    %v3306 = vadd.f32 %v3016, %v3305
    %v3307 = vpop.f32.mrf.mxu0
    %v3308 = vadd.f32 %v3012, %v3307
    %v3309 = vpop.f32.mrf.mxu0
    %v3310 = vadd.f32 %v3016, %v3309
    %3311 = vmatprep.mubr.bf16.mxu0 0
    %3312 = vmatmul.mubr.bf16.gmra.mxu0 %v2968
    %v3313 = vpop.f32.mrf.mxu0
    %v3314 = vadd.f32 %v3012, %v3313
    %v3315 = vpop.f32.mrf.mxu0
    %v3316 = vadd.f32 %v3016, %v3315
    %v3317 = vpop.f32.mrf.mxu0
    %v3318 = vadd.f32 %v3012, %v3317
    %v3319 = vpop.f32.mrf.mxu0
    %v3320 = vadd.f32 %v3016, %v3319
    %3321 = vmatprep.mubr.bf16.mxu0 0
    %3322 = vmatmul.mubr.bf16.gmra.mxu0 %v2969
    %v3323 = vpop.f32.mrf.mxu0
    %v3324 = vadd.f32 %v3012, %v3323
    %v3325 = vpop.f32.mrf.mxu0
    %v3326 = vadd.f32 %v3016, %v3325
    %v3327 = vpop.f32.mrf.mxu0
    %v3328 = vadd.f32 %v3012, %v3327
    %v3329 = vpop.f32.mrf.mxu0
    %v3330 = vadd.f32 %v3016, %v3329
    %3331 = vmatprep.mubr.bf16.mxu0 0
    %3332 = vmatmul.mubr.bf16.gmra.mxu0 %v2970
    %v3333 = vpop.f32.mrf.mxu0
    %v3334 = vadd.f32 %v3012, %v3333
    %v3335 = vpop.f32.mrf.mxu0
    %v3336 = vadd.f32 %v3016, %v3335
    %v3337 = vpop.f32.mrf.mxu0
    %v3338 = vadd.f32 %v3012, %v3337
    %v3339 = vpop.f32.mrf.mxu0
    %v3340 = vadd.f32 %v3016, %v3339
    %3341 = vmatprep.mubr.bf16.mxu0 0
    %3342 = vmatmul.mubr.bf16.gmra.mxu0 %v2971
    %v3343 = vpop.f32.mrf.mxu0
    %v3344 = vadd.f32 %v3012, %v3343
    %v3345 = vpop.f32.mrf.mxu0
    %v3346 = vadd.f32 %v3016, %v3345
    %v3347 = vpop.f32.mrf.mxu0
    %v3348 = vadd.f32 %v3012, %v3347
    %v3349 = vpop.f32.mrf.mxu0
    %v3350 = vadd.f32 %v3016, %v3349
    %3351 = vmatprep.mubr.bf16.mxu0 0
    %3352 = vmatmul.mubr.bf16.gmra.mxu0 %v2972
    %v3353 = vpop.f32.mrf.mxu0
    %v3354 = vadd.f32 %v3012, %v3353
    %v3355 = vpop.f32.mrf.mxu0
    %v3356 = vadd.f32 %v3016, %v3355
    %v3357 = vpop.f32.mrf.mxu0
    %v3358 = vadd.f32 %v3012, %v3357
    %v3359 = vpop.f32.mrf.mxu0
    %v3360 = vadd.f32 %v3016, %v3359
    %3361 = vmatprep.mubr.bf16.mxu0 0
    %3362 = vmatmul.mubr.bf16.gmra.mxu0 %v2973
    %v3363 = vpop.f32.mrf.mxu0
    %v3364 = vadd.f32 %v3012, %v3363
    %v3365 = vpop.f32.mrf.mxu0
    %v3366 = vadd.f32 %v3016, %v3365
    %v3367 = vpop.f32.mrf.mxu0
    %v3368 = vadd.f32 %v3012, %v3367
    %v3369 = vpop.f32.mrf.mxu0
    %v3370 = vadd.f32 %v3016, %v3369
    %3371 = vmatprep.mubr.bf16.mxu0 0
    %3372 = vmatmul.mubr.bf16.gmra.mxu0 %v2974
    %v3373 = vpop.f32.mrf.mxu0
    %v3374 = vadd.f32 %v3012, %v3373
    %v3375 = vpop.f32.mrf.mxu0
    %v3376 = vadd.f32 %v3016, %v3375
    %v3377 = vpop.f32.mrf.mxu0
    %v3378 = vadd.f32 %v3012, %v3377
    %v3379 = vpop.f32.mrf.mxu0
    %v3380 = vadd.f32 %v3016, %v3379
    %3381 = vdwg.mxu0
    %3382 = vmatprep.subr.bf16.mxu0 %v3156
    %3383 = vmatpush1.bf16.msra.mxu0 %v3155
    %3384 = vmatprep.subr.bf16.mxu0 %v3152
    %3385 = vmatpush1.bf16.msra.mxu0 %v3151
    %3386 = vmatprep.subr.bf16.mxu0 %v3148
    %3387 = vmatpush1.bf16.msra.mxu0 %v3147
    %3388 = vmatprep.subr.bf16.mxu0 %v3144
    %3389 = vmatpush1.bf16.msra.mxu0 %v3143
    %3390 = vmatprep.subr.bf16.mxu0 %v3140
    %3391 = vmatpush1.bf16.msra.mxu0 %v3139
    %3392 = vmatprep.subr.bf16.mxu0 %v3136
    %3393 = vmatpush1.bf16.msra.mxu0 %v3135
    %3394 = vmatprep.subr.bf16.mxu0 %v3132
    %3395 = vmatpush1.bf16.msra.mxu0 %v3131
    %3396 = vmatprep.subr.bf16.mxu0 %v3128
    %3397 = vmatpush1.bf16.msra.mxu0 %v3127
    %3398 = vmatprep.subr.bf16.mxu0 0
    %3399 = vmatpush2.bf16.msra.mxu0 0
    %3400 = vmatprep.subr.bf16.mxu0 0
    %3401 = vmatpush2.bf16.msra.mxu0 0
    %3402 = vmatprep.subr.bf16.mxu0 0
    %3403 = vmatpush2.bf16.msra.mxu0 0
    %3404 = vmatprep.subr.bf16.mxu0 0
    %3405 = vmatpush2.bf16.msra.mxu0 0
    %3406 = vmatprep.subr.bf16.mxu0 0
    %3407 = vmatpush2.bf16.msra.mxu0 0
    %3408 = vmatprep.subr.bf16.mxu0 0
    %3409 = vmatpush2.bf16.msra.mxu0 0
    %3410 = vmatprep.subr.bf16.mxu0 0
    %3411 = vmatpush2.bf16.msra.mxu0 0
    %3412 = vmatprep.subr.bf16.mxu0 0
    %3413 = vmatpush2.bf16.msra.mxu0 0
    %3414 = vmatprep.mubr.bf16.mxu0 0
    %3415 = vmatmul.mubr.bf16.gmra.mxu0 %v2959
    %v3416 = vpop.f32.mrf.mxu0
    %v3417 = vadd.f32 %v3020, %v3416
    %v3418 = vpop.f32.mrf.mxu0
    %v3419 = vadd.f32 %v3024, %v3418
    %v3420 = vpop.f32.mrf.mxu0
    %v3421 = vadd.f32 %v3020, %v3420
    %v3422 = vpop.f32.mrf.mxu0
    %v3423 = vadd.f32 %v3024, %v3422
    %3424 = vmatprep.mubr.bf16.mxu0 0
    %3425 = vmatmul.mubr.bf16.gmra.mxu0 %v2960
    %v3426 = vpop.f32.mrf.mxu0
    %v3427 = vadd.f32 %v3020, %v3426
    %v3428 = vpop.f32.mrf.mxu0
    %v3429 = vadd.f32 %v3024, %v3428
    %v3430 = vpop.f32.mrf.mxu0
    %v3431 = vadd.f32 %v3020, %v3430
    %v3432 = vpop.f32.mrf.mxu0
    %v3433 = vadd.f32 %v3024, %v3432
    %3434 = vmatprep.mubr.bf16.mxu0 0
    %3435 = vmatmul.mubr.bf16.gmra.mxu0 %v2961
    %v3436 = vpop.f32.mrf.mxu0
    %v3437 = vadd.f32 %v3020, %v3436
    %v3438 = vpop.f32.mrf.mxu0
    %v3439 = vadd.f32 %v3024, %v3438
    %v3440 = vpop.f32.mrf.mxu0
    %v3441 = vadd.f32 %v3020, %v3440
    %v3442 = vpop.f32.mrf.mxu0
    %v3443 = vadd.f32 %v3024, %v3442
    %3444 = vmatprep.mubr.bf16.mxu0 0
    %3445 = vmatmul.mubr.bf16.gmra.mxu0 %v2962
    %v3446 = vpop.f32.mrf.mxu0
    %v3447 = vadd.f32 %v3020, %v3446
    %v3448 = vpop.f32.mrf.mxu0
    %v3449 = vadd.f32 %v3024, %v3448
    %v3450 = vpop.f32.mrf.mxu0
    %v3451 = vadd.f32 %v3020, %v3450
    %v3452 = vpop.f32.mrf.mxu0
    %v3453 = vadd.f32 %v3024, %v3452
    %3454 = vmatprep.mubr.bf16.mxu0 0
    %3455 = vmatmul.mubr.bf16.gmra.mxu0 %v2963
    %v3456 = vpop.f32.mrf.mxu0
    %v3457 = vadd.f32 %v3020, %v3456
    %v3458 = vpop.f32.mrf.mxu0
    %v3459 = vadd.f32 %v3024, %v3458
    %v3460 = vpop.f32.mrf.mxu0
    %v3461 = vadd.f32 %v3020, %v3460
    %v3462 = vpop.f32.mrf.mxu0
    %v3463 = vadd.f32 %v3024, %v3462
    %3464 = vmatprep.mubr.bf16.mxu0 0
    %3465 = vmatmul.mubr.bf16.gmra.mxu0 %v2964
    %v3466 = vpop.f32.mrf.mxu0
    %v3467 = vadd.f32 %v3020, %v3466
    %v3468 = vpop.f32.mrf.mxu0
    %v3469 = vadd.f32 %v3024, %v3468
    %v3470 = vpop.f32.mrf.mxu0
    %v3471 = vadd.f32 %v3020, %v3470
    %v3472 = vpop.f32.mrf.mxu0
    %v3473 = vadd.f32 %v3024, %v3472
    %3474 = vmatprep.mubr.bf16.mxu0 0
    %3475 = vmatmul.mubr.bf16.gmra.mxu0 %v2965
    %v3476 = vpop.f32.mrf.mxu0
    %v3477 = vadd.f32 %v3020, %v3476
    %v3478 = vpop.f32.mrf.mxu0
    %v3479 = vadd.f32 %v3024, %v3478
    %v3480 = vpop.f32.mrf.mxu0
    %v3481 = vadd.f32 %v3020, %v3480
    %v3482 = vpop.f32.mrf.mxu0
    %v3483 = vadd.f32 %v3024, %v3482
    %3484 = vmatprep.mubr.bf16.mxu0 0
    %3485 = vmatmul.mubr.bf16.gmra.mxu0 %v2966
    %v3486 = vpop.f32.mrf.mxu0
    %v3487 = vadd.f32 %v3020, %v3486
    %v3488 = vpop.f32.mrf.mxu0
    %v3489 = vadd.f32 %v3024, %v3488
    %v3490 = vpop.f32.mrf.mxu0
    %v3491 = vadd.f32 %v3020, %v3490
    %v3492 = vpop.f32.mrf.mxu0
    %v3493 = vadd.f32 %v3024, %v3492
    %3494 = vmatprep.mubr.bf16.mxu0 0
    %3495 = vmatmul.mubr.bf16.gmra.mxu0 %v2967
    %v3496 = vpop.f32.mrf.mxu0
    %v3497 = vadd.f32 %v3020, %v3496
    %v3498 = vpop.f32.mrf.mxu0
    %v3499 = vadd.f32 %v3024, %v3498
    %v3500 = vpop.f32.mrf.mxu0
    %v3501 = vadd.f32 %v3020, %v3500
    %v3502 = vpop.f32.mrf.mxu0
    %v3503 = vadd.f32 %v3024, %v3502
    %3504 = vmatprep.mubr.bf16.mxu0 0
    %3505 = vmatmul.mubr.bf16.gmra.mxu0 %v2968
    %v3506 = vpop.f32.mrf.mxu0
    %v3507 = vadd.f32 %v3020, %v3506
    %v3508 = vpop.f32.mrf.mxu0
    %v3509 = vadd.f32 %v3024, %v3508
    %v3510 = vpop.f32.mrf.mxu0
    %v3511 = vadd.f32 %v3020, %v3510
    %v3512 = vpop.f32.mrf.mxu0
    %v3513 = vadd.f32 %v3024, %v3512
    %3514 = vmatprep.mubr.bf16.mxu0 0
    %3515 = vmatmul.mubr.bf16.gmra.mxu0 %v2969
    %v3516 = vpop.f32.mrf.mxu0
    %v3517 = vadd.f32 %v3020, %v3516
    %v3518 = vpop.f32.mrf.mxu0
    %v3519 = vadd.f32 %v3024, %v3518
    %v3520 = vpop.f32.mrf.mxu0
    %v3521 = vadd.f32 %v3020, %v3520
    %v3522 = vpop.f32.mrf.mxu0
    %v3523 = vadd.f32 %v3024, %v3522
    %3524 = vmatprep.mubr.bf16.mxu0 0
    %3525 = vmatmul.mubr.bf16.gmra.mxu0 %v2970
    %v3526 = vpop.f32.mrf.mxu0
    %v3527 = vadd.f32 %v3020, %v3526
    %v3528 = vpop.f32.mrf.mxu0
    %v3529 = vadd.f32 %v3024, %v3528
    %v3530 = vpop.f32.mrf.mxu0
    %v3531 = vadd.f32 %v3020, %v3530
    %v3532 = vpop.f32.mrf.mxu0
    %v3533 = vadd.f32 %v3024, %v3532
    %3534 = vmatprep.mubr.bf16.mxu0 0
    %3535 = vmatmul.mubr.bf16.gmra.mxu0 %v2971
    %v3536 = vpop.f32.mrf.mxu0
    %v3537 = vadd.f32 %v3020, %v3536
    %v3538 = vpop.f32.mrf.mxu0
    %v3539 = vadd.f32 %v3024, %v3538
    %v3540 = vpop.f32.mrf.mxu0
    %v3541 = vadd.f32 %v3020, %v3540
    %v3542 = vpop.f32.mrf.mxu0
    %v3543 = vadd.f32 %v3024, %v3542
    %3544 = vmatprep.mubr.bf16.mxu0 0
    %3545 = vmatmul.mubr.bf16.gmra.mxu0 %v2972
    %v3546 = vpop.f32.mrf.mxu0
    %v3547 = vadd.f32 %v3020, %v3546
    %v3548 = vpop.f32.mrf.mxu0
    %v3549 = vadd.f32 %v3024, %v3548
    %v3550 = vpop.f32.mrf.mxu0
    %v3551 = vadd.f32 %v3020, %v3550
    %v3552 = vpop.f32.mrf.mxu0
    %v3553 = vadd.f32 %v3024, %v3552
    %3554 = vmatprep.mubr.bf16.mxu0 0
    %3555 = vmatmul.mubr.bf16.gmra.mxu0 %v2973
    %v3556 = vpop.f32.mrf.mxu0
    %v3557 = vadd.f32 %v3020, %v3556
    %v3558 = vpop.f32.mrf.mxu0
    %v3559 = vadd.f32 %v3024, %v3558
    %v3560 = vpop.f32.mrf.mxu0
    %v3561 = vadd.f32 %v3020, %v3560
    %v3562 = vpop.f32.mrf.mxu0
    %v3563 = vadd.f32 %v3024, %v3562
    %3564 = vmatprep.mubr.bf16.mxu0 0
    %3565 = vmatmul.mubr.bf16.gmra.mxu0 %v2974
    %v3566 = vpop.f32.mrf.mxu0
    %v3567 = vadd.f32 %v3020, %v3566
    %v3568 = vpop.f32.mrf.mxu0
    %v3569 = vadd.f32 %v3024, %v3568
    %v3570 = vpop.f32.mrf.mxu0
    %v3571 = vadd.f32 %v3020, %v3570
    %v3572 = vpop.f32.mrf.mxu0
    %v3573 = vadd.f32 %v3024, %v3572
    %3574 = vdwg.mxu0
    %v3575 = vmax.f32 %v3224, 0.0
    %v3576 = vmax.f32 %v3226, 0.0
    %v3577 = vmax.f32 %v3417, 0.0
    %v3578 = vmax.f32 %v3419, 0.0
    %v3579 = vmax.f32 %v3228, 0.0
    %v3580 = vmax.f32 %v3230, 0.0
    %v3581 = vmax.f32 %v3421, 0.0
    %v3582 = vmax.f32 %v3423, 0.0
    %v3583 = vmax.f32 %v3234, 0.0
    %v3584 = vmax.f32 %v3236, 0.0
    %v3585 = vmax.f32 %v3427, 0.0
    %v3586 = vmax.f32 %v3429, 0.0
    %v3587 = vmax.f32 %v3238, 0.0
    %v3588 = vmax.f32 %v3240, 0.0
    %v3589 = vmax.f32 %v3431, 0.0
    %v3590 = vmax.f32 %v3433, 0.0
    %v3591 = vmax.f32 %v3244, 0.0
    %v3592 = vmax.f32 %v3246, 0.0
    %v3593 = vmax.f32 %v3437, 0.0
    %v3594 = vmax.f32 %v3439, 0.0
    %v3595 = vmax.f32 %v3248, 0.0
    %v3596 = vmax.f32 %v3250, 0.0
    %v3597 = vmax.f32 %v3441, 0.0
    %v3598 = vmax.f32 %v3443, 0.0
    %v3599 = vmax.f32 %v3254, 0.0
    %v3600 = vmax.f32 %v3256, 0.0
    %v3601 = vmax.f32 %v3447, 0.0
    %v3602 = vmax.f32 %v3449, 0.0
    %v3603 = vmax.f32 %v3258, 0.0
    %v3604 = vmax.f32 %v3260, 0.0
    %v3605 = vmax.f32 %v3451, 0.0
    %v3606 = vmax.f32 %v3453, 0.0
    %v3607 = vmax.f32 %v3264, 0.0
    %v3608 = vmax.f32 %v3266, 0.0
    %v3609 = vmax.f32 %v3457, 0.0
    %v3610 = vmax.f32 %v3459, 0.0
    %v3611 = vmax.f32 %v3268, 0.0
    %v3612 = vmax.f32 %v3270, 0.0
    %v3613 = vmax.f32 %v3461, 0.0
    %v3614 = vmax.f32 %v3463, 0.0
    %v3615 = vmax.f32 %v3274, 0.0
    %v3616 = vmax.f32 %v3276, 0.0
    %v3617 = vmax.f32 %v3467, 0.0
    %v3618 = vmax.f32 %v3469, 0.0
    %v3619 = vmax.f32 %v3278, 0.0
    %v3620 = vmax.f32 %v3280, 0.0
    %v3621 = vmax.f32 %v3471, 0.0
    %v3622 = vmax.f32 %v3473, 0.0
    %v3623 = vmax.f32 %v3284, 0.0
    %v3624 = vmax.f32 %v3286, 0.0
    %v3625 = vmax.f32 %v3477, 0.0
    %v3626 = vmax.f32 %v3479, 0.0
    %v3627 = vmax.f32 %v3288, 0.0
    %v3628 = vmax.f32 %v3290, 0.0
    %v3629 = vmax.f32 %v3481, 0.0
    %v3630 = vmax.f32 %v3483, 0.0
    %v3631 = vmax.f32 %v3294, 0.0
    %v3632 = vmax.f32 %v3296, 0.0
    %v3633 = vmax.f32 %v3487, 0.0
    %v3634 = vmax.f32 %v3489, 0.0
    %v3635 = vmax.f32 %v3298, 0.0
    %v3636 = vmax.f32 %v3300, 0.0
    %v3637 = vmax.f32 %v3491, 0.0
    %v3638 = vmax.f32 %v3493, 0.0
    %v3639 = vmax.f32 %v3304, 0.0
    %v3640 = vmax.f32 %v3306, 0.0
    %v3641 = vmax.f32 %v3497, 0.0
    %v3642 = vmax.f32 %v3499, 0.0
    %v3643 = vmax.f32 %v3308, 0.0
    %v3644 = vmax.f32 %v3310, 0.0
    %v3645 = vmax.f32 %v3501, 0.0
    %v3646 = vmax.f32 %v3503, 0.0
    %v3647 = vmax.f32 %v3314, 0.0
    %v3648 = vmax.f32 %v3316, 0.0
    %v3649 = vmax.f32 %v3507, 0.0
    %v3650 = vmax.f32 %v3509, 0.0
    %v3651 = vmax.f32 %v3318, 0.0
    %v3652 = vmax.f32 %v3320, 0.0
    %v3653 = vmax.f32 %v3511, 0.0
    %v3654 = vmax.f32 %v3513, 0.0
    %v3655 = vmax.f32 %v3324, 0.0
    %v3656 = vmax.f32 %v3326, 0.0
    %v3657 = vmax.f32 %v3517, 0.0
    %v3658 = vmax.f32 %v3519, 0.0
    %v3659 = vmax.f32 %v3328, 0.0
    %v3660 = vmax.f32 %v3330, 0.0
    %v3661 = vmax.f32 %v3521, 0.0
    %v3662 = vmax.f32 %v3523, 0.0
    %v3663 = vmax.f32 %v3334, 0.0
    %v3664 = vmax.f32 %v3336, 0.0
    %v3665 = vmax.f32 %v3527, 0.0
    %v3666 = vmax.f32 %v3529, 0.0
    %v3667 = vmax.f32 %v3338, 0.0
    %v3668 = vmax.f32 %v3340, 0.0
    %v3669 = vmax.f32 %v3531, 0.0
    %v3670 = vmax.f32 %v3533, 0.0
    %v3671 = vmax.f32 %v3344, 0.0
    %v3672 = vmax.f32 %v3346, 0.0
    %v3673 = vmax.f32 %v3537, 0.0
    %v3674 = vmax.f32 %v3539, 0.0
    %v3675 = vmax.f32 %v3348, 0.0
    %v3676 = vmax.f32 %v3350, 0.0
    %v3677 = vmax.f32 %v3541, 0.0
    %v3678 = vmax.f32 %v3543, 0.0
    %v3679 = vmax.f32 %v3354, 0.0
    %v3680 = vmax.f32 %v3356, 0.0
    %v3681 = vmax.f32 %v3547, 0.0
    %v3682 = vmax.f32 %v3549, 0.0
    %v3683 = vmax.f32 %v3358, 0.0
    %v3684 = vmax.f32 %v3360, 0.0
    %v3685 = vmax.f32 %v3551, 0.0
    %v3686 = vmax.f32 %v3553, 0.0
    %v3687 = vmax.f32 %v3364, 0.0
    %v3688 = vmax.f32 %v3366, 0.0
    %v3689 = vmax.f32 %v3557, 0.0
    %v3690 = vmax.f32 %v3559, 0.0
    %v3691 = vmax.f32 %v3368, 0.0
    %v3692 = vmax.f32 %v3370, 0.0
    %v3693 = vmax.f32 %v3561, 0.0
    %v3694 = vmax.f32 %v3563, 0.0
    %v3695 = vmax.f32 %v3374, 0.0
    %v3696 = vmax.f32 %v3376, 0.0
    %v3697 = vmax.f32 %v3567, 0.0
    %v3698 = vmax.f32 %v3569, 0.0
    %v3699 = vmax.f32 %v3378, 0.0
    %v3700 = vmax.f32 %v3380, 0.0
    %v3701 = vmax.f32 %v3571, 0.0
    %v3702 = vmax.f32 %v3573, 0.0
    %v3703 = vpack.c.bf16 %v3579, %v3575
    %v3704 = vpack.c.bf16 %v3580, %v3576
    %v3705 = vpack.c.bf16 %v3581, %v3577
    %v3706 = vpack.c.bf16 %v3582, %v3578
    %v3707 = vpack.c.bf16 %v3587, %v3583
    %v3708 = vpack.c.bf16 %v3588, %v3584
    %v3709 = vpack.c.bf16 %v3589, %v3585
    %v3710 = vpack.c.bf16 %v3590, %v3586
    %v3711 = vpack.c.bf16 %v3595, %v3591
    %v3712 = vpack.c.bf16 %v3596, %v3592
    %v3713 = vpack.c.bf16 %v3597, %v3593
    %v3714 = vpack.c.bf16 %v3598, %v3594
    %v3715 = vpack.c.bf16 %v3603, %v3599
    %v3716 = vpack.c.bf16 %v3604, %v3600
    %v3717 = vpack.c.bf16 %v3605, %v3601
    %v3718 = vpack.c.bf16 %v3606, %v3602
    %v3719 = vpack.c.bf16 %v3611, %v3607
    %v3720 = vpack.c.bf16 %v3612, %v3608
    %v3721 = vpack.c.bf16 %v3613, %v3609
    %v3722 = vpack.c.bf16 %v3614, %v3610
    %v3723 = vpack.c.bf16 %v3619, %v3615
    %v3724 = vpack.c.bf16 %v3620, %v3616
    %v3725 = vpack.c.bf16 %v3621, %v3617
    %v3726 = vpack.c.bf16 %v3622, %v3618
    %v3727 = vpack.c.bf16 %v3627, %v3623
    %v3728 = vpack.c.bf16 %v3628, %v3624
    %v3729 = vpack.c.bf16 %v3629, %v3625
    %v3730 = vpack.c.bf16 %v3630, %v3626
    %v3731 = vpack.c.bf16 %v3635, %v3631
    %v3732 = vpack.c.bf16 %v3636, %v3632
    %v3733 = vpack.c.bf16 %v3637, %v3633
    %v3734 = vpack.c.bf16 %v3638, %v3634
    %v3735 = vpack.c.bf16 %v3643, %v3639
    %v3736 = vpack.c.bf16 %v3644, %v3640
    %v3737 = vpack.c.bf16 %v3645, %v3641
    %v3738 = vpack.c.bf16 %v3646, %v3642
    %v3739 = vpack.c.bf16 %v3651, %v3647
    %v3740 = vpack.c.bf16 %v3652, %v3648
    %v3741 = vpack.c.bf16 %v3653, %v3649
    %v3742 = vpack.c.bf16 %v3654, %v3650
    %v3743 = vpack.c.bf16 %v3659, %v3655
    %v3744 = vpack.c.bf16 %v3660, %v3656
    %v3745 = vpack.c.bf16 %v3661, %v3657
    %v3746 = vpack.c.bf16 %v3662, %v3658
    %v3747 = vpack.c.bf16 %v3667, %v3663
    %v3748 = vpack.c.bf16 %v3668, %v3664
    %v3749 = vpack.c.bf16 %v3669, %v3665
    %v3750 = vpack.c.bf16 %v3670, %v3666
    %v3751 = vpack.c.bf16 %v3675, %v3671
    %v3752 = vpack.c.bf16 %v3676, %v3672
    %v3753 = vpack.c.bf16 %v3677, %v3673
    %v3754 = vpack.c.bf16 %v3678, %v3674
    %v3755 = vpack.c.bf16 %v3683, %v3679
    %v3756 = vpack.c.bf16 %v3684, %v3680
    %v3757 = vpack.c.bf16 %v3685, %v3681
    %v3758 = vpack.c.bf16 %v3686, %v3682
    %v3759 = vpack.c.bf16 %v3691, %v3687
    %v3760 = vpack.c.bf16 %v3692, %v3688
    %v3761 = vpack.c.bf16 %v3693, %v3689
    %v3762 = vpack.c.bf16 %v3694, %v3690
    %v3763 = vpack.c.bf16 %v3699, %v3695
    %v3764 = vpack.c.bf16 %v3700, %v3696
    %v3765 = vpack.c.bf16 %v3701, %v3697
    %v3766 = vpack.c.bf16 %v3702, %v3698
    %v3767 = vld [vmem:[%s13] sm:$0xff]
    %v3768 = vld [vmem:[%s13 + $0x8] sm:$0xff]
    %v3769 = vld [vmem:[%s13 + $0x10] sm:$0xff]
    %v3770 = vld [vmem:[%s13 + $0x18] sm:$0xff]
    %v3771 = vld [vmem:[%s13 + $0x20] sm:$0xff]
    %v3772 = vld [vmem:[%s13 + $0x28] sm:$0xff]
    %v3773 = vld [vmem:[%s13 + $0x30] sm:$0xff]
    %v3774 = vld [vmem:[%s13 + $0x38] sm:$0xff]
    %v3775 = vld [vmem:[%s13 + $0x40] sm:$0xff]
    %v3776 = vld [vmem:[%s13 + $0x48] sm:$0xff]
    %v3777 = vld [vmem:[%s13 + $0x50] sm:$0xff]
    %v3778 = vld [vmem:[%s13 + $0x58] sm:$0xff]
    %v3779 = vld [vmem:[%s13 + $0x60] sm:$0xff]
    %v3780 = vld [vmem:[%s13 + $0x68] sm:$0xff]
    %v3781 = vld [vmem:[%s13 + $0x70] sm:$0xff]
    %v3782 = vld [vmem:[%s13 + $0x78] sm:$0xff]
    %v3783 = vld [vmem:[%s13 + $0x80] sm:$0xff]
    %v3784 = vld [vmem:[%s13 + $0x88] sm:$0xff]
    %v3785 = vld [vmem:[%s13 + $0x90] sm:$0xff]
    %v3786 = vld [vmem:[%s13 + $0x98] sm:$0xff]
    %v3787 = vld [vmem:[%s13 + $0xa0] sm:$0xff]
    %v3788 = vld [vmem:[%s13 + $0xa8] sm:$0xff]
    %v3789 = vld [vmem:[%s13 + $0xb0] sm:$0xff]
    %v3790 = vld [vmem:[%s13 + $0xb8] sm:$0xff]
    %v3791 = vld [vmem:[%s13 + $0xc0] sm:$0xff]
    %v3792 = vld [vmem:[%s13 + $0xc8] sm:$0xff]
    %v3793 = vld [vmem:[%s13 + $0xd0] sm:$0xff]
    %v3794 = vld [vmem:[%s13 + $0xd8] sm:$0xff]
    %v3795 = vld [vmem:[%s13 + $0xe0] sm:$0xff]
    %v3796 = vld [vmem:[%s13 + $0xe8] sm:$0xff]
    %v3797 = vld [vmem:[%s13 + $0xf0] sm:$0xff]
    %v3798 = vld [vmem:[%s13 + $0xf8] sm:$0xff]
    %v3799 = vld [vmem:[%s13 + $0x100] sm:$0xff]
    %v3800 = vld [vmem:[%s13 + $0x108] sm:$0xff]
    %v3801 = vld [vmem:[%s13 + $0x110] sm:$0xff]
    %v3802 = vld [vmem:[%s13 + $0x118] sm:$0xff]
    %v3803 = vld [vmem:[%s13 + $0x120] sm:$0xff]
    %v3804 = vld [vmem:[%s13 + $0x128] sm:$0xff]
    %v3805 = vld [vmem:[%s13 + $0x130] sm:$0xff]
    %v3806 = vld [vmem:[%s13 + $0x138] sm:$0xff]
    %v3807 = vld [vmem:[%s13 + $0x140] sm:$0xff]
    %v3808 = vld [vmem:[%s13 + $0x148] sm:$0xff]
    %v3809 = vld [vmem:[%s13 + $0x150] sm:$0xff]
    %v3810 = vld [vmem:[%s13 + $0x158] sm:$0xff]
    %v3811 = vld [vmem:[%s13 + $0x160] sm:$0xff]
    %v3812 = vld [vmem:[%s13 + $0x168] sm:$0xff]
    %v3813 = vld [vmem:[%s13 + $0x170] sm:$0xff]
    %v3814 = vld [vmem:[%s13 + $0x178] sm:$0xff]
    %v3815 = vld [vmem:[%s13 + $0x180] sm:$0xff]
    %v3816 = vld [vmem:[%s13 + $0x188] sm:$0xff]
    %v3817 = vld [vmem:[%s13 + $0x190] sm:$0xff]
    %v3818 = vld [vmem:[%s13 + $0x198] sm:$0xff]
    %v3819 = vld [vmem:[%s13 + $0x1a0] sm:$0xff]
    %v3820 = vld [vmem:[%s13 + $0x1a8] sm:$0xff]
    %v3821 = vld [vmem:[%s13 + $0x1b0] sm:$0xff]
    %v3822 = vld [vmem:[%s13 + $0x1b8] sm:$0xff]
    %v3823 = vld [vmem:[%s13 + $0x1c0] sm:$0xff]
    %v3824 = vld [vmem:[%s13 + $0x1c8] sm:$0xff]
    %v3825 = vld [vmem:[%s13 + $0x1d0] sm:$0xff]
    %v3826 = vld [vmem:[%s13 + $0x1d8] sm:$0xff]
    %v3827 = vld [vmem:[%s13 + $0x1e0] sm:$0xff]
    %v3828 = vld [vmem:[%s13 + $0x1e8] sm:$0xff]
    %v3829 = vld [vmem:[%s13 + $0x1f0] sm:$0xff]
    %v3830 = vld [vmem:[%s13 + $0x1f8] sm:$0xff]
    %v3831 = vld [vmem:[%s14] sm:$0x3]
    %v3833 = vlaneseq
    %v3834 = vshrl.u32 %v3833, 7
    %v3835 = vsub.s32 0, %v3834
    %v3836 = vrot.slane %v3831, %v3835
    %v3837 = vlaneseq
    %v3838 = vshrl.u32 %v3837, 7
    %v3839 = vsub.s32 1, %v3838
    %v3840 = vrot.slane %v3831, %v3839
    %v3907 = vunpack.c.l.b16 %v3767
    %v3908 = vunpack.c.h.b16 %v3767
    %v3909 = vunpack.c.l.b16 %v3768
    %v3910 = vunpack.c.h.b16 %v3768
    %v3911 = vunpack.c.l.b16 %v3769
    %v3912 = vunpack.c.h.b16 %v3769
    %v3913 = vunpack.c.l.b16 %v3770
    %v3914 = vunpack.c.h.b16 %v3770
    %v3915 = vunpack.c.l.b16 %v3771
    %v3916 = vunpack.c.h.b16 %v3771
    %v3917 = vunpack.c.l.b16 %v3772
    %v3918 = vunpack.c.h.b16 %v3772
    %v3919 = vunpack.c.l.b16 %v3773
    %v3920 = vunpack.c.h.b16 %v3773
    %v3921 = vunpack.c.l.b16 %v3774
    %v3922 = vunpack.c.h.b16 %v3774
    %v3923 = vunpack.c.l.b16 %v3775
    %v3924 = vunpack.c.h.b16 %v3775
    %v3925 = vunpack.c.l.b16 %v3776
    %v3926 = vunpack.c.h.b16 %v3776
    %v3927 = vunpack.c.l.b16 %v3777
    %v3928 = vunpack.c.h.b16 %v3777
    %v3929 = vunpack.c.l.b16 %v3778
    %v3930 = vunpack.c.h.b16 %v3778
    %v3931 = vunpack.c.l.b16 %v3779
    %v3932 = vunpack.c.h.b16 %v3779
    %v3933 = vunpack.c.l.b16 %v3780
    %v3934 = vunpack.c.h.b16 %v3780
    %v3935 = vunpack.c.l.b16 %v3781
    %v3936 = vunpack.c.h.b16 %v3781
    %v3937 = vunpack.c.l.b16 %v3782
    %v3938 = vunpack.c.h.b16 %v3782
    %v3939 = vunpack.c.l.b16 %v3783
    %v3940 = vunpack.c.h.b16 %v3783
    %v3941 = vunpack.c.l.b16 %v3784
    %v3942 = vunpack.c.h.b16 %v3784
    %v3943 = vunpack.c.l.b16 %v3785
    %v3944 = vunpack.c.h.b16 %v3785
    %v3945 = vunpack.c.l.b16 %v3786
    %v3946 = vunpack.c.h.b16 %v3786
    %v3947 = vunpack.c.l.b16 %v3787
    %v3948 = vunpack.c.h.b16 %v3787
    %v3949 = vunpack.c.l.b16 %v3788
    %v3950 = vunpack.c.h.b16 %v3788
    %v3951 = vunpack.c.l.b16 %v3789
    %v3952 = vunpack.c.h.b16 %v3789
    %v3953 = vunpack.c.l.b16 %v3790
    %v3954 = vunpack.c.h.b16 %v3790
    %v3955 = vunpack.c.l.b16 %v3791
    %v3956 = vunpack.c.h.b16 %v3791
    %v3957 = vunpack.c.l.b16 %v3792
    %v3958 = vunpack.c.h.b16 %v3792
    %v3959 = vunpack.c.l.b16 %v3793
    %v3960 = vunpack.c.h.b16 %v3793
    %v3961 = vunpack.c.l.b16 %v3794
    %v3962 = vunpack.c.h.b16 %v3794
    %v3963 = vunpack.c.l.b16 %v3795
    %v3964 = vunpack.c.h.b16 %v3795
    %v3965 = vunpack.c.l.b16 %v3796
    %v3966 = vunpack.c.h.b16 %v3796
    %v3967 = vunpack.c.l.b16 %v3797
    %v3968 = vunpack.c.h.b16 %v3797
    %v3969 = vunpack.c.l.b16 %v3798
    %v3970 = vunpack.c.h.b16 %v3798
    %v3971 = vunpack.c.l.b16 %v3799
    %v3972 = vunpack.c.h.b16 %v3799
    %v3973 = vunpack.c.l.b16 %v3800
    %v3974 = vunpack.c.h.b16 %v3800
    %v3975 = vunpack.c.l.b16 %v3801
    %v3976 = vunpack.c.h.b16 %v3801
    %v3977 = vunpack.c.l.b16 %v3802
    %v3978 = vunpack.c.h.b16 %v3802
    %v3979 = vunpack.c.l.b16 %v3803
    %v3980 = vunpack.c.h.b16 %v3803
    %v3981 = vunpack.c.l.b16 %v3804
    %v3982 = vunpack.c.h.b16 %v3804
    %v3983 = vunpack.c.l.b16 %v3805
    %v3984 = vunpack.c.h.b16 %v3805
    %v3985 = vunpack.c.l.b16 %v3806
    %v3986 = vunpack.c.h.b16 %v3806
    %v3987 = vunpack.c.l.b16 %v3807
    %v3988 = vunpack.c.h.b16 %v3807
    %v3989 = vunpack.c.l.b16 %v3808
    %v3990 = vunpack.c.h.b16 %v3808
    %v3991 = vunpack.c.l.b16 %v3809
    %v3992 = vunpack.c.h.b16 %v3809
    %v3993 = vunpack.c.l.b16 %v3810
    %v3994 = vunpack.c.h.b16 %v3810
    %v3995 = vunpack.c.l.b16 %v3811
    %v3996 = vunpack.c.h.b16 %v3811
    %v3997 = vunpack.c.l.b16 %v3812
    %v3998 = vunpack.c.h.b16 %v3812
    %v3999 = vunpack.c.l.b16 %v3813
    %v4000 = vunpack.c.h.b16 %v3813
    %v4001 = vunpack.c.l.b16 %v3814
    %v4002 = vunpack.c.h.b16 %v3814
    %v4003 = vunpack.c.l.b16 %v3815
    %v4004 = vunpack.c.h.b16 %v3815
    %v4005 = vunpack.c.l.b16 %v3816
    %v4006 = vunpack.c.h.b16 %v3816
    %v4007 = vunpack.c.l.b16 %v3817
    %v4008 = vunpack.c.h.b16 %v3817
    %v4009 = vunpack.c.l.b16 %v3818
    %v4010 = vunpack.c.h.b16 %v3818
    %v4011 = vunpack.c.l.b16 %v3819
    %v4012 = vunpack.c.h.b16 %v3819
    %v4013 = vunpack.c.l.b16 %v3820
    %v4014 = vunpack.c.h.b16 %v3820
    %v4015 = vunpack.c.l.b16 %v3821
    %v4016 = vunpack.c.h.b16 %v3821
    %v4017 = vunpack.c.l.b16 %v3822
    %v4018 = vunpack.c.h.b16 %v3822
    %v4019 = vunpack.c.l.b16 %v3823
    %v4020 = vunpack.c.h.b16 %v3823
    %v4021 = vunpack.c.l.b16 %v3824
    %v4022 = vunpack.c.h.b16 %v3824
    %v4023 = vunpack.c.l.b16 %v3825
    %v4024 = vunpack.c.h.b16 %v3825
    %v4025 = vunpack.c.l.b16 %v3826
    %v4026 = vunpack.c.h.b16 %v3826
    %v4027 = vunpack.c.l.b16 %v3827
    %v4028 = vunpack.c.h.b16 %v3827
    %v4029 = vunpack.c.l.b16 %v3828
    %v4030 = vunpack.c.h.b16 %v3828
    %v4031 = vunpack.c.l.b16 %v3829
    %v4032 = vunpack.c.h.b16 %v3829
    %v4033 = vunpack.c.l.b16 %v3830
    %v4034 = vunpack.c.h.b16 %v3830
    %v4035 = vpack.c.b16 %v3909, %v3907
    %v4036 = vpack.c.b16 %v3910, %v3908
    %v4037 = vpack.c.b16 %v3913, %v3911
    %v4038 = vpack.c.b16 %v3914, %v3912
    %v4039 = vpack.c.b16 %v3917, %v3915
    %v4040 = vpack.c.b16 %v3918, %v3916
    %v4041 = vpack.c.b16 %v3921, %v3919
    %v4042 = vpack.c.b16 %v3922, %v3920
    %v4043 = vpack.c.b16 %v3925, %v3923
    %v4044 = vpack.c.b16 %v3926, %v3924
    %v4045 = vpack.c.b16 %v3929, %v3927
    %v4046 = vpack.c.b16 %v3930, %v3928
    %v4047 = vpack.c.b16 %v3933, %v3931
    %v4048 = vpack.c.b16 %v3934, %v3932
    %v4049 = vpack.c.b16 %v3937, %v3935
    %v4050 = vpack.c.b16 %v3938, %v3936
    %v4051 = vpack.c.b16 %v3941, %v3939
    %v4052 = vpack.c.b16 %v3942, %v3940
    %v4053 = vpack.c.b16 %v3945, %v3943
    %v4054 = vpack.c.b16 %v3946, %v3944
    %v4055 = vpack.c.b16 %v3949, %v3947
    %v4056 = vpack.c.b16 %v3950, %v3948
    %v4057 = vpack.c.b16 %v3953, %v3951
    %v4058 = vpack.c.b16 %v3954, %v3952
    %v4059 = vpack.c.b16 %v3957, %v3955
    %v4060 = vpack.c.b16 %v3958, %v3956
    %v4061 = vpack.c.b16 %v3961, %v3959
    %v4062 = vpack.c.b16 %v3962, %v3960
    %v4063 = vpack.c.b16 %v3965, %v3963
    %v4064 = vpack.c.b16 %v3966, %v3964
    %v4065 = vpack.c.b16 %v3969, %v3967
    %v4066 = vpack.c.b16 %v3970, %v3968
    %v4067 = vpack.c.b16 %v3973, %v3971
    %v4068 = vpack.c.b16 %v3974, %v3972
    %v4069 = vpack.c.b16 %v3977, %v3975
    %v4070 = vpack.c.b16 %v3978, %v3976
    %v4071 = vpack.c.b16 %v3981, %v3979
    %v4072 = vpack.c.b16 %v3982, %v3980
    %v4073 = vpack.c.b16 %v3985, %v3983
    %v4074 = vpack.c.b16 %v3986, %v3984
    %v4075 = vpack.c.b16 %v3989, %v3987
    %v4076 = vpack.c.b16 %v3990, %v3988
    %v4077 = vpack.c.b16 %v3993, %v3991
    %v4078 = vpack.c.b16 %v3994, %v3992
    %v4079 = vpack.c.b16 %v3997, %v3995
    %v4080 = vpack.c.b16 %v3998, %v3996
    %v4081 = vpack.c.b16 %v4001, %v3999
    %v4082 = vpack.c.b16 %v4002, %v4000
    %v4083 = vpack.c.b16 %v4005, %v4003
    %v4084 = vpack.c.b16 %v4006, %v4004
    %v4085 = vpack.c.b16 %v4009, %v4007
    %v4086 = vpack.c.b16 %v4010, %v4008
    %v4087 = vpack.c.b16 %v4013, %v4011
    %v4088 = vpack.c.b16 %v4014, %v4012
    %v4089 = vpack.c.b16 %v4017, %v4015
    %v4090 = vpack.c.b16 %v4018, %v4016
    %v4091 = vpack.c.b16 %v4021, %v4019
    %v4092 = vpack.c.b16 %v4022, %v4020
    %v4093 = vpack.c.b16 %v4025, %v4023
    %v4094 = vpack.c.b16 %v4026, %v4024
    %v4095 = vpack.c.b16 %v4029, %v4027
    %v4096 = vpack.c.b16 %v4030, %v4028
    %v4097 = vpack.c.b16 %v4033, %v4031
    %v4098 = vpack.c.b16 %v4034, %v4032
    %4163 = vmatprep.subr.bf16.mxu0 %v4050
    %4164 = vmatpush1.bf16.msra.mxu0 %v4049
    %4165 = vmatprep.subr.bf16.mxu0 %v4048
    %4166 = vmatpush1.bf16.msra.mxu0 %v4047
    %4167 = vmatprep.subr.bf16.mxu0 %v4046
    %4168 = vmatpush1.bf16.msra.mxu0 %v4045
    %4169 = vmatprep.subr.bf16.mxu0 %v4044
    %4170 = vmatpush1.bf16.msra.mxu0 %v4043
    %4171 = vmatprep.subr.bf16.mxu0 %v4042
    %4172 = vmatpush1.bf16.msra.mxu0 %v4041
    %4173 = vmatprep.subr.bf16.mxu0 %v4040
    %4174 = vmatpush1.bf16.msra.mxu0 %v4039
    %4175 = vmatprep.subr.bf16.mxu0 %v4038
    %4176 = vmatpush1.bf16.msra.mxu0 %v4037
    %4177 = vmatprep.subr.bf16.mxu0 %v4036
    %4178 = vmatpush1.bf16.msra.mxu0 %v4035
    %4179 = vmatprep.subr.bf16.mxu0 %v4066
    %4180 = vmatpush2.bf16.msra.mxu0 %v4065
    %4181 = vmatprep.subr.bf16.mxu0 %v4064
    %4182 = vmatpush2.bf16.msra.mxu0 %v4063
    %4183 = vmatprep.subr.bf16.mxu0 %v4062
    %4184 = vmatpush2.bf16.msra.mxu0 %v4061
    %4185 = vmatprep.subr.bf16.mxu0 %v4060
    %4186 = vmatpush2.bf16.msra.mxu0 %v4059
    %4187 = vmatprep.subr.bf16.mxu0 %v4058
    %4188 = vmatpush2.bf16.msra.mxu0 %v4057
    %4189 = vmatprep.subr.bf16.mxu0 %v4056
    %4190 = vmatpush2.bf16.msra.mxu0 %v4055
    %4191 = vmatprep.subr.bf16.mxu0 %v4054
    %4192 = vmatpush2.bf16.msra.mxu0 %v4053
    %4193 = vmatprep.subr.bf16.mxu0 %v4052
    %4194 = vmatpush2.bf16.msra.mxu0 %v4051
    %4195 = vmatprep.mubr.bf16.mxu0 %v3704
    %4196 = vmatmul.mubr.bf16.gmra.mxu0 %v3703
    %v4197 = vpop.f32.mrf.mxu0
    %v4198 = vadd.f32 %v3836, %v4197
    %v4199 = vpop.f32.mrf.mxu0
    %v4200 = vadd.f32 %v3840, %v4199
    %v4201 = vpop.f32.mrf.mxu0
    %v4202 = vadd.f32 %v3836, %v4201
    %v4203 = vpop.f32.mrf.mxu0
    %v4204 = vadd.f32 %v3840, %v4203
    %4205 = vmatprep.mubr.bf16.mxu0 %v3708
    %4206 = vmatmul.mubr.bf16.gmra.mxu0 %v3707
    %v4207 = vpop.f32.mrf.mxu0
    %v4208 = vadd.f32 %v3836, %v4207
    %v4209 = vpop.f32.mrf.mxu0
    %v4210 = vadd.f32 %v3840, %v4209
    %v4211 = vpop.f32.mrf.mxu0
    %v4212 = vadd.f32 %v3836, %v4211
    %v4213 = vpop.f32.mrf.mxu0
    %v4214 = vadd.f32 %v3840, %v4213
    %4215 = vmatprep.mubr.bf16.mxu0 %v3712
    %4216 = vmatmul.mubr.bf16.gmra.mxu0 %v3711
    %v4217 = vpop.f32.mrf.mxu0
    %v4218 = vadd.f32 %v3836, %v4217
    %v4219 = vpop.f32.mrf.mxu0
    %v4220 = vadd.f32 %v3840, %v4219
    %v4221 = vpop.f32.mrf.mxu0
    %v4222 = vadd.f32 %v3836, %v4221
    %v4223 = vpop.f32.mrf.mxu0
    %v4224 = vadd.f32 %v3840, %v4223
    %4225 = vmatprep.mubr.bf16.mxu0 %v3716
    %4226 = vmatmul.mubr.bf16.gmra.mxu0 %v3715
    %v4227 = vpop.f32.mrf.mxu0
    %v4228 = vadd.f32 %v3836, %v4227
    %v4229 = vpop.f32.mrf.mxu0
    %v4230 = vadd.f32 %v3840, %v4229
    %v4231 = vpop.f32.mrf.mxu0
    %v4232 = vadd.f32 %v3836, %v4231
    %v4233 = vpop.f32.mrf.mxu0
    %v4234 = vadd.f32 %v3840, %v4233
    %4235 = vmatprep.mubr.bf16.mxu0 %v3720
    %4236 = vmatmul.mubr.bf16.gmra.mxu0 %v3719
    %v4237 = vpop.f32.mrf.mxu0
    %v4238 = vadd.f32 %v3836, %v4237
    %v4239 = vpop.f32.mrf.mxu0
    %v4240 = vadd.f32 %v3840, %v4239
    %v4241 = vpop.f32.mrf.mxu0
    %v4242 = vadd.f32 %v3836, %v4241
    %v4243 = vpop.f32.mrf.mxu0
    %v4244 = vadd.f32 %v3840, %v4243
    %4245 = vmatprep.mubr.bf16.mxu0 %v3724
    %4246 = vmatmul.mubr.bf16.gmra.mxu0 %v3723
    %v4247 = vpop.f32.mrf.mxu0
    %v4248 = vadd.f32 %v3836, %v4247
    %v4249 = vpop.f32.mrf.mxu0
    %v4250 = vadd.f32 %v3840, %v4249
    %v4251 = vpop.f32.mrf.mxu0
    %v4252 = vadd.f32 %v3836, %v4251
    %v4253 = vpop.f32.mrf.mxu0
    %v4254 = vadd.f32 %v3840, %v4253
    %4255 = vmatprep.mubr.bf16.mxu0 %v3728
    %4256 = vmatmul.mubr.bf16.gmra.mxu0 %v3727
    %v4257 = vpop.f32.mrf.mxu0
    %v4258 = vadd.f32 %v3836, %v4257
    %v4259 = vpop.f32.mrf.mxu0
    %v4260 = vadd.f32 %v3840, %v4259
    %v4261 = vpop.f32.mrf.mxu0
    %v4262 = vadd.f32 %v3836, %v4261
    %v4263 = vpop.f32.mrf.mxu0
    %v4264 = vadd.f32 %v3840, %v4263
    %4265 = vmatprep.mubr.bf16.mxu0 %v3732
    %4266 = vmatmul.mubr.bf16.gmra.mxu0 %v3731
    %v4267 = vpop.f32.mrf.mxu0
    %v4268 = vadd.f32 %v3836, %v4267
    %v4269 = vpop.f32.mrf.mxu0
    %v4270 = vadd.f32 %v3840, %v4269
    %v4271 = vpop.f32.mrf.mxu0
    %v4272 = vadd.f32 %v3836, %v4271
    %v4273 = vpop.f32.mrf.mxu0
    %v4274 = vadd.f32 %v3840, %v4273
    %4275 = vmatprep.mubr.bf16.mxu0 %v3736
    %4276 = vmatmul.mubr.bf16.gmra.mxu0 %v3735
    %v4277 = vpop.f32.mrf.mxu0
    %v4278 = vadd.f32 %v3836, %v4277
    %v4279 = vpop.f32.mrf.mxu0
    %v4280 = vadd.f32 %v3840, %v4279
    %v4281 = vpop.f32.mrf.mxu0
    %v4282 = vadd.f32 %v3836, %v4281
    %v4283 = vpop.f32.mrf.mxu0
    %v4284 = vadd.f32 %v3840, %v4283
    %4285 = vmatprep.mubr.bf16.mxu0 %v3740
    %4286 = vmatmul.mubr.bf16.gmra.mxu0 %v3739
    %v4287 = vpop.f32.mrf.mxu0
    %v4288 = vadd.f32 %v3836, %v4287
    %v4289 = vpop.f32.mrf.mxu0
    %v4290 = vadd.f32 %v3840, %v4289
    %v4291 = vpop.f32.mrf.mxu0
    %v4292 = vadd.f32 %v3836, %v4291
    %v4293 = vpop.f32.mrf.mxu0
    %v4294 = vadd.f32 %v3840, %v4293
    %4295 = vmatprep.mubr.bf16.mxu0 %v3744
    %4296 = vmatmul.mubr.bf16.gmra.mxu0 %v3743
    %v4297 = vpop.f32.mrf.mxu0
    %v4298 = vadd.f32 %v3836, %v4297
    %v4299 = vpop.f32.mrf.mxu0
    %v4300 = vadd.f32 %v3840, %v4299
    %v4301 = vpop.f32.mrf.mxu0
    %v4302 = vadd.f32 %v3836, %v4301
    %v4303 = vpop.f32.mrf.mxu0
    %v4304 = vadd.f32 %v3840, %v4303
    %4305 = vmatprep.mubr.bf16.mxu0 %v3748
    %4306 = vmatmul.mubr.bf16.gmra.mxu0 %v3747
    %v4307 = vpop.f32.mrf.mxu0
    %v4308 = vadd.f32 %v3836, %v4307
    %v4309 = vpop.f32.mrf.mxu0
    %v4310 = vadd.f32 %v3840, %v4309
    %v4311 = vpop.f32.mrf.mxu0
    %v4312 = vadd.f32 %v3836, %v4311
    %v4313 = vpop.f32.mrf.mxu0
    %v4314 = vadd.f32 %v3840, %v4313
    %4315 = vmatprep.mubr.bf16.mxu0 %v3752
    %4316 = vmatmul.mubr.bf16.gmra.mxu0 %v3751
    %v4317 = vpop.f32.mrf.mxu0
    %v4318 = vadd.f32 %v3836, %v4317
    %v4319 = vpop.f32.mrf.mxu0
    %v4320 = vadd.f32 %v3840, %v4319
    %v4321 = vpop.f32.mrf.mxu0
    %v4322 = vadd.f32 %v3836, %v4321
    %v4323 = vpop.f32.mrf.mxu0
    %v4324 = vadd.f32 %v3840, %v4323
    %4325 = vmatprep.mubr.bf16.mxu0 %v3756
    %4326 = vmatmul.mubr.bf16.gmra.mxu0 %v3755
    %v4327 = vpop.f32.mrf.mxu0
    %v4328 = vadd.f32 %v3836, %v4327
    %v4329 = vpop.f32.mrf.mxu0
    %v4330 = vadd.f32 %v3840, %v4329
    %v4331 = vpop.f32.mrf.mxu0
    %v4332 = vadd.f32 %v3836, %v4331
    %v4333 = vpop.f32.mrf.mxu0
    %v4334 = vadd.f32 %v3840, %v4333
    %4335 = vmatprep.mubr.bf16.mxu0 %v3760
    %4336 = vmatmul.mubr.bf16.gmra.mxu0 %v3759
    %v4337 = vpop.f32.mrf.mxu0
    %v4338 = vadd.f32 %v3836, %v4337
    %v4339 = vpop.f32.mrf.mxu0
    %v4340 = vadd.f32 %v3840, %v4339
    %v4341 = vpop.f32.mrf.mxu0
    %v4342 = vadd.f32 %v3836, %v4341
    %v4343 = vpop.f32.mrf.mxu0
    %v4344 = vadd.f32 %v3840, %v4343
    %4345 = vmatprep.mubr.bf16.mxu0 %v3764
    %4346 = vmatmul.mubr.bf16.gmra.mxu0 %v3763
    %v4347 = vpop.f32.mrf.mxu0
    %v4348 = vadd.f32 %v3836, %v4347
    %v4349 = vpop.f32.mrf.mxu0
    %v4350 = vadd.f32 %v3840, %v4349
    %v4351 = vpop.f32.mrf.mxu0
    %v4352 = vadd.f32 %v3836, %v4351
    %v4353 = vpop.f32.mrf.mxu0
    %v4354 = vadd.f32 %v3840, %v4353
    %4355 = vdwg.mxu0
    %4356 = vmatprep.subr.bf16.mxu0 %v4082
    %4357 = vmatpush1.bf16.msra.mxu0 %v4081
    %4358 = vmatprep.subr.bf16.mxu0 %v4080
    %4359 = vmatpush1.bf16.msra.mxu0 %v4079
    %4360 = vmatprep.subr.bf16.mxu0 %v4078
    %4361 = vmatpush1.bf16.msra.mxu0 %v4077
    %4362 = vmatprep.subr.bf16.mxu0 %v4076
    %4363 = vmatpush1.bf16.msra.mxu0 %v4075
    %4364 = vmatprep.subr.bf16.mxu0 %v4074
    %4365 = vmatpush1.bf16.msra.mxu0 %v4073
    %4366 = vmatprep.subr.bf16.mxu0 %v4072
    %4367 = vmatpush1.bf16.msra.mxu0 %v4071
    %4368 = vmatprep.subr.bf16.mxu0 %v4070
    %4369 = vmatpush1.bf16.msra.mxu0 %v4069
    %4370 = vmatprep.subr.bf16.mxu0 %v4068
    %4371 = vmatpush1.bf16.msra.mxu0 %v4067
    %4372 = vmatprep.subr.bf16.mxu0 %v4098
    %4373 = vmatpush2.bf16.msra.mxu0 %v4097
    %4374 = vmatprep.subr.bf16.mxu0 %v4096
    %4375 = vmatpush2.bf16.msra.mxu0 %v4095
    %4376 = vmatprep.subr.bf16.mxu0 %v4094
    %4377 = vmatpush2.bf16.msra.mxu0 %v4093
    %4378 = vmatprep.subr.bf16.mxu0 %v4092
    %4379 = vmatpush2.bf16.msra.mxu0 %v4091
    %4380 = vmatprep.subr.bf16.mxu0 %v4090
    %4381 = vmatpush2.bf16.msra.mxu0 %v4089
    %4382 = vmatprep.subr.bf16.mxu0 %v4088
    %4383 = vmatpush2.bf16.msra.mxu0 %v4087
    %4384 = vmatprep.subr.bf16.mxu0 %v4086
    %4385 = vmatpush2.bf16.msra.mxu0 %v4085
    %4386 = vmatprep.subr.bf16.mxu0 %v4084
    %4387 = vmatpush2.bf16.msra.mxu0 %v4083
    %4388 = vmatprep.mubr.bf16.mxu0 %v3706
    %4389 = vmatmul.mubr.bf16.gmra.mxu0 %v3705
    %v4390 = vpop.f32.mrf.mxu0
    %v4391 = vadd.f32 %v4198, %v4390
    %v4392 = vpop.f32.mrf.mxu0
    %v4393 = vadd.f32 %v4200, %v4392
    %v4394 = vpop.f32.mrf.mxu0
    %v4395 = vadd.f32 %v4202, %v4394
    %v4396 = vpop.f32.mrf.mxu0
    %v4397 = vadd.f32 %v4204, %v4396
    %4398 = vmatprep.mubr.bf16.mxu0 %v3710
    %4399 = vmatmul.mubr.bf16.gmra.mxu0 %v3709
    %v4400 = vpop.f32.mrf.mxu0
    %v4401 = vadd.f32 %v4208, %v4400
    %v4402 = vpop.f32.mrf.mxu0
    %v4403 = vadd.f32 %v4210, %v4402
    %v4404 = vpop.f32.mrf.mxu0
    %v4405 = vadd.f32 %v4212, %v4404
    %v4406 = vpop.f32.mrf.mxu0
    %v4407 = vadd.f32 %v4214, %v4406
    %4408 = vmatprep.mubr.bf16.mxu0 %v3714
    %4409 = vmatmul.mubr.bf16.gmra.mxu0 %v3713
    %v4410 = vpop.f32.mrf.mxu0
    %v4411 = vadd.f32 %v4218, %v4410
    %v4412 = vpop.f32.mrf.mxu0
    %v4413 = vadd.f32 %v4220, %v4412
    %v4414 = vpop.f32.mrf.mxu0
    %v4415 = vadd.f32 %v4222, %v4414
    %v4416 = vpop.f32.mrf.mxu0
    %v4417 = vadd.f32 %v4224, %v4416
    %4418 = vmatprep.mubr.bf16.mxu0 %v3718
    %4419 = vmatmul.mubr.bf16.gmra.mxu0 %v3717
    %v4420 = vpop.f32.mrf.mxu0
    %v4421 = vadd.f32 %v4228, %v4420
    %v4422 = vpop.f32.mrf.mxu0
    %v4423 = vadd.f32 %v4230, %v4422
    %v4424 = vpop.f32.mrf.mxu0
    %v4425 = vadd.f32 %v4232, %v4424
    %v4426 = vpop.f32.mrf.mxu0
    %v4427 = vadd.f32 %v4234, %v4426
    %4428 = vmatprep.mubr.bf16.mxu0 %v3722
    %4429 = vmatmul.mubr.bf16.gmra.mxu0 %v3721
    %v4430 = vpop.f32.mrf.mxu0
    %v4431 = vadd.f32 %v4238, %v4430
    %v4432 = vpop.f32.mrf.mxu0
    %v4433 = vadd.f32 %v4240, %v4432
    %v4434 = vpop.f32.mrf.mxu0
    %v4435 = vadd.f32 %v4242, %v4434
    %v4436 = vpop.f32.mrf.mxu0
    %v4437 = vadd.f32 %v4244, %v4436
    %4438 = vmatprep.mubr.bf16.mxu0 %v3726
    %4439 = vmatmul.mubr.bf16.gmra.mxu0 %v3725
    %v4440 = vpop.f32.mrf.mxu0
    %v4441 = vadd.f32 %v4248, %v4440
    %v4442 = vpop.f32.mrf.mxu0
    %v4443 = vadd.f32 %v4250, %v4442
    %v4444 = vpop.f32.mrf.mxu0
    %v4445 = vadd.f32 %v4252, %v4444
    %v4446 = vpop.f32.mrf.mxu0
    %v4447 = vadd.f32 %v4254, %v4446
    %4448 = vmatprep.mubr.bf16.mxu0 %v3730
    %4449 = vmatmul.mubr.bf16.gmra.mxu0 %v3729
    %v4450 = vpop.f32.mrf.mxu0
    %v4451 = vadd.f32 %v4258, %v4450
    %v4452 = vpop.f32.mrf.mxu0
    %v4453 = vadd.f32 %v4260, %v4452
    %v4454 = vpop.f32.mrf.mxu0
    %v4455 = vadd.f32 %v4262, %v4454
    %v4456 = vpop.f32.mrf.mxu0
    %v4457 = vadd.f32 %v4264, %v4456
    %4458 = vmatprep.mubr.bf16.mxu0 %v3734
    %4459 = vmatmul.mubr.bf16.gmra.mxu0 %v3733
    %v4460 = vpop.f32.mrf.mxu0
    %v4461 = vadd.f32 %v4268, %v4460
    %v4462 = vpop.f32.mrf.mxu0
    %v4463 = vadd.f32 %v4270, %v4462
    %v4464 = vpop.f32.mrf.mxu0
    %v4465 = vadd.f32 %v4272, %v4464
    %v4466 = vpop.f32.mrf.mxu0
    %v4467 = vadd.f32 %v4274, %v4466
    %4468 = vmatprep.mubr.bf16.mxu0 %v3738
    %4469 = vmatmul.mubr.bf16.gmra.mxu0 %v3737
    %v4470 = vpop.f32.mrf.mxu0
    %v4471 = vadd.f32 %v4278, %v4470
    %v4472 = vpop.f32.mrf.mxu0
    %v4473 = vadd.f32 %v4280, %v4472
    %v4474 = vpop.f32.mrf.mxu0
    %v4475 = vadd.f32 %v4282, %v4474
    %v4476 = vpop.f32.mrf.mxu0
    %v4477 = vadd.f32 %v4284, %v4476
    %4478 = vmatprep.mubr.bf16.mxu0 %v3742
    %4479 = vmatmul.mubr.bf16.gmra.mxu0 %v3741
    %v4480 = vpop.f32.mrf.mxu0
    %v4481 = vadd.f32 %v4288, %v4480
    %v4482 = vpop.f32.mrf.mxu0
    %v4483 = vadd.f32 %v4290, %v4482
    %v4484 = vpop.f32.mrf.mxu0
    %v4485 = vadd.f32 %v4292, %v4484
    %v4486 = vpop.f32.mrf.mxu0
    %v4487 = vadd.f32 %v4294, %v4486
    %4488 = vmatprep.mubr.bf16.mxu0 %v3746
    %4489 = vmatmul.mubr.bf16.gmra.mxu0 %v3745
    %v4490 = vpop.f32.mrf.mxu0
    %v4491 = vadd.f32 %v4298, %v4490
    %v4492 = vpop.f32.mrf.mxu0
    %v4493 = vadd.f32 %v4300, %v4492
    %v4494 = vpop.f32.mrf.mxu0
    %v4495 = vadd.f32 %v4302, %v4494
    %v4496 = vpop.f32.mrf.mxu0
    %v4497 = vadd.f32 %v4304, %v4496
    %4498 = vmatprep.mubr.bf16.mxu0 %v3750
    %4499 = vmatmul.mubr.bf16.gmra.mxu0 %v3749
    %v4500 = vpop.f32.mrf.mxu0
    %v4501 = vadd.f32 %v4308, %v4500
    %v4502 = vpop.f32.mrf.mxu0
    %v4503 = vadd.f32 %v4310, %v4502
    %v4504 = vpop.f32.mrf.mxu0
    %v4505 = vadd.f32 %v4312, %v4504
    %v4506 = vpop.f32.mrf.mxu0
    %v4507 = vadd.f32 %v4314, %v4506
    %4508 = vmatprep.mubr.bf16.mxu0 %v3754
    %4509 = vmatmul.mubr.bf16.gmra.mxu0 %v3753
    %v4510 = vpop.f32.mrf.mxu0
    %v4511 = vadd.f32 %v4318, %v4510
    %v4512 = vpop.f32.mrf.mxu0
    %v4513 = vadd.f32 %v4320, %v4512
    %v4514 = vpop.f32.mrf.mxu0
    %v4515 = vadd.f32 %v4322, %v4514
    %v4516 = vpop.f32.mrf.mxu0
    %v4517 = vadd.f32 %v4324, %v4516
    %4518 = vmatprep.mubr.bf16.mxu0 %v3758
    %4519 = vmatmul.mubr.bf16.gmra.mxu0 %v3757
    %v4520 = vpop.f32.mrf.mxu0
    %v4521 = vadd.f32 %v4328, %v4520
    %v4522 = vpop.f32.mrf.mxu0
    %v4523 = vadd.f32 %v4330, %v4522
    %v4524 = vpop.f32.mrf.mxu0
    %v4525 = vadd.f32 %v4332, %v4524
    %v4526 = vpop.f32.mrf.mxu0
    %v4527 = vadd.f32 %v4334, %v4526
    %4528 = vmatprep.mubr.bf16.mxu0 %v3762
    %4529 = vmatmul.mubr.bf16.gmra.mxu0 %v3761
    %v4530 = vpop.f32.mrf.mxu0
    %v4531 = vadd.f32 %v4338, %v4530
    %v4532 = vpop.f32.mrf.mxu0
    %v4533 = vadd.f32 %v4340, %v4532
    %v4534 = vpop.f32.mrf.mxu0
    %v4535 = vadd.f32 %v4342, %v4534
    %v4536 = vpop.f32.mrf.mxu0
    %v4537 = vadd.f32 %v4344, %v4536
    %4538 = vmatprep.mubr.bf16.mxu0 %v3766
    %4539 = vmatmul.mubr.bf16.gmra.mxu0 %v3765
    %v4540 = vpop.f32.mrf.mxu0
    %v4541 = vadd.f32 %v4348, %v4540
    %v4542 = vpop.f32.mrf.mxu0
    %v4543 = vadd.f32 %v4350, %v4542
    %v4544 = vpop.f32.mrf.mxu0
    %v4545 = vadd.f32 %v4352, %v4544
    %v4546 = vpop.f32.mrf.mxu0
    %v4547 = vadd.f32 %v4354, %v4546
    %4548 = vdwg.mxu0
    %v4549 = vmul.f32 %v4391, 0.5
    %v4550 = vmul.f32 %v4393, 0.5
    %v4551 = vmul.f32 %v4395, 0.5
    %v4552 = vmul.f32 %v4397, 0.5
    %v4553 = vmul.f32 %v4401, 0.5
    %v4554 = vmul.f32 %v4403, 0.5
    %v4555 = vmul.f32 %v4405, 0.5
    %v4556 = vmul.f32 %v4407, 0.5
    %v4557 = vmul.f32 %v4411, 0.5
    %v4558 = vmul.f32 %v4413, 0.5
    %v4559 = vmul.f32 %v4415, 0.5
    %v4560 = vmul.f32 %v4417, 0.5
    %v4561 = vmul.f32 %v4421, 0.5
    %v4562 = vmul.f32 %v4423, 0.5
    %v4563 = vmul.f32 %v4425, 0.5
    %v4564 = vmul.f32 %v4427, 0.5
    %v4565 = vmul.f32 %v4431, 0.5
    %v4566 = vmul.f32 %v4433, 0.5
    %v4567 = vmul.f32 %v4435, 0.5
    %v4568 = vmul.f32 %v4437, 0.5
    %v4569 = vmul.f32 %v4441, 0.5
    %v4570 = vmul.f32 %v4443, 0.5
    %v4571 = vmul.f32 %v4445, 0.5
    %v4572 = vmul.f32 %v4447, 0.5
    %v4573 = vmul.f32 %v4451, 0.5
    %v4574 = vmul.f32 %v4453, 0.5
    %v4575 = vmul.f32 %v4455, 0.5
    %v4576 = vmul.f32 %v4457, 0.5
    %v4577 = vmul.f32 %v4461, 0.5
    %v4578 = vmul.f32 %v4463, 0.5
    %v4579 = vmul.f32 %v4465, 0.5
    %v4580 = vmul.f32 %v4467, 0.5
    %v4581 = vmul.f32 %v4471, 0.5
    %v4582 = vmul.f32 %v4473, 0.5
    %v4583 = vmul.f32 %v4475, 0.5
    %v4584 = vmul.f32 %v4477, 0.5
    %v4585 = vmul.f32 %v4481, 0.5
    %v4586 = vmul.f32 %v4483, 0.5
    %v4587 = vmul.f32 %v4485, 0.5
    %v4588 = vmul.f32 %v4487, 0.5
    %v4589 = vmul.f32 %v4491, 0.5
    %v4590 = vmul.f32 %v4493, 0.5
    %v4591 = vmul.f32 %v4495, 0.5
    %v4592 = vmul.f32 %v4497, 0.5
    %v4593 = vmul.f32 %v4501, 0.5
    %v4594 = vmul.f32 %v4503, 0.5
    %v4595 = vmul.f32 %v4505, 0.5
    %v4596 = vmul.f32 %v4507, 0.5
    %v4597 = vmul.f32 %v4511, 0.5
    %v4598 = vmul.f32 %v4513, 0.5
    %v4599 = vmul.f32 %v4515, 0.5
    %v4600 = vmul.f32 %v4517, 0.5
    %v4601 = vmul.f32 %v4521, 0.5
    %v4602 = vmul.f32 %v4523, 0.5
    %v4603 = vmul.f32 %v4525, 0.5
    %v4604 = vmul.f32 %v4527, 0.5
    %v4605 = vmul.f32 %v4531, 0.5
    %v4606 = vmul.f32 %v4533, 0.5
    %v4607 = vmul.f32 %v4535, 0.5
    %v4608 = vmul.f32 %v4537, 0.5
    %v4609 = vmul.f32 %v4541, 0.5
    %v4610 = vmul.f32 %v4543, 0.5
    %v4611 = vmul.f32 %v4545, 0.5
    %v4612 = vmul.f32 %v4547, 0.5
    %v4613 = vtanh.pop %v4549
    %v4614 = vtanh.pop %v4550
    %v4615 = vtanh.pop %v4551
    %v4616 = vtanh.pop %v4552
    %v4617 = vtanh.pop %v4553
    %v4618 = vtanh.pop %v4554
    %v4619 = vtanh.pop %v4555
    %v4620 = vtanh.pop %v4556
    %v4621 = vtanh.pop %v4557
    %v4622 = vtanh.pop %v4558
    %v4623 = vtanh.pop %v4559
    %v4624 = vtanh.pop %v4560
    %v4625 = vtanh.pop %v4561
    %v4626 = vtanh.pop %v4562
    %v4627 = vtanh.pop %v4563
    %v4628 = vtanh.pop %v4564
    %v4629 = vtanh.pop %v4565
    %v4630 = vtanh.pop %v4566
    %v4631 = vtanh.pop %v4567
    %v4632 = vtanh.pop %v4568
    %v4633 = vtanh.pop %v4569
    %v4634 = vtanh.pop %v4570
    %v4635 = vtanh.pop %v4571
    %v4636 = vtanh.pop %v4572
    %v4637 = vtanh.pop %v4573
    %v4638 = vtanh.pop %v4574
    %v4639 = vtanh.pop %v4575
    %v4640 = vtanh.pop %v4576
    %v4641 = vtanh.pop %v4577
    %v4642 = vtanh.pop %v4578
    %v4643 = vtanh.pop %v4579
    %v4644 = vtanh.pop %v4580
    %v4645 = vtanh.pop %v4581
    %v4646 = vtanh.pop %v4582
    %v4647 = vtanh.pop %v4583
    %v4648 = vtanh.pop %v4584
    %v4649 = vtanh.pop %v4585
    %v4650 = vtanh.pop %v4586
    %v4651 = vtanh.pop %v4587
    %v4652 = vtanh.pop %v4588
    %v4653 = vtanh.pop %v4589
    %v4654 = vtanh.pop %v4590
    %v4655 = vtanh.pop %v4591
    %v4656 = vtanh.pop %v4592
    %v4657 = vtanh.pop %v4593
    %v4658 = vtanh.pop %v4594
    %v4659 = vtanh.pop %v4595
    %v4660 = vtanh.pop %v4596
    %v4661 = vtanh.pop %v4597
    %v4662 = vtanh.pop %v4598
    %v4663 = vtanh.pop %v4599
    %v4664 = vtanh.pop %v4600
    %v4665 = vtanh.pop %v4601
    %v4666 = vtanh.pop %v4602
    %v4667 = vtanh.pop %v4603
    %v4668 = vtanh.pop %v4604
    %v4669 = vtanh.pop %v4605
    %v4670 = vtanh.pop %v4606
    %v4671 = vtanh.pop %v4607
    %v4672 = vtanh.pop %v4608
    %v4673 = vtanh.pop %v4609
    %v4674 = vtanh.pop %v4610
    %v4675 = vtanh.pop %v4611
    %v4676 = vtanh.pop %v4612
    %v4677 = vmul.f32 %v4613, 0.5
    %v4678 = vmul.f32 %v4614, 0.5
    %v4679 = vmul.f32 %v4615, 0.5
    %v4680 = vmul.f32 %v4616, 0.5
    %v4681 = vmul.f32 %v4617, 0.5
    %v4682 = vmul.f32 %v4618, 0.5
    %v4683 = vmul.f32 %v4619, 0.5
    %v4684 = vmul.f32 %v4620, 0.5
    %v4685 = vmul.f32 %v4621, 0.5
    %v4686 = vmul.f32 %v4622, 0.5
    %v4687 = vmul.f32 %v4623, 0.5
    %v4688 = vmul.f32 %v4624, 0.5
    %v4689 = vmul.f32 %v4625, 0.5
    %v4690 = vmul.f32 %v4626, 0.5
    %v4691 = vmul.f32 %v4627, 0.5
    %v4692 = vmul.f32 %v4628, 0.5
    %v4693 = vmul.f32 %v4629, 0.5
    %v4694 = vmul.f32 %v4630, 0.5
    %v4695 = vmul.f32 %v4631, 0.5
    %v4696 = vmul.f32 %v4632, 0.5
    %v4697 = vmul.f32 %v4633, 0.5
    %v4698 = vmul.f32 %v4634, 0.5
    %v4699 = vmul.f32 %v4635, 0.5
    %v4700 = vmul.f32 %v4636, 0.5
    %v4701 = vmul.f32 %v4637, 0.5
    %v4702 = vmul.f32 %v4638, 0.5
    %v4703 = vmul.f32 %v4639, 0.5
    %v4704 = vmul.f32 %v4640, 0.5
    %v4705 = vmul.f32 %v4641, 0.5
    %v4706 = vmul.f32 %v4642, 0.5
    %v4707 = vmul.f32 %v4643, 0.5
    %v4708 = vmul.f32 %v4644, 0.5
    %v4709 = vmul.f32 %v4645, 0.5
    %v4710 = vmul.f32 %v4646, 0.5
    %v4711 = vmul.f32 %v4647, 0.5
    %v4712 = vmul.f32 %v4648, 0.5
    %v4713 = vmul.f32 %v4649, 0.5
    %v4714 = vmul.f32 %v4650, 0.5
    %v4715 = vmul.f32 %v4651, 0.5
    %v4716 = vmul.f32 %v4652, 0.5
    %v4717 = vmul.f32 %v4653, 0.5
    %v4718 = vmul.f32 %v4654, 0.5
    %v4719 = vmul.f32 %v4655, 0.5
    %v4720 = vmul.f32 %v4656, 0.5
    %v4721 = vmul.f32 %v4657, 0.5
    %v4722 = vmul.f32 %v4658, 0.5
    %v4723 = vmul.f32 %v4659, 0.5
    %v4724 = vmul.f32 %v4660, 0.5
    %v4725 = vmul.f32 %v4661, 0.5
    %v4726 = vmul.f32 %v4662, 0.5
    %v4727 = vmul.f32 %v4663, 0.5
    %v4728 = vmul.f32 %v4664, 0.5
    %v4729 = vmul.f32 %v4665, 0.5
    %v4730 = vmul.f32 %v4666, 0.5
    %v4731 = vmul.f32 %v4667, 0.5
    %v4732 = vmul.f32 %v4668, 0.5
    %v4733 = vmul.f32 %v4669, 0.5
    %v4734 = vmul.f32 %v4670, 0.5
    %v4735 = vmul.f32 %v4671, 0.5
    %v4736 = vmul.f32 %v4672, 0.5
    %v4737 = vmul.f32 %v4673, 0.5
    %v4738 = vmul.f32 %v4674, 0.5
    %v4739 = vmul.f32 %v4675, 0.5
    %v4740 = vmul.f32 %v4676, 0.5
    %v4741 = vadd.f32 %v4677, 0.5
    %v4742 = vadd.f32 %v4678, 0.5
    %v4743 = vadd.f32 %v4679, 0.5
    %v4744 = vadd.f32 %v4680, 0.5
    %v4745 = vadd.f32 %v4681, 0.5
    %v4746 = vadd.f32 %v4682, 0.5
    %v4747 = vadd.f32 %v4683, 0.5
    %v4748 = vadd.f32 %v4684, 0.5
    %v4749 = vadd.f32 %v4685, 0.5
    %v4750 = vadd.f32 %v4686, 0.5
    %v4751 = vadd.f32 %v4687, 0.5
    %v4752 = vadd.f32 %v4688, 0.5
    %v4753 = vadd.f32 %v4689, 0.5
    %v4754 = vadd.f32 %v4690, 0.5
    %v4755 = vadd.f32 %v4691, 0.5
    %v4756 = vadd.f32 %v4692, 0.5
    %v4757 = vadd.f32 %v4693, 0.5
    %v4758 = vadd.f32 %v4694, 0.5
    %v4759 = vadd.f32 %v4695, 0.5
    %v4760 = vadd.f32 %v4696, 0.5
    %v4761 = vadd.f32 %v4697, 0.5
    %v4762 = vadd.f32 %v4698, 0.5
    %v4763 = vadd.f32 %v4699, 0.5
    %v4764 = vadd.f32 %v4700, 0.5
    %v4765 = vadd.f32 %v4701, 0.5
    %v4766 = vadd.f32 %v4702, 0.5
    %v4767 = vadd.f32 %v4703, 0.5
    %v4768 = vadd.f32 %v4704, 0.5
    %v4769 = vadd.f32 %v4705, 0.5
    %v4770 = vadd.f32 %v4706, 0.5
    %v4771 = vadd.f32 %v4707, 0.5
    %v4772 = vadd.f32 %v4708, 0.5
    %v4773 = vadd.f32 %v4709, 0.5
    %v4774 = vadd.f32 %v4710, 0.5
    %v4775 = vadd.f32 %v4711, 0.5
    %v4776 = vadd.f32 %v4712, 0.5
    %v4777 = vadd.f32 %v4713, 0.5
    %v4778 = vadd.f32 %v4714, 0.5
    %v4779 = vadd.f32 %v4715, 0.5
    %v4780 = vadd.f32 %v4716, 0.5
    %v4781 = vadd.f32 %v4717, 0.5
    %v4782 = vadd.f32 %v4718, 0.5
    %v4783 = vadd.f32 %v4719, 0.5
    %v4784 = vadd.f32 %v4720, 0.5
    %v4785 = vadd.f32 %v4721, 0.5
    %v4786 = vadd.f32 %v4722, 0.5
    %v4787 = vadd.f32 %v4723, 0.5
    %v4788 = vadd.f32 %v4724, 0.5
    %v4789 = vadd.f32 %v4725, 0.5
    %v4790 = vadd.f32 %v4726, 0.5
    %v4791 = vadd.f32 %v4727, 0.5
    %v4792 = vadd.f32 %v4728, 0.5
    %v4793 = vadd.f32 %v4729, 0.5
    %v4794 = vadd.f32 %v4730, 0.5
    %v4795 = vadd.f32 %v4731, 0.5
    %v4796 = vadd.f32 %v4732, 0.5
    %v4797 = vadd.f32 %v4733, 0.5
    %v4798 = vadd.f32 %v4734, 0.5
    %v4799 = vadd.f32 %v4735, 0.5
    %v4800 = vadd.f32 %v4736, 0.5
    %v4801 = vadd.f32 %v4737, 0.5
    %v4802 = vadd.f32 %v4738, 0.5
    %v4803 = vadd.f32 %v4739, 0.5
    %v4804 = vadd.f32 %v4740, 0.5
    %v4805 = vpack.c.bf16 %v4743, %v4741
    %v4806 = vpack.c.bf16 %v4744, %v4742
    %v4807 = vpack.c.bf16 %v4747, %v4745
    %v4808 = vpack.c.bf16 %v4748, %v4746
    %v4809 = vpack.c.bf16 %v4751, %v4749
    %v4810 = vpack.c.bf16 %v4752, %v4750
    %v4811 = vpack.c.bf16 %v4755, %v4753
    %v4812 = vpack.c.bf16 %v4756, %v4754
    %v4813 = vpack.c.bf16 %v4759, %v4757
    %v4814 = vpack.c.bf16 %v4760, %v4758
    %v4815 = vpack.c.bf16 %v4763, %v4761
    %v4816 = vpack.c.bf16 %v4764, %v4762
    %v4817 = vpack.c.bf16 %v4767, %v4765
    %v4818 = vpack.c.bf16 %v4768, %v4766
    %v4819 = vpack.c.bf16 %v4771, %v4769
    %v4820 = vpack.c.bf16 %v4772, %v4770
    %v4821 = vpack.c.bf16 %v4775, %v4773
    %v4822 = vpack.c.bf16 %v4776, %v4774
    %v4823 = vpack.c.bf16 %v4779, %v4777
    %v4824 = vpack.c.bf16 %v4780, %v4778
    %v4825 = vpack.c.bf16 %v4783, %v4781
    %v4826 = vpack.c.bf16 %v4784, %v4782
    %v4827 = vpack.c.bf16 %v4787, %v4785
    %v4828 = vpack.c.bf16 %v4788, %v4786
    %v4829 = vpack.c.bf16 %v4791, %v4789
    %v4830 = vpack.c.bf16 %v4792, %v4790
    %v4831 = vpack.c.bf16 %v4795, %v4793
    %v4832 = vpack.c.bf16 %v4796, %v4794
    %v4833 = vpack.c.bf16 %v4799, %v4797
    %v4834 = vpack.c.bf16 %v4800, %v4798
    %v4835 = vpack.c.bf16 %v4803, %v4801
    %v4836 = vpack.c.bf16 %v4804, %v4802
    %v4869 = vunpack.c.l.b16 %v4805
    %v4870 = vunpack.c.l.b16 %v4806
    %v4871 = vunpack.c.h.b16 %v4805
    %v4872 = vunpack.c.h.b16 %v4806
    %v4873 = vunpack.c.l.b16 %v4807
    %v4874 = vunpack.c.l.b16 %v4808
    %v4875 = vunpack.c.h.b16 %v4807
    %v4876 = vunpack.c.h.b16 %v4808
    %v4877 = vunpack.c.l.b16 %v4809
    %v4878 = vunpack.c.l.b16 %v4810
    %v4879 = vunpack.c.h.b16 %v4809
    %v4880 = vunpack.c.h.b16 %v4810
    %v4881 = vunpack.c.l.b16 %v4811
    %v4882 = vunpack.c.l.b16 %v4812
    %v4883 = vunpack.c.h.b16 %v4811
    %v4884 = vunpack.c.h.b16 %v4812
    %v4885 = vunpack.c.l.b16 %v4813
    %v4886 = vunpack.c.l.b16 %v4814
    %v4887 = vunpack.c.h.b16 %v4813
    %v4888 = vunpack.c.h.b16 %v4814
    %v4889 = vunpack.c.l.b16 %v4815
    %v4890 = vunpack.c.l.b16 %v4816
    %v4891 = vunpack.c.h.b16 %v4815
    %v4892 = vunpack.c.h.b16 %v4816
    %v4893 = vunpack.c.l.b16 %v4817
    %v4894 = vunpack.c.l.b16 %v4818
    %v4895 = vunpack.c.h.b16 %v4817
    %v4896 = vunpack.c.h.b16 %v4818
    %v4897 = vunpack.c.l.b16 %v4819
    %v4898 = vunpack.c.l.b16 %v4820
    %v4899 = vunpack.c.h.b16 %v4819
    %v4900 = vunpack.c.h.b16 %v4820
    %v4901 = vunpack.c.l.b16 %v4821
    %v4902 = vunpack.c.l.b16 %v4822
    %v4903 = vunpack.c.h.b16 %v4821
    %v4904 = vunpack.c.h.b16 %v4822
    %v4905 = vunpack.c.l.b16 %v4823
    %v4906 = vunpack.c.l.b16 %v4824
    %v4907 = vunpack.c.h.b16 %v4823
    %v4908 = vunpack.c.h.b16 %v4824
    %v4909 = vunpack.c.l.b16 %v4825
    %v4910 = vunpack.c.l.b16 %v4826
    %v4911 = vunpack.c.h.b16 %v4825
    %v4912 = vunpack.c.h.b16 %v4826
    %v4913 = vunpack.c.l.b16 %v4827
    %v4914 = vunpack.c.l.b16 %v4828
    %v4915 = vunpack.c.h.b16 %v4827
    %v4916 = vunpack.c.h.b16 %v4828
    %v4917 = vunpack.c.l.b16 %v4829
    %v4918 = vunpack.c.l.b16 %v4830
    %v4919 = vunpack.c.h.b16 %v4829
    %v4920 = vunpack.c.h.b16 %v4830
    %v4921 = vunpack.c.l.b16 %v4831
    %v4922 = vunpack.c.l.b16 %v4832
    %v4923 = vunpack.c.h.b16 %v4831
    %v4924 = vunpack.c.h.b16 %v4832
    %v4925 = vunpack.c.l.b16 %v4833
    %v4926 = vunpack.c.l.b16 %v4834
    %v4927 = vunpack.c.h.b16 %v4833
    %v4928 = vunpack.c.h.b16 %v4834
    %v4929 = vunpack.c.l.b16 %v4835
    %v4930 = vunpack.c.l.b16 %v4836
    %v4931 = vunpack.c.h.b16 %v4835
    %v4932 = vunpack.c.h.b16 %v4836
    %v4933 = vpack.c.b16 %v4870, %v4869
    %v4934 = vpack.c.b16 %v4872, %v4871
    %v4935 = vpack.c.b16 %v4874, %v4873
    %v4936 = vpack.c.b16 %v4876, %v4875
    %v4937 = vpack.c.b16 %v4878, %v4877
    %v4938 = vpack.c.b16 %v4880, %v4879
    %v4939 = vpack.c.b16 %v4882, %v4881
    %v4940 = vpack.c.b16 %v4884, %v4883
    %v4941 = vpack.c.b16 %v4886, %v4885
    %v4942 = vpack.c.b16 %v4888, %v4887
    %v4943 = vpack.c.b16 %v4890, %v4889
    %v4944 = vpack.c.b16 %v4892, %v4891
    %v4945 = vpack.c.b16 %v4894, %v4893
    %v4946 = vpack.c.b16 %v4896, %v4895
    %v4947 = vpack.c.b16 %v4898, %v4897
    %v4948 = vpack.c.b16 %v4900, %v4899
    %v4949 = vpack.c.b16 %v4902, %v4901
    %v4950 = vpack.c.b16 %v4904, %v4903
    %v4951 = vpack.c.b16 %v4906, %v4905
    %v4952 = vpack.c.b16 %v4908, %v4907
    %v4953 = vpack.c.b16 %v4910, %v4909
    %v4954 = vpack.c.b16 %v4912, %v4911
    %v4955 = vpack.c.b16 %v4914, %v4913
    %v4956 = vpack.c.b16 %v4916, %v4915
    %v4957 = vpack.c.b16 %v4918, %v4917
    %v4958 = vpack.c.b16 %v4920, %v4919
    %v4959 = vpack.c.b16 %v4922, %v4921
    %v4960 = vpack.c.b16 %v4924, %v4923
    %v4961 = vpack.c.b16 %v4926, %v4925
    %v4962 = vpack.c.b16 %v4928, %v4927
    %v4963 = vpack.c.b16 %v4930, %v4929
    %v4964 = vpack.c.b16 %v4932, %v4931
    %4997 = vst [vmem:[#allocation2] sm:$0xff] %v4933
    %4998 = vst [vmem:[#allocation2 + $0x8] sm:$0xff] %v4934
    %4999 = vst [vmem:[#allocation2 + $0x10] sm:$0xff] %v4935
    %5000 = vst [vmem:[#allocation2 + $0x18] sm:$0xff] %v4936
    %5001 = vst [vmem:[#allocation2 + $0x20] sm:$0xff] %v4937
    %5002 = vst [vmem:[#allocation2 + $0x28] sm:$0xff] %v4938
    %5003 = vst [vmem:[#allocation2 + $0x30] sm:$0xff] %v4939
    %5004 = vst [vmem:[#allocation2 + $0x38] sm:$0xff] %v4940
    %5005 = vst [vmem:[#allocation2 + $0x40] sm:$0xff] %v4941
    %5006 = vst [vmem:[#allocation2 + $0x48] sm:$0xff] %v4942
    %5007 = vst [vmem:[#allocation2 + $0x50] sm:$0xff] %v4943
    %5008 = vst [vmem:[#allocation2 + $0x58] sm:$0xff] %v4944
    %5009 = vst [vmem:[#allocation2 + $0x60] sm:$0xff] %v4945
    %5010 = vst [vmem:[#allocation2 + $0x68] sm:$0xff] %v4946
    %5011 = vst [vmem:[#allocation2 + $0x70] sm:$0xff] %v4947
    %5012 = vst [vmem:[#allocation2 + $0x78] sm:$0xff] %v4948
    %5013 = vst [vmem:[#allocation2 + $0x80] sm:$0xff] %v4949
    %5014 = vst [vmem:[#allocation2 + $0x88] sm:$0xff] %v4950
    %5015 = vst [vmem:[#allocation2 + $0x90] sm:$0xff] %v4951
    %5016 = vst [vmem:[#allocation2 + $0x98] sm:$0xff] %v4952
    %5017 = vst [vmem:[#allocation2 + $0xa0] sm:$0xff] %v4953
    %5018 = vst [vmem:[#allocation2 + $0xa8] sm:$0xff] %v4954
    %5019 = vst [vmem:[#allocation2 + $0xb0] sm:$0xff] %v4955
    %5020 = vst [vmem:[#allocation2 + $0xb8] sm:$0xff] %v4956
    %5021 = vst [vmem:[#allocation2 + $0xc0] sm:$0xff] %v4957
    %5022 = vst [vmem:[#allocation2 + $0xc8] sm:$0xff] %v4958
    %5023 = vst [vmem:[#allocation2 + $0xd0] sm:$0xff] %v4959
    %5024 = vst [vmem:[#allocation2 + $0xd8] sm:$0xff] %v4960
    %5025 = vst [vmem:[#allocation2 + $0xe0] sm:$0xff] %v4961
    %5026 = vst [vmem:[#allocation2 + $0xe8] sm:$0xff] %v4962
    %5027 = vst [vmem:[#allocation2 + $0xf0] sm:$0xff] %v4963
    %5028 = vst [vmem:[#allocation2 + $0xf8] sm:$0xff] %v4964
    // Predicated region
    $region62: #{autoencoder_forward.1} parent=1 // pred_check
      _
    $region63: #{autoencoder_forward.1} parent=1 // pred_check_branch
      %5030 = sbr.rel (0) target = $region65
    $region64: #{autoencoder_forward.1} parent=1 // pred_region
      %s5032 = ssub.s32 4096, 4096
      %5033 = vsyncadd [#allocation3], %s5032
      %s5034 = sshll.u32 [#allocation2], 4
      %s5035 = int_to_ptr.vmem [resolvable:$true] %s5034
      %5040 = dma.vmem_to_hbm [thread:$0]  %s5035, 4096, %s15, [#allocation3], 128, 128, 8
    $region65: #{autoencoder_forward.1} parent=1 // pred_fallthru
      _
    // Predicated region
    $region66: #{autoencoder_forward.1} parent=1 // pred_check
      _
    $region67: #{autoencoder_forward.1} parent=1 // pred_check_branch
      %5042 = sbr.rel (0) target = $region69
    $region68: #{autoencoder_forward.1} parent=1 // pred_region
      %5043 = dma.done [#allocation3], 4096
    $region69: #{autoencoder_forward.1} parent=1 // pred_fallthru
      _
    %5044 = vsyncpa [#allocation3], 1

</llo_original>
